<compile_context>
chip_gen: v6e
topology: v6e:2x2x1
jax: 0.10.0
libtpu: 0.0.40
codegen_flags: <defaults>
</compile_context>

<pallas_src>
import jax
import jax.numpy as jnp
from jax.experimental import pallas as pl
from jax.experimental.pallas import tpu as pltpu

# ---- model config (module defaults, small sequence/batch for the demo) ----
VOCAB_SIZE = 32
EMBED_DIM = 64
HIDDEN_DIM = 128
NUM_HEADS = 4
HEAD_DIM = EMBED_DIM // NUM_HEADS
NUM_LAYERS = 2
MAX_LEN = 64
OUT_DIM = 768
LN_EPS = 1e-5

BATCH = 2
SEQ_LEN = 16


def _layer_norm(x, gamma, beta):
    mean = jnp.mean(x, axis=-1, keepdims=True)
    var = jnp.mean((x - mean) ** 2, axis=-1, keepdims=True)
    inv = jax.lax.rsqrt(var + LN_EPS)
    return (x - mean) * inv * gamma + beta


# ---------------------------------------------------------------------------
# Single fused Pallas kernel: all transformer layers + mean pool + out proj.
# No grid: one program, everything resident in VMEM (working set << 1 MiB).
# ---------------------------------------------------------------------------
def charbert_kernel(x_ref,
                    wqkv_ref, bqkv_ref, wo_ref, bo_ref,
                    g1_ref, be1_ref,
                    w1_ref, b1_ref, w2_ref, b2_ref,
                    g2_ref, be2_ref,
                    wout_ref, bout_ref,
                    o_ref):
    x = x_ref[...]                                   # (B*S, E), f32

    for l in range(NUM_LAYERS):                      # unrolled (L = 2)
        # --- fused QKV projection (scale already folded into Wq/bq) ------
        qkv = jnp.dot(x, wqkv_ref[l],
                      preferred_element_type=jnp.float32) + bqkv_ref[l]  # (B*S, 3E)

        # --- attention core: per batch (S,S), per head static lane slices -
        attn_rows = []
        for b in range(BATCH):
            qkv_b = qkv[b * SEQ_LEN:(b + 1) * SEQ_LEN, :]          # (S, 3E)
            heads = []
            for h in range(NUM_HEADS):
                q = qkv_b[:, h * HEAD_DIM:(h + 1) * HEAD_DIM]
                k = qkv_b[:, EMBED_DIM + h * HEAD_DIM:
                             EMBED_DIM + (h + 1) * HEAD_DIM]
                v = qkv_b[:, 2 * EMBED_DIM + h * HEAD_DIM:
                             2 * EMBED_DIM + (h + 1) * HEAD_DIM]
                # q @ k^T without materializing the transpose
                s = jax.lax.dot_general(
                    q, k, (((1,), (1,)), ((), ())),
                    preferred_element_type=jnp.float32)             # (S, S)
                s = s - jnp.max(s, axis=-1, keepdims=True)
                p = jnp.exp(s)
                denom = jnp.sum(p, axis=-1, keepdims=True)
                p = p * pl.reciprocal(denom, approx=True)
                heads.append(jnp.dot(p, v,
                                     preferred_element_type=jnp.float32))
            heads_cat = jnp.concatenate(heads, axis=1)              # (S, E)
            attn_rows.append(jnp.dot(heads_cat, wo_ref[l],
                                     preferred_element_type=jnp.float32))
        attn = jnp.concatenate(attn_rows, axis=0) + bo_ref[l]       # (B*S, E)

        # --- residual + LN1, feed-forward, residual + LN2 -----------------
        x1 = _layer_norm(x + attn, g1_ref[l], be1_ref[l])
        h1 = jnp.dot(x1, w1_ref[l],
                     preferred_element_type=jnp.float32) + b1_ref[l]
        h1 = jnp.maximum(h1, 0.0)
        ff = jnp.dot(h1, w2_ref[l],
                     preferred_element_type=jnp.float32) + b2_ref[l]
        x = _layer_norm(x1 + ff, g2_ref[l], be2_ref[l])

    # --- epilogue: mean-pool over sequence + lane-dense 768 projection ----
    pooled = jnp.concatenate(
        [jnp.mean(x[b * SEQ_LEN:(b + 1) * SEQ_LEN, :], axis=0, keepdims=True)
         for b in range(BATCH)], axis=0)                            # (B, E)
    o_ref[...] = (jnp.dot(pooled, wout_ref[...],
                          preferred_element_type=jnp.float32) + bout_ref[...])


def charbert_forward(tokens, params, kernel_params):
    """tokens: (B, S) int32. Returns (B, 768) f32."""
    B, S = tokens.shape
    # Embedding gathers are plain-JAX glue (no clean tiny-scale Pallas gather).
    h = jnp.take(params["tok_emb"], tokens, axis=0)          # (B, S, E)
    h = h + params["pos_emb"][:S][None, :, :]
    x2d = h.reshape(B * S, EMBED_DIM)
    return pl.pallas_call(
        charbert_kernel,
        out_shape=jax.ShapeDtypeStruct((B, OUT_DIM), jnp.float32),
        compiler_params=pltpu.CompilerParams(),
    )(x2d, *kernel_params)


# ---------------------------------------------------------------------------
# Parameter construction (deterministic, synthetic) + kernel re-packing.
# ---------------------------------------------------------------------------
def init_params(key):
    std = 0.05
    state = {"key": key}

    def nrm(shape):
        state["key"], sub = jax.random.split(state["key"])
        return (std * jax.random.normal(sub, shape)).astype(jnp.float32)

    params = {
        "tok_emb": nrm((VOCAB_SIZE, EMBED_DIM)),
        "pos_emb": nrm((MAX_LEN, EMBED_DIM)),
        "blocks": [],
        "w_out": nrm((EMBED_DIM, OUT_DIM)),
        "b_out": nrm((OUT_DIM,)),
    }
    for _ in range(NUM_LAYERS):
        wq = nrm((EMBED_DIM, EMBED_DIM)); bq = nrm((EMBED_DIM,))
        wk = nrm((EMBED_DIM, EMBED_DIM)); bk = nrm((EMBED_DIM,))
        wv = nrm((EMBED_DIM, EMBED_DIM)); bv = nrm((EMBED_DIM,))
        wo = nrm((EMBED_DIM, EMBED_DIM)); bo = nrm((EMBED_DIM,))
        g1 = jnp.ones((EMBED_DIM,), jnp.float32)
        be1 = jnp.zeros((EMBED_DIM,), jnp.float32)
        w1 = nrm((EMBED_DIM, HIDDEN_DIM)); b1 = nrm((HIDDEN_DIM,))
        w2 = nrm((HIDDEN_DIM, EMBED_DIM)); b2 = nrm((EMBED_DIM,))
        g2 = jnp.ones((EMBED_DIM,), jnp.float32)
        be2 = jnp.zeros((EMBED_DIM,), jnp.float32)
        params["blocks"].append(
            [wq, bq, wk, bk, wv, bv, wo, bo, g1, be1,
             w1, b1, w2, b2, g2, be2])
    return params


def pack_kernel_params(params):
    """Host-side re-layout: fuse QKV, fold 1/sqrt(D) into Wq/bq, stack layers."""
    scale = 1.0 / (HEAD_DIM ** 0.5)
    stacks = [[] for _ in range(12)]
    for blk in params["blocks"]:
        (wq, bq, wk, bk, wv, bv, wo, bo, g1, be1,
         w1, b1, w2, b2, g2, be2) = blk
        vals = [
            jnp.concatenate([wq * scale, wk, wv], axis=1),             # (E, 3E)
            jnp.concatenate([bq * scale, bk, bv], axis=0)[None, :],    # (1, 3E)
            wo,                                                        # (E, E)
            bo[None, :], g1[None, :], be1[None, :],
            w1, b1[None, :], w2, b2[None, :],
            g2[None, :], be2[None, :],
        ]
        for s, v in zip(stacks, vals):
            s.append(v)
    stacked = [jnp.stack(s, axis=0) for s in stacks]   # leading layer axis
    stacked.append(params["w_out"])                    # (E, 768)
    stacked.append(params["b_out"][None, :])           # (1, 768)
    return stacked


# ---------------------------------------------------------------------------
# Pure-JAX reference for correctness checking.
# ---------------------------------------------------------------------------
def ref_block(x, p):
    wq, bq, wk, bk, wv, bv, wo, bo, g1, be1, w1, b1, w2, b2, g2, be2 = p
    B, S, E = x.shape

    def split_heads(t):
        return t.reshape(B, S, NUM_HEADS, HEAD_DIM).transpose(0, 2, 1, 3)

    q = split_heads(x @ wq + bq)
    k = split_heads(x @ wk + bk)
    v = split_heads(x @ wv + bv)
    scores = jnp.einsum("bhsd,bhtd->bhst", q, k) / (HEAD_DIM ** 0.5)
    w = jax.nn.softmax(scores, axis=-1)
    hout = jnp.einsum("bhst,bhtd->bhsd", w, v)
    attn = hout.transpose(0, 2, 1, 3).reshape(B, S, E) @ wo + bo
    x1 = _layer_norm(x + attn, g1, be1)
    ff = jnp.maximum(x1 @ w1 + b1, 0.0) @ w2 + b2
    return _layer_norm(x1 + ff, g2, be2)


def ref_forward(tokens, params):
    B, S = tokens.shape
    h = jnp.take(params["tok_emb"], tokens, axis=0)
    h = h + params["pos_emb"][:S][None, :, :]
    for blk in params["blocks"]:
        h = ref_block(h, blk)
    pooled = jnp.mean(h, axis=1)
    return pooled @ params["w_out"] + params["b_out"]


if __name__ == "__main__":
    key = jax.random.PRNGKey(0)
    k_tok, k_par = jax.random.split(key)
    tokens = jax.random.randint(k_tok, (BATCH, SEQ_LEN), 0, VOCAB_SIZE,
                                dtype=jnp.int32)
    params = init_params(k_par)
    kparams = pack_kernel_params(params)

    out = jax.block_until_ready(charbert_forward(tokens, params, kparams))
    assert out.shape == (BATCH, OUT_DIM), out.shape

    ref = jax.block_until_ready(ref_forward(tokens, params))
    # tolerance accounts for the approx (EUP) reciprocal in the softmax denom
    max_err = float(jnp.max(jnp.abs(out - ref)))
    assert jnp.allclose(out, ref, atol=5e-3, rtol=5e-3), max_err

    print("KERNEL_OK")
</pallas_src>

<mosaic_0001>
module attributes {stable_mosaic.version = 11 : i64} {
  func.func @charbert_kernel(%arg0: memref<32x64xf32, #tpu.memory_space<vmem>>, %arg1: memref<2x64x192xf32, #tpu.memory_space<vmem>>, %arg2: memref<2x1x192xf32, #tpu.memory_space<vmem>>, %arg3: memref<2x64x64xf32, #tpu.memory_space<vmem>>, %arg4: memref<2x1x64xf32, #tpu.memory_space<vmem>>, %arg5: memref<2x1x64xf32, #tpu.memory_space<vmem>>, %arg6: memref<2x1x64xf32, #tpu.memory_space<vmem>>, %arg7: memref<2x64x128xf32, #tpu.memory_space<vmem>>, %arg8: memref<2x1x128xf32, #tpu.memory_space<vmem>>, %arg9: memref<2x128x64xf32, #tpu.memory_space<vmem>>, %arg10: memref<2x1x64xf32, #tpu.memory_space<vmem>>, %arg11: memref<2x1x64xf32, #tpu.memory_space<vmem>>, %arg12: memref<2x1x64xf32, #tpu.memory_space<vmem>>, %arg13: memref<64x768xf32, #tpu.memory_space<vmem>>, %arg14: memref<1x768xf32, #tpu.memory_space<vmem>>, %arg15: memref<2x768xf32, #tpu.memory_space<vmem>>) attributes {dimension_semantics = [], scalar_prefetch = 0 : i64, scratch_operands = 0 : i64, tpu.core_type = #tpu.core_type<tc>} {
    %c0 = arith.constant 0 : index
    %c0_0 = arith.constant 0 : index
    %0 = vector.load %arg0[%c0, %c0_0] : memref<32x64xf32, #tpu.memory_space<vmem>>, vector<32x64xf32>
    %c0_1 = arith.constant 0 : index
    %c0_2 = arith.constant 0 : index
    %c0_3 = arith.constant 0 : index
    %1 = vector.load %arg1[%c0_1, %c0_2, %c0_3] : memref<2x64x192xf32, #tpu.memory_space<vmem>>, vector<1x64x192xf32>
    %2 = vector.shape_cast %1 : vector<1x64x192xf32> to vector<64x192xf32>
    %cst = arith.constant dense<0.000000e+00> : vector<32x192xf32>
    %3 = tpu.matmul %0, %2, %cst {dimension_numbers = #tpu.dot_dimension_numbers<[1], [0], [0], [1], [0, 0, 1, 1], [], []>} : vector<32x64xf32>, vector<64x192xf32>, vector<32x192xf32> -> vector<32x192xf32>
    %c0_4 = arith.constant 0 : index
    %c0_5 = arith.constant 0 : index
    %c0_6 = arith.constant 0 : index
    %4 = vector.load %arg2[%c0_4, %c0_5, %c0_6] : memref<2x1x192xf32, #tpu.memory_space<vmem>>, vector<1x1x192xf32>
    %5 = vector.shape_cast %4 : vector<1x1x192xf32> to vector<1x192xf32>
    %6 = vector.broadcast %5 : vector<1x192xf32> to vector<32x192xf32>
    %7 = arith.addf %3, %6 : vector<32x192xf32>
    %8 = vector.extract_strided_slice %7 {offsets = [0, 0], sizes = [16, 192], strides = [1, 1]} : vector<32x192xf32> to vector<16x192xf32>
    %9 = vector.extract_strided_slice %8 {offsets = [0, 0], sizes = [16, 16], strides = [1, 1]} : vector<16x192xf32> to vector<16x16xf32>
    %10 = vector.extract_strided_slice %8 {offsets = [0, 64], sizes = [16, 16], strides = [1, 1]} : vector<16x192xf32> to vector<16x16xf32>
    %11 = vector.extract_strided_slice %8 {offsets = [0, 128], sizes = [16, 16], strides = [1, 1]} : vector<16x192xf32> to vector<16x16xf32>
    %cst_7 = arith.constant dense<0.000000e+00> : vector<16x16xf32>
    %12 = tpu.matmul %9, %10, %cst_7 {dimension_numbers = #tpu.dot_dimension_numbers<[1], [1], [0], [0], [0, 0, 1, 0], [], []>} : vector<16x16xf32>, vector<16x16xf32>, vector<16x16xf32> -> vector<16x16xf32>
    %cst_8 = arith.constant dense<0xFF800000> : vector<16xf32>
    %13 = vector.multi_reduction <maximumf>, %12, %cst_8 [1] : vector<16x16xf32> to vector<16xf32>
    %14 = vector.shape_cast %13 : vector<16xf32> to vector<16x1xf32>
    %15 = vector.broadcast %14 : vector<16x1xf32> to vector<16x16xf32>
    %16 = arith.subf %12, %15 : vector<16x16xf32>
    %17 = math.exp %16 : vector<16x16xf32>
    %cst_9 = arith.constant dense<0.000000e+00> : vector<16xf32>
    %18 = vector.multi_reduction <add>, %17, %cst_9 [1] : vector<16x16xf32> to vector<16xf32>
    %19 = vector.shape_cast %18 : vector<16xf32> to vector<16x1xf32>
    %20 = tpu.reciprocal %19 {approx = true} : vector<16x1xf32> -> vector<16x1xf32>
    %21 = vector.broadcast %20 : vector<16x1xf32> to vector<16x16xf32>
    %22 = arith.mulf %17, %21 : vector<16x16xf32>
    %cst_10 = arith.constant dense<0.000000e+00> : vector<16x16xf32>
    %23 = tpu.matmul %22, %11, %cst_10 {dimension_numbers = #tpu.dot_dimension_numbers<[1], [0], [0], [1], [0, 0, 1, 1], [], []>} : vector<16x16xf32>, vector<16x16xf32>, vector<16x16xf32> -> vector<16x16xf32>
    %24 = vector.extract_strided_slice %8 {offsets = [0, 16], sizes = [16, 16], strides = [1, 1]} : vector<16x192xf32> to vector<16x16xf32>
    %25 = vector.extract_strided_slice %8 {offsets = [0, 80], sizes = [16, 16], strides = [1, 1]} : vector<16x192xf32> to vector<16x16xf32>
    %26 = vector.extract_strided_slice %8 {offsets = [0, 144], sizes = [16, 16], strides = [1, 1]} : vector<16x192xf32> to vector<16x16xf32>
    %cst_11 = arith.constant dense<0.000000e+00> : vector<16x16xf32>
    %27 = tpu.matmul %24, %25, %cst_11 {dimension_numbers = #tpu.dot_dimension_numbers<[1], [1], [0], [0], [0, 0, 1, 0], [], []>} : vector<16x16xf32>, vector<16x16xf32>, vector<16x16xf32> -> vector<16x16xf32>
    %cst_12 = arith.constant dense<0xFF800000> : vector<16xf32>
    %28 = vector.multi_reduction <maximumf>, %27, %cst_12 [1] : vector<16x16xf32> to vector<16xf32>
    %29 = vector.shape_cast %28 : vector<16xf32> to vector<16x1xf32>
    %30 = vector.broadcast %29 : vector<16x1xf32> to vector<16x16xf32>
    %31 = arith.subf %27, %30 : vector<16x16xf32>
    %32 = math.exp %31 : vector<16x16xf32>
    %cst_13 = arith.constant dense<0.000000e+00> : vector<16xf32>
    %33 = vector.multi_reduction <add>, %32, %cst_13 [1] : vector<16x16xf32> to vector<16xf32>
    %34 = vector.shape_cast %33 : vector<16xf32> to vector<16x1xf32>
    %35 = tpu.reciprocal %34 {approx = true} : vector<16x1xf32> -> vector<16x1xf32>
    %36 = vector.broadcast %35 : vector<16x1xf32> to vector<16x16xf32>
    %37 = arith.mulf %32, %36 : vector<16x16xf32>
    %cst_14 = arith.constant dense<0.000000e+00> : vector<16x16xf32>
    %38 = tpu.matmul %37, %26, %cst_14 {dimension_numbers = #tpu.dot_dimension_numbers<[1], [0], [0], [1], [0, 0, 1, 1], [], []>} : vector<16x16xf32>, vector<16x16xf32>, vector<16x16xf32> -> vector<16x16xf32>
    %39 = vector.extract_strided_slice %8 {offsets = [0, 32], sizes = [16, 16], strides = [1, 1]} : vector<16x192xf32> to vector<16x16xf32>
    %40 = vector.extract_strided_slice %8 {offsets = [0, 96], sizes = [16, 16], strides = [1, 1]} : vector<16x192xf32> to vector<16x16xf32>
    %41 = vector.extract_strided_slice %8 {offsets = [0, 160], sizes = [16, 16], strides = [1, 1]} : vector<16x192xf32> to vector<16x16xf32>
    %cst_15 = arith.constant dense<0.000000e+00> : vector<16x16xf32>
    %42 = tpu.matmul %39, %40, %cst_15 {dimension_numbers = #tpu.dot_dimension_numbers<[1], [1], [0], [0], [0, 0, 1, 0], [], []>} : vector<16x16xf32>, vector<16x16xf32>, vector<16x16xf32> -> vector<16x16xf32>
    %cst_16 = arith.constant dense<0xFF800000> : vector<16xf32>
    %43 = vector.multi_reduction <maximumf>, %42, %cst_16 [1] : vector<16x16xf32> to vector<16xf32>
    %44 = vector.shape_cast %43 : vector<16xf32> to vector<16x1xf32>
    %45 = vector.broadcast %44 : vector<16x1xf32> to vector<16x16xf32>
    %46 = arith.subf %42, %45 : vector<16x16xf32>
    %47 = math.exp %46 : vector<16x16xf32>
    %cst_17 = arith.constant dense<0.000000e+00> : vector<16xf32>
    %48 = vector.multi_reduction <add>, %47, %cst_17 [1] : vector<16x16xf32> to vector<16xf32>
    %49 = vector.shape_cast %48 : vector<16xf32> to vector<16x1xf32>
    %50 = tpu.reciprocal %49 {approx = true} : vector<16x1xf32> -> vector<16x1xf32>
    %51 = vector.broadcast %50 : vector<16x1xf32> to vector<16x16xf32>
    %52 = arith.mulf %47, %51 : vector<16x16xf32>
    %cst_18 = arith.constant dense<0.000000e+00> : vector<16x16xf32>
    %53 = tpu.matmul %52, %41, %cst_18 {dimension_numbers = #tpu.dot_dimension_numbers<[1], [0], [0], [1], [0, 0, 1, 1], [], []>} : vector<16x16xf32>, vector<16x16xf32>, vector<16x16xf32> -> vector<16x16xf32>
    %54 = vector.extract_strided_slice %8 {offsets = [0, 48], sizes = [16, 16], strides = [1, 1]} : vector<16x192xf32> to vector<16x16xf32>
    %55 = vector.extract_strided_slice %8 {offsets = [0, 112], sizes = [16, 16], strides = [1, 1]} : vector<16x192xf32> to vector<16x16xf32>
    %56 = vector.extract_strided_slice %8 {offsets = [0, 176], sizes = [16, 16], strides = [1, 1]} : vector<16x192xf32> to vector<16x16xf32>
    %cst_19 = arith.constant dense<0.000000e+00> : vector<16x16xf32>
    %57 = tpu.matmul %54, %55, %cst_19 {dimension_numbers = #tpu.dot_dimension_numbers<[1], [1], [0], [0], [0, 0, 1, 0], [], []>} : vector<16x16xf32>, vector<16x16xf32>, vector<16x16xf32> -> vector<16x16xf32>
    %cst_20 = arith.constant dense<0xFF800000> : vector<16xf32>
    %58 = vector.multi_reduction <maximumf>, %57, %cst_20 [1] : vector<16x16xf32> to vector<16xf32>
    %59 = vector.shape_cast %58 : vector<16xf32> to vector<16x1xf32>
    %60 = vector.broadcast %59 : vector<16x1xf32> to vector<16x16xf32>
    %61 = arith.subf %57, %60 : vector<16x16xf32>
    %62 = math.exp %61 : vector<16x16xf32>
    %cst_21 = arith.constant dense<0.000000e+00> : vector<16xf32>
    %63 = vector.multi_reduction <add>, %62, %cst_21 [1] : vector<16x16xf32> to vector<16xf32>
    %64 = vector.shape_cast %63 : vector<16xf32> to vector<16x1xf32>
    %65 = tpu.reciprocal %64 {approx = true} : vector<16x1xf32> -> vector<16x1xf32>
    %66 = vector.broadcast %65 : vector<16x1xf32> to vector<16x16xf32>
    %67 = arith.mulf %62, %66 : vector<16x16xf32>
    %cst_22 = arith.constant dense<0.000000e+00> : vector<16x16xf32>
    %68 = tpu.matmul %67, %56, %cst_22 {dimension_numbers = #tpu.dot_dimension_numbers<[1], [0], [0], [1], [0, 0, 1, 1], [], []>} : vector<16x16xf32>, vector<16x16xf32>, vector<16x16xf32> -> vector<16x16xf32>
    %69 = tpu.concatenate %23, %38, %53, %68 in 1 : vector<16x16xf32>, vector<16x16xf32>, vector<16x16xf32>, vector<16x16xf32> -> vector<16x64xf32>
    %c0_23 = arith.constant 0 : index
    %c0_24 = arith.constant 0 : index
    %c0_25 = arith.constant 0 : index
    %70 = vector.load %arg3[%c0_23, %c0_24, %c0_25] : memref<2x64x64xf32, #tpu.memory_space<vmem>>, vector<1x64x64xf32>
    %71 = vector.shape_cast %70 : vector<1x64x64xf32> to vector<64x64xf32>
    %cst_26 = arith.constant dense<0.000000e+00> : vector<16x64xf32>
    %72 = tpu.matmul %69, %71, %cst_26 {dimension_numbers = #tpu.dot_dimension_numbers<[1], [0], [0], [1], [0, 0, 1, 1], [], []>} : vector<16x64xf32>, vector<64x64xf32>, vector<16x64xf32> -> vector<16x64xf32>
    %73 = vector.extract_strided_slice %7 {offsets = [16, 0], sizes = [16, 192], strides = [1, 1]} : vector<32x192xf32> to vector<16x192xf32>
    %74 = vector.extract_strided_slice %73 {offsets = [0, 0], sizes = [16, 16], strides = [1, 1]} : vector<16x192xf32> to vector<16x16xf32>
    %75 = vector.extract_strided_slice %73 {offsets = [0, 64], sizes = [16, 16], strides = [1, 1]} : vector<16x192xf32> to vector<16x16xf32>
    %76 = vector.extract_strided_slice %73 {offsets = [0, 128], sizes = [16, 16], strides = [1, 1]} : vector<16x192xf32> to vector<16x16xf32>
    %cst_27 = arith.constant dense<0.000000e+00> : vector<16x16xf32>
    %77 = tpu.matmul %74, %75, %cst_27 {dimension_numbers = #tpu.dot_dimension_numbers<[1], [1], [0], [0], [0, 0, 1, 0], [], []>} : vector<16x16xf32>, vector<16x16xf32>, vector<16x16xf32> -> vector<16x16xf32>
    %cst_28 = arith.constant dense<0xFF800000> : vector<16xf32>
    %78 = vector.multi_reduction <maximumf>, %77, %cst_28 [1] : vector<16x16xf32> to vector<16xf32>
    %79 = vector.shape_cast %78 : vector<16xf32> to vector<16x1xf32>
    %80 = vector.broadcast %79 : vector<16x1xf32> to vector<16x16xf32>
    %81 = arith.subf %77, %80 : vector<16x16xf32>
    %82 = math.exp %81 : vector<16x16xf32>
    %cst_29 = arith.constant dense<0.000000e+00> : vector<16xf32>
    %83 = vector.multi_reduction <add>, %82, %cst_29 [1] : vector<16x16xf32> to vector<16xf32>
    %84 = vector.shape_cast %83 : vector<16xf32> to vector<16x1xf32>
    %85 = tpu.reciprocal %84 {approx = true} : vector<16x1xf32> -> vector<16x1xf32>
    %86 = vector.broadcast %85 : vector<16x1xf32> to vector<16x16xf32>
    %87 = arith.mulf %82, %86 : vector<16x16xf32>
    %cst_30 = arith.constant dense<0.000000e+00> : vector<16x16xf32>
    %88 = tpu.matmul %87, %76, %cst_30 {dimension_numbers = #tpu.dot_dimension_numbers<[1], [0], [0], [1], [0, 0, 1, 1], [], []>} : vector<16x16xf32>, vector<16x16xf32>, vector<16x16xf32> -> vector<16x16xf32>
    %89 = vector.extract_strided_slice %73 {offsets = [0, 16], sizes = [16, 16], strides = [1, 1]} : vector<16x192xf32> to vector<16x16xf32>
    %90 = vector.extract_strided_slice %73 {offsets = [0, 80], sizes = [16, 16], strides = [1, 1]} : vector<16x192xf32> to vector<16x16xf32>
    %91 = vector.extract_strided_slice %73 {offsets = [0, 144], sizes = [16, 16], strides = [1, 1]} : vector<16x192xf32> to vector<16x16xf32>
    %cst_31 = arith.constant dense<0.000000e+00> : vector<16x16xf32>
    %92 = tpu.matmul %89, %90, %cst_31 {dimension_numbers = #tpu.dot_dimension_numbers<[1], [1], [0], [0], [0, 0, 1, 0], [], []>} : vector<16x16xf32>, vector<16x16xf32>, vector<16x16xf32> -> vector<16x16xf32>
    %cst_32 = arith.constant dense<0xFF800000> : vector<16xf32>
    %93 = vector.multi_reduction <maximumf>, %92, %cst_32 [1] : vector<16x16xf32> to vector<16xf32>
    %94 = vector.shape_cast %93 : vector<16xf32> to vector<16x1xf32>
    %95 = vector.broadcast %94 : vector<16x1xf32> to vector<16x16xf32>
    %96 = arith.subf %92, %95 : vector<16x16xf32>
    %97 = math.exp %96 : vector<16x16xf32>
    %cst_33 = arith.constant dense<0.000000e+00> : vector<16xf32>
    %98 = vector.multi_reduction <add>, %97, %cst_33 [1] : vector<16x16xf32> to vector<16xf32>
    %99 = vector.shape_cast %98 : vector<16xf32> to vector<16x1xf32>
    %100 = tpu.reciprocal %99 {approx = true} : vector<16x1xf32> -> vector<16x1xf32>
    %101 = vector.broadcast %100 : vector<16x1xf32> to vector<16x16xf32>
    %102 = arith.mulf %97, %101 : vector<16x16xf32>
    %cst_34 = arith.constant dense<0.000000e+00> : vector<16x16xf32>
    %103 = tpu.matmul %102, %91, %cst_34 {dimension_numbers = #tpu.dot_dimension_numbers<[1], [0], [0], [1], [0, 0, 1, 1], [], []>} : vector<16x16xf32>, vector<16x16xf32>, vector<16x16xf32> -> vector<16x16xf32>
    %104 = vector.extract_strided_slice %73 {offsets = [0, 32], sizes = [16, 16], strides = [1, 1]} : vector<16x192xf32> to vector<16x16xf32>
    %105 = vector.extract_strided_slice %73 {offsets = [0, 96], sizes = [16, 16], strides = [1, 1]} : vector<16x192xf32> to vector<16x16xf32>
    %106 = vector.extract_strided_slice %73 {offsets = [0, 160], sizes = [16, 16], strides = [1, 1]} : vector<16x192xf32> to vector<16x16xf32>
    %cst_35 = arith.constant dense<0.000000e+00> : vector<16x16xf32>
    %107 = tpu.matmul %104, %105, %cst_35 {dimension_numbers = #tpu.dot_dimension_numbers<[1], [1], [0], [0], [0, 0, 1, 0], [], []>} : vector<16x16xf32>, vector<16x16xf32>, vector<16x16xf32> -> vector<16x16xf32>
    %cst_36 = arith.constant dense<0xFF800000> : vector<16xf32>
    %108 = vector.multi_reduction <maximumf>, %107, %cst_36 [1] : vector<16x16xf32> to vector<16xf32>
    %109 = vector.shape_cast %108 : vector<16xf32> to vector<16x1xf32>
    %110 = vector.broadcast %109 : vector<16x1xf32> to vector<16x16xf32>
    %111 = arith.subf %107, %110 : vector<16x16xf32>
    %112 = math.exp %111 : vector<16x16xf32>
    %cst_37 = arith.constant dense<0.000000e+00> : vector<16xf32>
    %113 = vector.multi_reduction <add>, %112, %cst_37 [1] : vector<16x16xf32> to vector<16xf32>
    %114 = vector.shape_cast %113 : vector<16xf32> to vector<16x1xf32>
    %115 = tpu.reciprocal %114 {approx = true} : vector<16x1xf32> -> vector<16x1xf32>
    %116 = vector.broadcast %115 : vector<16x1xf32> to vector<16x16xf32>
    %117 = arith.mulf %112, %116 : vector<16x16xf32>
    %cst_38 = arith.constant dense<0.000000e+00> : vector<16x16xf32>
    %118 = tpu.matmul %117, %106, %cst_38 {dimension_numbers = #tpu.dot_dimension_numbers<[1], [0], [0], [1], [0, 0, 1, 1], [], []>} : vector<16x16xf32>, vector<16x16xf32>, vector<16x16xf32> -> vector<16x16xf32>
    %119 = vector.extract_strided_slice %73 {offsets = [0, 48], sizes = [16, 16], strides = [1, 1]} : vector<16x192xf32> to vector<16x16xf32>
    %120 = vector.extract_strided_slice %73 {offsets = [0, 112], sizes = [16, 16], strides = [1, 1]} : vector<16x192xf32> to vector<16x16xf32>
    %121 = vector.extract_strided_slice %73 {offsets = [0, 176], sizes = [16, 16], strides = [1, 1]} : vector<16x192xf32> to vector<16x16xf32>
    %cst_39 = arith.constant dense<0.000000e+00> : vector<16x16xf32>
    %122 = tpu.matmul %119, %120, %cst_39 {dimension_numbers = #tpu.dot_dimension_numbers<[1], [1], [0], [0], [0, 0, 1, 0], [], []>} : vector<16x16xf32>, vector<16x16xf32>, vector<16x16xf32> -> vector<16x16xf32>
    %cst_40 = arith.constant dense<0xFF800000> : vector<16xf32>
    %123 = vector.multi_reduction <maximumf>, %122, %cst_40 [1] : vector<16x16xf32> to vector<16xf32>
    %124 = vector.shape_cast %123 : vector<16xf32> to vector<16x1xf32>
    %125 = vector.broadcast %124 : vector<16x1xf32> to vector<16x16xf32>
    %126 = arith.subf %122, %125 : vector<16x16xf32>
    %127 = math.exp %126 : vector<16x16xf32>
    %cst_41 = arith.constant dense<0.000000e+00> : vector<16xf32>
    %128 = vector.multi_reduction <add>, %127, %cst_41 [1] : vector<16x16xf32> to vector<16xf32>
    %129 = vector.shape_cast %128 : vector<16xf32> to vector<16x1xf32>
    %130 = tpu.reciprocal %129 {approx = true} : vector<16x1xf32> -> vector<16x1xf32>
    %131 = vector.broadcast %130 : vector<16x1xf32> to vector<16x16xf32>
    %132 = arith.mulf %127, %131 : vector<16x16xf32>
    %cst_42 = arith.constant dense<0.000000e+00> : vector<16x16xf32>
    %133 = tpu.matmul %132, %121, %cst_42 {dimension_numbers = #tpu.dot_dimension_numbers<[1], [0], [0], [1], [0, 0, 1, 1], [], []>} : vector<16x16xf32>, vector<16x16xf32>, vector<16x16xf32> -> vector<16x16xf32>
    %134 = tpu.concatenate %88, %103, %118, %133 in 1 : vector<16x16xf32>, vector<16x16xf32>, vector<16x16xf32>, vector<16x16xf32> -> vector<16x64xf32>
    %c0_43 = arith.constant 0 : index
    %c0_44 = arith.constant 0 : index
    %c0_45 = arith.constant 0 : index
    %135 = vector.load %arg3[%c0_43, %c0_44, %c0_45] : memref<2x64x64xf32, #tpu.memory_space<vmem>>, vector<1x64x64xf32>
    %136 = vector.shape_cast %135 : vector<1x64x64xf32> to vector<64x64xf32>
    %cst_46 = arith.constant dense<0.000000e+00> : vector<16x64xf32>
    %137 = tpu.matmul %134, %136, %cst_46 {dimension_numbers = #tpu.dot_dimension_numbers<[1], [0], [0], [1], [0, 0, 1, 1], [], []>} : vector<16x64xf32>, vector<64x64xf32>, vector<16x64xf32> -> vector<16x64xf32>
    %138 = tpu.concatenate %72, %137 in 0 : vector<16x64xf32>, vector<16x64xf32> -> vector<32x64xf32>
    %c0_47 = arith.constant 0 : index
    %c0_48 = arith.constant 0 : index
    %c0_49 = arith.constant 0 : index
    %139 = vector.load %arg4[%c0_47, %c0_48, %c0_49] : memref<2x1x64xf32, #tpu.memory_space<vmem>>, vector<1x1x64xf32>
    %140 = vector.shape_cast %139 : vector<1x1x64xf32> to vector<1x64xf32>
    %141 = vector.broadcast %140 : vector<1x64xf32> to vector<32x64xf32>
    %142 = arith.addf %138, %141 : vector<32x64xf32>
    %143 = arith.addf %0, %142 : vector<32x64xf32>
    %c0_50 = arith.constant 0 : index
    %c0_51 = arith.constant 0 : index
    %c0_52 = arith.constant 0 : index
    %144 = vector.load %arg5[%c0_50, %c0_51, %c0_52] : memref<2x1x64xf32, #tpu.memory_space<vmem>>, vector<1x1x64xf32>
    %145 = vector.shape_cast %144 : vector<1x1x64xf32> to vector<1x64xf32>
    %c0_53 = arith.constant 0 : index
    %c0_54 = arith.constant 0 : index
    %c0_55 = arith.constant 0 : index
    %146 = vector.load %arg6[%c0_53, %c0_54, %c0_55] : memref<2x1x64xf32, #tpu.memory_space<vmem>>, vector<1x1x64xf32>
    %147 = vector.shape_cast %146 : vector<1x1x64xf32> to vector<1x64xf32>
    %cst_56 = arith.constant dense<0.000000e+00> : vector<32xf32>
    %148 = vector.multi_reduction <add>, %143, %cst_56 [1] : vector<32x64xf32> to vector<32xf32>
    %149 = vector.shape_cast %148 : vector<32xf32> to vector<32x1xf32>
    %cst_57 = arith.constant 6.400000e+01 : f32
    %150 = vector.broadcast %cst_57 : f32 to vector<32x1xf32>
    %151 = arith.divf %149, %150 : vector<32x1xf32>
    %152 = vector.broadcast %151 : vector<32x1xf32> to vector<32x64xf32>
    %153 = arith.subf %143, %152 : vector<32x64xf32>
    %154 = arith.mulf %153, %153 : vector<32x64xf32>
    %cst_58 = arith.constant dense<0.000000e+00> : vector<32xf32>
    %155 = vector.multi_reduction <add>, %154, %cst_58 [1] : vector<32x64xf32> to vector<32xf32>
    %156 = vector.shape_cast %155 : vector<32xf32> to vector<32x1xf32>
    %cst_59 = arith.constant 6.400000e+01 : f32
    %157 = vector.broadcast %cst_59 : f32 to vector<32x1xf32>
    %158 = arith.divf %156, %157 : vector<32x1xf32>
    %cst_60 = arith.constant 9.99999974E-6 : f32
    %159 = vector.broadcast %cst_60 : f32 to vector<32x1xf32>
    %160 = arith.addf %158, %159 : vector<32x1xf32>
    %161 = math.rsqrt %160 : vector<32x1xf32>
    %162 = vector.broadcast %151 : vector<32x1xf32> to vector<32x64xf32>
    %163 = arith.subf %143, %162 : vector<32x64xf32>
    %164 = vector.broadcast %161 : vector<32x1xf32> to vector<32x64xf32>
    %165 = arith.mulf %163, %164 : vector<32x64xf32>
    %166 = vector.broadcast %145 : vector<1x64xf32> to vector<32x64xf32>
    %167 = arith.mulf %165, %166 : vector<32x64xf32>
    %168 = vector.broadcast %147 : vector<1x64xf32> to vector<32x64xf32>
    %169 = arith.addf %167, %168 : vector<32x64xf32>
    %c0_61 = arith.constant 0 : index
    %c0_62 = arith.constant 0 : index
    %c0_63 = arith.constant 0 : index
    %170 = vector.load %arg7[%c0_61, %c0_62, %c0_63] : memref<2x64x128xf32, #tpu.memory_space<vmem>>, vector<1x64x128xf32>
    %171 = vector.shape_cast %170 : vector<1x64x128xf32> to vector<64x128xf32>
    %cst_64 = arith.constant dense<0.000000e+00> : vector<32x128xf32>
    %172 = tpu.matmul %169, %171, %cst_64 {dimension_numbers = #tpu.dot_dimension_numbers<[1], [0], [0], [1], [0, 0, 1, 1], [], []>} : vector<32x64xf32>, vector<64x128xf32>, vector<32x128xf32> -> vector<32x128xf32>
    %c0_65 = arith.constant 0 : index
    %c0_66 = arith.constant 0 : index
    %c0_67 = arith.constant 0 : index
    %173 = vector.load %arg8[%c0_65, %c0_66, %c0_67] : memref<2x1x128xf32, #tpu.memory_space<vmem>>, vector<1x1x128xf32>
    %174 = vector.shape_cast %173 : vector<1x1x128xf32> to vector<1x128xf32>
    %175 = vector.broadcast %174 : vector<1x128xf32> to vector<32x128xf32>
    %176 = arith.addf %172, %175 : vector<32x128xf32>
    %cst_68 = arith.constant 0.000000e+00 : f32
    %177 = vector.broadcast %cst_68 : f32 to vector<32x128xf32>
    %178 = arith.maximumf %176, %177 : vector<32x128xf32>
    %c0_69 = arith.constant 0 : index
    %c0_70 = arith.constant 0 : index
    %c0_71 = arith.constant 0 : index
    %179 = vector.load %arg9[%c0_69, %c0_70, %c0_71] : memref<2x128x64xf32, #tpu.memory_space<vmem>>, vector<1x128x64xf32>
    %180 = vector.shape_cast %179 : vector<1x128x64xf32> to vector<128x64xf32>
    %cst_72 = arith.constant dense<0.000000e+00> : vector<32x64xf32>
    %181 = tpu.matmul %178, %180, %cst_72 {dimension_numbers = #tpu.dot_dimension_numbers<[1], [0], [0], [1], [0, 0, 1, 1], [], []>} : vector<32x128xf32>, vector<128x64xf32>, vector<32x64xf32> -> vector<32x64xf32>
    %c0_73 = arith.constant 0 : index
    %c0_74 = arith.constant 0 : index
    %c0_75 = arith.constant 0 : index
    %182 = vector.load %arg10[%c0_73, %c0_74, %c0_75] : memref<2x1x64xf32, #tpu.memory_space<vmem>>, vector<1x1x64xf32>
    %183 = vector.shape_cast %182 : vector<1x1x64xf32> to vector<1x64xf32>
    %184 = vector.broadcast %183 : vector<1x64xf32> to vector<32x64xf32>
    %185 = arith.addf %181, %184 : vector<32x64xf32>
    %186 = arith.addf %169, %185 : vector<32x64xf32>
    %c0_76 = arith.constant 0 : index
    %c0_77 = arith.constant 0 : index
    %c0_78 = arith.constant 0 : index
    %187 = vector.load %arg11[%c0_76, %c0_77, %c0_78] : memref<2x1x64xf32, #tpu.memory_space<vmem>>, vector<1x1x64xf32>
    %188 = vector.shape_cast %187 : vector<1x1x64xf32> to vector<1x64xf32>
    %c0_79 = arith.constant 0 : index
    %c0_80 = arith.constant 0 : index
    %c0_81 = arith.constant 0 : index
    %189 = vector.load %arg12[%c0_79, %c0_80, %c0_81] : memref<2x1x64xf32, #tpu.memory_space<vmem>>, vector<1x1x64xf32>
    %190 = vector.shape_cast %189 : vector<1x1x64xf32> to vector<1x64xf32>
    %cst_82 = arith.constant dense<0.000000e+00> : vector<32xf32>
    %191 = vector.multi_reduction <add>, %186, %cst_82 [1] : vector<32x64xf32> to vector<32xf32>
    %192 = vector.shape_cast %191 : vector<32xf32> to vector<32x1xf32>
    %cst_83 = arith.constant 6.400000e+01 : f32
    %193 = vector.broadcast %cst_83 : f32 to vector<32x1xf32>
    %194 = arith.divf %192, %193 : vector<32x1xf32>
    %195 = vector.broadcast %194 : vector<32x1xf32> to vector<32x64xf32>
    %196 = arith.subf %186, %195 : vector<32x64xf32>
    %197 = arith.mulf %196, %196 : vector<32x64xf32>
    %cst_84 = arith.constant dense<0.000000e+00> : vector<32xf32>
    %198 = vector.multi_reduction <add>, %197, %cst_84 [1] : vector<32x64xf32> to vector<32xf32>
    %199 = vector.shape_cast %198 : vector<32xf32> to vector<32x1xf32>
    %cst_85 = arith.constant 6.400000e+01 : f32
    %200 = vector.broadcast %cst_85 : f32 to vector<32x1xf32>
    %201 = arith.divf %199, %200 : vector<32x1xf32>
    %cst_86 = arith.constant 9.99999974E-6 : f32
    %202 = vector.broadcast %cst_86 : f32 to vector<32x1xf32>
    %203 = arith.addf %201, %202 : vector<32x1xf32>
    %204 = math.rsqrt %203 : vector<32x1xf32>
    %205 = vector.broadcast %194 : vector<32x1xf32> to vector<32x64xf32>
    %206 = arith.subf %186, %205 : vector<32x64xf32>
    %207 = vector.broadcast %204 : vector<32x1xf32> to vector<32x64xf32>
    %208 = arith.mulf %206, %207 : vector<32x64xf32>
    %209 = vector.broadcast %188 : vector<1x64xf32> to vector<32x64xf32>
    %210 = arith.mulf %208, %209 : vector<32x64xf32>
    %211 = vector.broadcast %190 : vector<1x64xf32> to vector<32x64xf32>
    %212 = arith.addf %210, %211 : vector<32x64xf32>
    %c1 = arith.constant 1 : index
    %c0_87 = arith.constant 0 : index
    %c0_88 = arith.constant 0 : index
    %213 = vector.load %arg1[%c1, %c0_87, %c0_88] : memref<2x64x192xf32, #tpu.memory_space<vmem>>, vector<1x64x192xf32>
    %214 = vector.shape_cast %213 : vector<1x64x192xf32> to vector<64x192xf32>
    %cst_89 = arith.constant dense<0.000000e+00> : vector<32x192xf32>
    %215 = tpu.matmul %212, %214, %cst_89 {dimension_numbers = #tpu.dot_dimension_numbers<[1], [0], [0], [1], [0, 0, 1, 1], [], []>} : vector<32x64xf32>, vector<64x192xf32>, vector<32x192xf32> -> vector<32x192xf32>
    %c1_90 = arith.constant 1 : index
    %c0_91 = arith.constant 0 : index
    %c0_92 = arith.constant 0 : index
    %216 = vector.load %arg2[%c1_90, %c0_91, %c0_92] : memref<2x1x192xf32, #tpu.memory_space<vmem>>, vector<1x1x192xf32>
    %217 = vector.shape_cast %216 : vector<1x1x192xf32> to vector<1x192xf32>
    %218 = vector.broadcast %217 : vector<1x192xf32> to vector<32x192xf32>
    %219 = arith.addf %215, %218 : vector<32x192xf32>
    %220 = vector.extract_strided_slice %219 {offsets = [0, 0], sizes = [16, 192], strides = [1, 1]} : vector<32x192xf32> to vector<16x192xf32>
    %221 = vector.extract_strided_slice %220 {offsets = [0, 0], sizes = [16, 16], strides = [1, 1]} : vector<16x192xf32> to vector<16x16xf32>
    %222 = vector.extract_strided_slice %220 {offsets = [0, 64], sizes = [16, 16], strides = [1, 1]} : vector<16x192xf32> to vector<16x16xf32>
    %223 = vector.extract_strided_slice %220 {offsets = [0, 128], sizes = [16, 16], strides = [1, 1]} : vector<16x192xf32> to vector<16x16xf32>
    %cst_93 = arith.constant dense<0.000000e+00> : vector<16x16xf32>
    %224 = tpu.matmul %221, %222, %cst_93 {dimension_numbers = #tpu.dot_dimension_numbers<[1], [1], [0], [0], [0, 0, 1, 0], [], []>} : vector<16x16xf32>, vector<16x16xf32>, vector<16x16xf32> -> vector<16x16xf32>
    %cst_94 = arith.constant dense<0xFF800000> : vector<16xf32>
    %225 = vector.multi_reduction <maximumf>, %224, %cst_94 [1] : vector<16x16xf32> to vector<16xf32>
    %226 = vector.shape_cast %225 : vector<16xf32> to vector<16x1xf32>
    %227 = vector.broadcast %226 : vector<16x1xf32> to vector<16x16xf32>
    %228 = arith.subf %224, %227 : vector<16x16xf32>
    %229 = math.exp %228 : vector<16x16xf32>
    %cst_95 = arith.constant dense<0.000000e+00> : vector<16xf32>
    %230 = vector.multi_reduction <add>, %229, %cst_95 [1] : vector<16x16xf32> to vector<16xf32>
    %231 = vector.shape_cast %230 : vector<16xf32> to vector<16x1xf32>
    %232 = tpu.reciprocal %231 {approx = true} : vector<16x1xf32> -> vector<16x1xf32>
    %233 = vector.broadcast %232 : vector<16x1xf32> to vector<16x16xf32>
    %234 = arith.mulf %229, %233 : vector<16x16xf32>
    %cst_96 = arith.constant dense<0.000000e+00> : vector<16x16xf32>
    %235 = tpu.matmul %234, %223, %cst_96 {dimension_numbers = #tpu.dot_dimension_numbers<[1], [0], [0], [1], [0, 0, 1, 1], [], []>} : vector<16x16xf32>, vector<16x16xf32>, vector<16x16xf32> -> vector<16x16xf32>
    %236 = vector.extract_strided_slice %220 {offsets = [0, 16], sizes = [16, 16], strides = [1, 1]} : vector<16x192xf32> to vector<16x16xf32>
    %237 = vector.extract_strided_slice %220 {offsets = [0, 80], sizes = [16, 16], strides = [1, 1]} : vector<16x192xf32> to vector<16x16xf32>
    %238 = vector.extract_strided_slice %220 {offsets = [0, 144], sizes = [16, 16], strides = [1, 1]} : vector<16x192xf32> to vector<16x16xf32>
    %cst_97 = arith.constant dense<0.000000e+00> : vector<16x16xf32>
    %239 = tpu.matmul %236, %237, %cst_97 {dimension_numbers = #tpu.dot_dimension_numbers<[1], [1], [0], [0], [0, 0, 1, 0], [], []>} : vector<16x16xf32>, vector<16x16xf32>, vector<16x16xf32> -> vector<16x16xf32>
    %cst_98 = arith.constant dense<0xFF800000> : vector<16xf32>
    %240 = vector.multi_reduction <maximumf>, %239, %cst_98 [1] : vector<16x16xf32> to vector<16xf32>
    %241 = vector.shape_cast %240 : vector<16xf32> to vector<16x1xf32>
    %242 = vector.broadcast %241 : vector<16x1xf32> to vector<16x16xf32>
    %243 = arith.subf %239, %242 : vector<16x16xf32>
    %244 = math.exp %243 : vector<16x16xf32>
    %cst_99 = arith.constant dense<0.000000e+00> : vector<16xf32>
    %245 = vector.multi_reduction <add>, %244, %cst_99 [1] : vector<16x16xf32> to vector<16xf32>
    %246 = vector.shape_cast %245 : vector<16xf32> to vector<16x1xf32>
    %247 = tpu.reciprocal %246 {approx = true} : vector<16x1xf32> -> vector<16x1xf32>
    %248 = vector.broadcast %247 : vector<16x1xf32> to vector<16x16xf32>
    %249 = arith.mulf %244, %248 : vector<16x16xf32>
    %cst_100 = arith.constant dense<0.000000e+00> : vector<16x16xf32>
    %250 = tpu.matmul %249, %238, %cst_100 {dimension_numbers = #tpu.dot_dimension_numbers<[1], [0], [0], [1], [0, 0, 1, 1], [], []>} : vector<16x16xf32>, vector<16x16xf32>, vector<16x16xf32> -> vector<16x16xf32>
    %251 = vector.extract_strided_slice %220 {offsets = [0, 32], sizes = [16, 16], strides = [1, 1]} : vector<16x192xf32> to vector<16x16xf32>
    %252 = vector.extract_strided_slice %220 {offsets = [0, 96], sizes = [16, 16], strides = [1, 1]} : vector<16x192xf32> to vector<16x16xf32>
    %253 = vector.extract_strided_slice %220 {offsets = [0, 160], sizes = [16, 16], strides = [1, 1]} : vector<16x192xf32> to vector<16x16xf32>
    %cst_101 = arith.constant dense<0.000000e+00> : vector<16x16xf32>
    %254 = tpu.matmul %251, %252, %cst_101 {dimension_numbers = #tpu.dot_dimension_numbers<[1], [1], [0], [0], [0, 0, 1, 0], [], []>} : vector<16x16xf32>, vector<16x16xf32>, vector<16x16xf32> -> vector<16x16xf32>
    %cst_102 = arith.constant dense<0xFF800000> : vector<16xf32>
    %255 = vector.multi_reduction <maximumf>, %254, %cst_102 [1] : vector<16x16xf32> to vector<16xf32>
    %256 = vector.shape_cast %255 : vector<16xf32> to vector<16x1xf32>
    %257 = vector.broadcast %256 : vector<16x1xf32> to vector<16x16xf32>
    %258 = arith.subf %254, %257 : vector<16x16xf32>
    %259 = math.exp %258 : vector<16x16xf32>
    %cst_103 = arith.constant dense<0.000000e+00> : vector<16xf32>
    %260 = vector.multi_reduction <add>, %259, %cst_103 [1] : vector<16x16xf32> to vector<16xf32>
    %261 = vector.shape_cast %260 : vector<16xf32> to vector<16x1xf32>
    %262 = tpu.reciprocal %261 {approx = true} : vector<16x1xf32> -> vector<16x1xf32>
    %263 = vector.broadcast %262 : vector<16x1xf32> to vector<16x16xf32>
    %264 = arith.mulf %259, %263 : vector<16x16xf32>
    %cst_104 = arith.constant dense<0.000000e+00> : vector<16x16xf32>
    %265 = tpu.matmul %264, %253, %cst_104 {dimension_numbers = #tpu.dot_dimension_numbers<[1], [0], [0], [1], [0, 0, 1, 1], [], []>} : vector<16x16xf32>, vector<16x16xf32>, vector<16x16xf32> -> vector<16x16xf32>
    %266 = vector.extract_strided_slice %220 {offsets = [0, 48], sizes = [16, 16], strides = [1, 1]} : vector<16x192xf32> to vector<16x16xf32>
    %267 = vector.extract_strided_slice %220 {offsets = [0, 112], sizes = [16, 16], strides = [1, 1]} : vector<16x192xf32> to vector<16x16xf32>
    %268 = vector.extract_strided_slice %220 {offsets = [0, 176], sizes = [16, 16], strides = [1, 1]} : vector<16x192xf32> to vector<16x16xf32>
    %cst_105 = arith.constant dense<0.000000e+00> : vector<16x16xf32>
    %269 = tpu.matmul %266, %267, %cst_105 {dimension_numbers = #tpu.dot_dimension_numbers<[1], [1], [0], [0], [0, 0, 1, 0], [], []>} : vector<16x16xf32>, vector<16x16xf32>, vector<16x16xf32> -> vector<16x16xf32>
    %cst_106 = arith.constant dense<0xFF800000> : vector<16xf32>
    %270 = vector.multi_reduction <maximumf>, %269, %cst_106 [1] : vector<16x16xf32> to vector<16xf32>
    %271 = vector.shape_cast %270 : vector<16xf32> to vector<16x1xf32>
    %272 = vector.broadcast %271 : vector<16x1xf32> to vector<16x16xf32>
    %273 = arith.subf %269, %272 : vector<16x16xf32>
    %274 = math.exp %273 : vector<16x16xf32>
    %cst_107 = arith.constant dense<0.000000e+00> : vector<16xf32>
    %275 = vector.multi_reduction <add>, %274, %cst_107 [1] : vector<16x16xf32> to vector<16xf32>
    %276 = vector.shape_cast %275 : vector<16xf32> to vector<16x1xf32>
    %277 = tpu.reciprocal %276 {approx = true} : vector<16x1xf32> -> vector<16x1xf32>
    %278 = vector.broadcast %277 : vector<16x1xf32> to vector<16x16xf32>
    %279 = arith.mulf %274, %278 : vector<16x16xf32>
    %cst_108 = arith.constant dense<0.000000e+00> : vector<16x16xf32>
    %280 = tpu.matmul %279, %268, %cst_108 {dimension_numbers = #tpu.dot_dimension_numbers<[1], [0], [0], [1], [0, 0, 1, 1], [], []>} : vector<16x16xf32>, vector<16x16xf32>, vector<16x16xf32> -> vector<16x16xf32>
    %281 = tpu.concatenate %235, %250, %265, %280 in 1 : vector<16x16xf32>, vector<16x16xf32>, vector<16x16xf32>, vector<16x16xf32> -> vector<16x64xf32>
    %c1_109 = arith.constant 1 : index
    %c0_110 = arith.constant 0 : index
    %c0_111 = arith.constant 0 : index
    %282 = vector.load %arg3[%c1_109, %c0_110, %c0_111] : memref<2x64x64xf32, #tpu.memory_space<vmem>>, vector<1x64x64xf32>
    %283 = vector.shape_cast %282 : vector<1x64x64xf32> to vector<64x64xf32>
    %cst_112 = arith.constant dense<0.000000e+00> : vector<16x64xf32>
    %284 = tpu.matmul %281, %283, %cst_112 {dimension_numbers = #tpu.dot_dimension_numbers<[1], [0], [0], [1], [0, 0, 1, 1], [], []>} : vector<16x64xf32>, vector<64x64xf32>, vector<16x64xf32> -> vector<16x64xf32>
    %285 = vector.extract_strided_slice %219 {offsets = [16, 0], sizes = [16, 192], strides = [1, 1]} : vector<32x192xf32> to vector<16x192xf32>
    %286 = vector.extract_strided_slice %285 {offsets = [0, 0], sizes = [16, 16], strides = [1, 1]} : vector<16x192xf32> to vector<16x16xf32>
    %287 = vector.extract_strided_slice %285 {offsets = [0, 64], sizes = [16, 16], strides = [1, 1]} : vector<16x192xf32> to vector<16x16xf32>
    %288 = vector.extract_strided_slice %285 {offsets = [0, 128], sizes = [16, 16], strides = [1, 1]} : vector<16x192xf32> to vector<16x16xf32>
    %cst_113 = arith.constant dense<0.000000e+00> : vector<16x16xf32>
    %289 = tpu.matmul %286, %287, %cst_113 {dimension_numbers = #tpu.dot_dimension_numbers<[1], [1], [0], [0], [0, 0, 1, 0], [], []>} : vector<16x16xf32>, vector<16x16xf32>, vector<16x16xf32> -> vector<16x16xf32>
    %cst_114 = arith.constant dense<0xFF800000> : vector<16xf32>
    %290 = vector.multi_reduction <maximumf>, %289, %cst_114 [1] : vector<16x16xf32> to vector<16xf32>
    %291 = vector.shape_cast %290 : vector<16xf32> to vector<16x1xf32>
    %292 = vector.broadcast %291 : vector<16x1xf32> to vector<16x16xf32>
    %293 = arith.subf %289, %292 : vector<16x16xf32>
    %294 = math.exp %293 : vector<16x16xf32>
    %cst_115 = arith.constant dense<0.000000e+00> : vector<16xf32>
    %295 = vector.multi_reduction <add>, %294, %cst_115 [1] : vector<16x16xf32> to vector<16xf32>
    %296 = vector.shape_cast %295 : vector<16xf32> to vector<16x1xf32>
    %297 = tpu.reciprocal %296 {approx = true} : vector<16x1xf32> -> vector<16x1xf32>
    %298 = vector.broadcast %297 : vector<16x1xf32> to vector<16x16xf32>
    %299 = arith.mulf %294, %298 : vector<16x16xf32>
    %cst_116 = arith.constant dense<0.000000e+00> : vector<16x16xf32>
    %300 = tpu.matmul %299, %288, %cst_116 {dimension_numbers = #tpu.dot_dimension_numbers<[1], [0], [0], [1], [0, 0, 1, 1], [], []>} : vector<16x16xf32>, vector<16x16xf32>, vector<16x16xf32> -> vector<16x16xf32>
    %301 = vector.extract_strided_slice %285 {offsets = [0, 16], sizes = [16, 16], strides = [1, 1]} : vector<16x192xf32> to vector<16x16xf32>
    %302 = vector.extract_strided_slice %285 {offsets = [0, 80], sizes = [16, 16], strides = [1, 1]} : vector<16x192xf32> to vector<16x16xf32>
    %303 = vector.extract_strided_slice %285 {offsets = [0, 144], sizes = [16, 16], strides = [1, 1]} : vector<16x192xf32> to vector<16x16xf32>
    %cst_117 = arith.constant dense<0.000000e+00> : vector<16x16xf32>
    %304 = tpu.matmul %301, %302, %cst_117 {dimension_numbers = #tpu.dot_dimension_numbers<[1], [1], [0], [0], [0, 0, 1, 0], [], []>} : vector<16x16xf32>, vector<16x16xf32>, vector<16x16xf32> -> vector<16x16xf32>
    %cst_118 = arith.constant dense<0xFF800000> : vector<16xf32>
    %305 = vector.multi_reduction <maximumf>, %304, %cst_118 [1] : vector<16x16xf32> to vector<16xf32>
    %306 = vector.shape_cast %305 : vector<16xf32> to vector<16x1xf32>
    %307 = vector.broadcast %306 : vector<16x1xf32> to vector<16x16xf32>
    %308 = arith.subf %304, %307 : vector<16x16xf32>
    %309 = math.exp %308 : vector<16x16xf32>
    %cst_119 = arith.constant dense<0.000000e+00> : vector<16xf32>
    %310 = vector.multi_reduction <add>, %309, %cst_119 [1] : vector<16x16xf32> to vector<16xf32>
    %311 = vector.shape_cast %310 : vector<16xf32> to vector<16x1xf32>
    %312 = tpu.reciprocal %311 {approx = true} : vector<16x1xf32> -> vector<16x1xf32>
    %313 = vector.broadcast %312 : vector<16x1xf32> to vector<16x16xf32>
    %314 = arith.mulf %309, %313 : vector<16x16xf32>
    %cst_120 = arith.constant dense<0.000000e+00> : vector<16x16xf32>
    %315 = tpu.matmul %314, %303, %cst_120 {dimension_numbers = #tpu.dot_dimension_numbers<[1], [0], [0], [1], [0, 0, 1, 1], [], []>} : vector<16x16xf32>, vector<16x16xf32>, vector<16x16xf32> -> vector<16x16xf32>
    %316 = vector.extract_strided_slice %285 {offsets = [0, 32], sizes = [16, 16], strides = [1, 1]} : vector<16x192xf32> to vector<16x16xf32>
    %317 = vector.extract_strided_slice %285 {offsets = [0, 96], sizes = [16, 16], strides = [1, 1]} : vector<16x192xf32> to vector<16x16xf32>
    %318 = vector.extract_strided_slice %285 {offsets = [0, 160], sizes = [16, 16], strides = [1, 1]} : vector<16x192xf32> to vector<16x16xf32>
    %cst_121 = arith.constant dense<0.000000e+00> : vector<16x16xf32>
    %319 = tpu.matmul %316, %317, %cst_121 {dimension_numbers = #tpu.dot_dimension_numbers<[1], [1], [0], [0], [0, 0, 1, 0], [], []>} : vector<16x16xf32>, vector<16x16xf32>, vector<16x16xf32> -> vector<16x16xf32>
    %cst_122 = arith.constant dense<0xFF800000> : vector<16xf32>
    %320 = vector.multi_reduction <maximumf>, %319, %cst_122 [1] : vector<16x16xf32> to vector<16xf32>
    %321 = vector.shape_cast %320 : vector<16xf32> to vector<16x1xf32>
    %322 = vector.broadcast %321 : vector<16x1xf32> to vector<16x16xf32>
    %323 = arith.subf %319, %322 : vector<16x16xf32>
    %324 = math.exp %323 : vector<16x16xf32>
    %cst_123 = arith.constant dense<0.000000e+00> : vector<16xf32>
    %325 = vector.multi_reduction <add>, %324, %cst_123 [1] : vector<16x16xf32> to vector<16xf32>
    %326 = vector.shape_cast %325 : vector<16xf32> to vector<16x1xf32>
    %327 = tpu.reciprocal %326 {approx = true} : vector<16x1xf32> -> vector<16x1xf32>
    %328 = vector.broadcast %327 : vector<16x1xf32> to vector<16x16xf32>
    %329 = arith.mulf %324, %328 : vector<16x16xf32>
    %cst_124 = arith.constant dense<0.000000e+00> : vector<16x16xf32>
    %330 = tpu.matmul %329, %318, %cst_124 {dimension_numbers = #tpu.dot_dimension_numbers<[1], [0], [0], [1], [0, 0, 1, 1], [], []>} : vector<16x16xf32>, vector<16x16xf32>, vector<16x16xf32> -> vector<16x16xf32>
    %331 = vector.extract_strided_slice %285 {offsets = [0, 48], sizes = [16, 16], strides = [1, 1]} : vector<16x192xf32> to vector<16x16xf32>
    %332 = vector.extract_strided_slice %285 {offsets = [0, 112], sizes = [16, 16], strides = [1, 1]} : vector<16x192xf32> to vector<16x16xf32>
    %333 = vector.extract_strided_slice %285 {offsets = [0, 176], sizes = [16, 16], strides = [1, 1]} : vector<16x192xf32> to vector<16x16xf32>
    %cst_125 = arith.constant dense<0.000000e+00> : vector<16x16xf32>
    %334 = tpu.matmul %331, %332, %cst_125 {dimension_numbers = #tpu.dot_dimension_numbers<[1], [1], [0], [0], [0, 0, 1, 0], [], []>} : vector<16x16xf32>, vector<16x16xf32>, vector<16x16xf32> -> vector<16x16xf32>
    %cst_126 = arith.constant dense<0xFF800000> : vector<16xf32>
    %335 = vector.multi_reduction <maximumf>, %334, %cst_126 [1] : vector<16x16xf32> to vector<16xf32>
    %336 = vector.shape_cast %335 : vector<16xf32> to vector<16x1xf32>
    %337 = vector.broadcast %336 : vector<16x1xf32> to vector<16x16xf32>
    %338 = arith.subf %334, %337 : vector<16x16xf32>
    %339 = math.exp %338 : vector<16x16xf32>
    %cst_127 = arith.constant dense<0.000000e+00> : vector<16xf32>
    %340 = vector.multi_reduction <add>, %339, %cst_127 [1] : vector<16x16xf32> to vector<16xf32>
    %341 = vector.shape_cast %340 : vector<16xf32> to vector<16x1xf32>
    %342 = tpu.reciprocal %341 {approx = true} : vector<16x1xf32> -> vector<16x1xf32>
    %343 = vector.broadcast %342 : vector<16x1xf32> to vector<16x16xf32>
    %344 = arith.mulf %339, %343 : vector<16x16xf32>
    %cst_128 = arith.constant dense<0.000000e+00> : vector<16x16xf32>
    %345 = tpu.matmul %344, %333, %cst_128 {dimension_numbers = #tpu.dot_dimension_numbers<[1], [0], [0], [1], [0, 0, 1, 1], [], []>} : vector<16x16xf32>, vector<16x16xf32>, vector<16x16xf32> -> vector<16x16xf32>
    %346 = tpu.concatenate %300, %315, %330, %345 in 1 : vector<16x16xf32>, vector<16x16xf32>, vector<16x16xf32>, vector<16x16xf32> -> vector<16x64xf32>
    %c1_129 = arith.constant 1 : index
    %c0_130 = arith.constant 0 : index
    %c0_131 = arith.constant 0 : index
    %347 = vector.load %arg3[%c1_129, %c0_130, %c0_131] : memref<2x64x64xf32, #tpu.memory_space<vmem>>, vector<1x64x64xf32>
    %348 = vector.shape_cast %347 : vector<1x64x64xf32> to vector<64x64xf32>
    %cst_132 = arith.constant dense<0.000000e+00> : vector<16x64xf32>
    %349 = tpu.matmul %346, %348, %cst_132 {dimension_numbers = #tpu.dot_dimension_numbers<[1], [0], [0], [1], [0, 0, 1, 1], [], []>} : vector<16x64xf32>, vector<64x64xf32>, vector<16x64xf32> -> vector<16x64xf32>
    %350 = tpu.concatenate %284, %349 in 0 : vector<16x64xf32>, vector<16x64xf32> -> vector<32x64xf32>
    %c1_133 = arith.constant 1 : index
    %c0_134 = arith.constant 0 : index
    %c0_135 = arith.constant 0 : index
    %351 = vector.load %arg4[%c1_133, %c0_134, %c0_135] : memref<2x1x64xf32, #tpu.memory_space<vmem>>, vector<1x1x64xf32>
    %352 = vector.shape_cast %351 : vector<1x1x64xf32> to vector<1x64xf32>
    %353 = vector.broadcast %352 : vector<1x64xf32> to vector<32x64xf32>
    %354 = arith.addf %350, %353 : vector<32x64xf32>
    %355 = arith.addf %212, %354 : vector<32x64xf32>
    %c1_136 = arith.constant 1 : index
    %c0_137 = arith.constant 0 : index
    %c0_138 = arith.constant 0 : index
    %356 = vector.load %arg5[%c1_136, %c0_137, %c0_138] : memref<2x1x64xf32, #tpu.memory_space<vmem>>, vector<1x1x64xf32>
    %357 = vector.shape_cast %356 : vector<1x1x64xf32> to vector<1x64xf32>
    %c1_139 = arith.constant 1 : index
    %c0_140 = arith.constant 0 : index
    %c0_141 = arith.constant 0 : index
    %358 = vector.load %arg6[%c1_139, %c0_140, %c0_141] : memref<2x1x64xf32, #tpu.memory_space<vmem>>, vector<1x1x64xf32>
    %359 = vector.shape_cast %358 : vector<1x1x64xf32> to vector<1x64xf32>
    %cst_142 = arith.constant dense<0.000000e+00> : vector<32xf32>
    %360 = vector.multi_reduction <add>, %355, %cst_142 [1] : vector<32x64xf32> to vector<32xf32>
    %361 = vector.shape_cast %360 : vector<32xf32> to vector<32x1xf32>
    %cst_143 = arith.constant 6.400000e+01 : f32
    %362 = vector.broadcast %cst_143 : f32 to vector<32x1xf32>
    %363 = arith.divf %361, %362 : vector<32x1xf32>
    %364 = vector.broadcast %363 : vector<32x1xf32> to vector<32x64xf32>
    %365 = arith.subf %355, %364 : vector<32x64xf32>
    %366 = arith.mulf %365, %365 : vector<32x64xf32>
    %cst_144 = arith.constant dense<0.000000e+00> : vector<32xf32>
    %367 = vector.multi_reduction <add>, %366, %cst_144 [1] : vector<32x64xf32> to vector<32xf32>
    %368 = vector.shape_cast %367 : vector<32xf32> to vector<32x1xf32>
    %cst_145 = arith.constant 6.400000e+01 : f32
    %369 = vector.broadcast %cst_145 : f32 to vector<32x1xf32>
    %370 = arith.divf %368, %369 : vector<32x1xf32>
    %cst_146 = arith.constant 9.99999974E-6 : f32
    %371 = vector.broadcast %cst_146 : f32 to vector<32x1xf32>
    %372 = arith.addf %370, %371 : vector<32x1xf32>
    %373 = math.rsqrt %372 : vector<32x1xf32>
    %374 = vector.broadcast %363 : vector<32x1xf32> to vector<32x64xf32>
    %375 = arith.subf %355, %374 : vector<32x64xf32>
    %376 = vector.broadcast %373 : vector<32x1xf32> to vector<32x64xf32>
    %377 = arith.mulf %375, %376 : vector<32x64xf32>
    %378 = vector.broadcast %357 : vector<1x64xf32> to vector<32x64xf32>
    %379 = arith.mulf %377, %378 : vector<32x64xf32>
    %380 = vector.broadcast %359 : vector<1x64xf32> to vector<32x64xf32>
    %381 = arith.addf %379, %380 : vector<32x64xf32>
    %c1_147 = arith.constant 1 : index
    %c0_148 = arith.constant 0 : index
    %c0_149 = arith.constant 0 : index
    %382 = vector.load %arg7[%c1_147, %c0_148, %c0_149] : memref<2x64x128xf32, #tpu.memory_space<vmem>>, vector<1x64x128xf32>
    %383 = vector.shape_cast %382 : vector<1x64x128xf32> to vector<64x128xf32>
    %cst_150 = arith.constant dense<0.000000e+00> : vector<32x128xf32>
    %384 = tpu.matmul %381, %383, %cst_150 {dimension_numbers = #tpu.dot_dimension_numbers<[1], [0], [0], [1], [0, 0, 1, 1], [], []>} : vector<32x64xf32>, vector<64x128xf32>, vector<32x128xf32> -> vector<32x128xf32>
    %c1_151 = arith.constant 1 : index
    %c0_152 = arith.constant 0 : index
    %c0_153 = arith.constant 0 : index
    %385 = vector.load %arg8[%c1_151, %c0_152, %c0_153] : memref<2x1x128xf32, #tpu.memory_space<vmem>>, vector<1x1x128xf32>
    %386 = vector.shape_cast %385 : vector<1x1x128xf32> to vector<1x128xf32>
    %387 = vector.broadcast %386 : vector<1x128xf32> to vector<32x128xf32>
    %388 = arith.addf %384, %387 : vector<32x128xf32>
    %cst_154 = arith.constant 0.000000e+00 : f32
    %389 = vector.broadcast %cst_154 : f32 to vector<32x128xf32>
    %390 = arith.maximumf %388, %389 : vector<32x128xf32>
    %c1_155 = arith.constant 1 : index
    %c0_156 = arith.constant 0 : index
    %c0_157 = arith.constant 0 : index
    %391 = vector.load %arg9[%c1_155, %c0_156, %c0_157] : memref<2x128x64xf32, #tpu.memory_space<vmem>>, vector<1x128x64xf32>
    %392 = vector.shape_cast %391 : vector<1x128x64xf32> to vector<128x64xf32>
    %cst_158 = arith.constant dense<0.000000e+00> : vector<32x64xf32>
    %393 = tpu.matmul %390, %392, %cst_158 {dimension_numbers = #tpu.dot_dimension_numbers<[1], [0], [0], [1], [0, 0, 1, 1], [], []>} : vector<32x128xf32>, vector<128x64xf32>, vector<32x64xf32> -> vector<32x64xf32>
    %c1_159 = arith.constant 1 : index
    %c0_160 = arith.constant 0 : index
    %c0_161 = arith.constant 0 : index
    %394 = vector.load %arg10[%c1_159, %c0_160, %c0_161] : memref<2x1x64xf32, #tpu.memory_space<vmem>>, vector<1x1x64xf32>
    %395 = vector.shape_cast %394 : vector<1x1x64xf32> to vector<1x64xf32>
    %396 = vector.broadcast %395 : vector<1x64xf32> to vector<32x64xf32>
    %397 = arith.addf %393, %396 : vector<32x64xf32>
    %398 = arith.addf %381, %397 : vector<32x64xf32>
    %c1_162 = arith.constant 1 : index
    %c0_163 = arith.constant 0 : index
    %c0_164 = arith.constant 0 : index
    %399 = vector.load %arg11[%c1_162, %c0_163, %c0_164] : memref<2x1x64xf32, #tpu.memory_space<vmem>>, vector<1x1x64xf32>
    %400 = vector.shape_cast %399 : vector<1x1x64xf32> to vector<1x64xf32>
    %c1_165 = arith.constant 1 : index
    %c0_166 = arith.constant 0 : index
    %c0_167 = arith.constant 0 : index
    %401 = vector.load %arg12[%c1_165, %c0_166, %c0_167] : memref<2x1x64xf32, #tpu.memory_space<vmem>>, vector<1x1x64xf32>
    %402 = vector.shape_cast %401 : vector<1x1x64xf32> to vector<1x64xf32>
    %cst_168 = arith.constant dense<0.000000e+00> : vector<32xf32>
    %403 = vector.multi_reduction <add>, %398, %cst_168 [1] : vector<32x64xf32> to vector<32xf32>
    %404 = vector.shape_cast %403 : vector<32xf32> to vector<32x1xf32>
    %cst_169 = arith.constant 6.400000e+01 : f32
    %405 = vector.broadcast %cst_169 : f32 to vector<32x1xf32>
    %406 = arith.divf %404, %405 : vector<32x1xf32>
    %407 = vector.broadcast %406 : vector<32x1xf32> to vector<32x64xf32>
    %408 = arith.subf %398, %407 : vector<32x64xf32>
    %409 = arith.mulf %408, %408 : vector<32x64xf32>
    %cst_170 = arith.constant dense<0.000000e+00> : vector<32xf32>
    %410 = vector.multi_reduction <add>, %409, %cst_170 [1] : vector<32x64xf32> to vector<32xf32>
    %411 = vector.shape_cast %410 : vector<32xf32> to vector<32x1xf32>
    %cst_171 = arith.constant 6.400000e+01 : f32
    %412 = vector.broadcast %cst_171 : f32 to vector<32x1xf32>
    %413 = arith.divf %411, %412 : vector<32x1xf32>
    %cst_172 = arith.constant 9.99999974E-6 : f32
    %414 = vector.broadcast %cst_172 : f32 to vector<32x1xf32>
    %415 = arith.addf %413, %414 : vector<32x1xf32>
    %416 = math.rsqrt %415 : vector<32x1xf32>
    %417 = vector.broadcast %406 : vector<32x1xf32> to vector<32x64xf32>
    %418 = arith.subf %398, %417 : vector<32x64xf32>
    %419 = vector.broadcast %416 : vector<32x1xf32> to vector<32x64xf32>
    %420 = arith.mulf %418, %419 : vector<32x64xf32>
    %421 = vector.broadcast %400 : vector<1x64xf32> to vector<32x64xf32>
    %422 = arith.mulf %420, %421 : vector<32x64xf32>
    %423 = vector.broadcast %402 : vector<1x64xf32> to vector<32x64xf32>
    %424 = arith.addf %422, %423 : vector<32x64xf32>
    %425 = vector.extract_strided_slice %424 {offsets = [0, 0], sizes = [16, 64], strides = [1, 1]} : vector<32x64xf32> to vector<16x64xf32>
    %cst_173 = arith.constant dense<0.000000e+00> : vector<64xf32>
    %426 = vector.multi_reduction <add>, %425, %cst_173 [0] : vector<16x64xf32> to vector<64xf32>
    %427 = vector.shape_cast %426 : vector<64xf32> to vector<1x64xf32>
    %cst_174 = arith.constant 1.600000e+01 : f32
    %428 = vector.broadcast %cst_174 : f32 to vector<1x64xf32>
    %429 = arith.divf %427, %428 : vector<1x64xf32>
    %430 = vector.extract_strided_slice %424 {offsets = [16, 0], sizes = [16, 64], strides = [1, 1]} : vector<32x64xf32> to vector<16x64xf32>
    %cst_175 = arith.constant dense<0.000000e+00> : vector<64xf32>
    %431 = vector.multi_reduction <add>, %430, %cst_175 [0] : vector<16x64xf32> to vector<64xf32>
    %432 = vector.shape_cast %431 : vector<64xf32> to vector<1x64xf32>
    %cst_176 = arith.constant 1.600000e+01 : f32
    %433 = vector.broadcast %cst_176 : f32 to vector<1x64xf32>
    %434 = arith.divf %432, %433 : vector<1x64xf32>
    %435 = tpu.concatenate %429, %434 in 0 : vector<1x64xf32>, vector<1x64xf32> -> vector<2x64xf32>
    %c0_177 = arith.constant 0 : index
    %c0_178 = arith.constant 0 : index
    %436 = vector.load %arg13[%c0_177, %c0_178] : memref<64x768xf32, #tpu.memory_space<vmem>>, vector<64x768xf32>
    %cst_179 = arith.constant dense<0.000000e+00> : vector<2x768xf32>
    %437 = tpu.matmul %435, %436, %cst_179 {dimension_numbers = #tpu.dot_dimension_numbers<[1], [0], [0], [1], [0, 0, 1, 1], [], []>} : vector<2x64xf32>, vector<64x768xf32>, vector<2x768xf32> -> vector<2x768xf32>
    %c0_180 = arith.constant 0 : index
    %c0_181 = arith.constant 0 : index
    %438 = vector.load %arg14[%c0_180, %c0_181] : memref<1x768xf32, #tpu.memory_space<vmem>>, vector<1x768xf32>
    %439 = vector.broadcast %438 : vector<1x768xf32> to vector<2x768xf32>
    %440 = arith.addf %437, %439 : vector<2x768xf32>
    %c0_182 = arith.constant 0 : index
    %c0_183 = arith.constant 0 : index
    %441 = vector.load %arg15[%c0_182, %c0_183] : memref<2x768xf32, #tpu.memory_space<vmem>>, vector<2x768xf32>
    tpu.vector_store %arg15[%c0_182, %c0_183], %440 {strides = array<i32>} : memref<2x768xf32, #tpu.memory_space<vmem>>, vector<2x768xf32>,
    return
  }
}

</mosaic_0001>

<llo_original>
// kernel: tpu_custom_call.1
$region0: #{tpu_custom_call.1}
  #allocation0 [shape = 'u32[]', space=smem, size = 0x4, offset = 0x4, fixed_abs, tag = 'smem constant byte address 0x4 - core index']
  #allocation1 [shape = 'u32[144,128]{1,0:T(1,128)}', space=vmem, size = 0x12000, scoped, tag = 'internal scratch']
  %s0 = inlined_call_operand.hbm [shape: f32[32,64], index: 0, kind: input, shape index: {}]
  %s1 = inlined_call_operand.hbm [shape: f32[2,64,192], index: 1, kind: input, shape index: {}]
  %s2 = inlined_call_operand.vmem [shape: f32[2,1,192], index: 2, kind: input, shape index: {}]
  %s3 = inlined_call_operand.hbm [shape: f32[2,64,64], index: 3, kind: input, shape index: {}]
  %s4 = inlined_call_operand.vmem [shape: f32[2,1,64], index: 4, kind: input, shape index: {}]
  %s5 = inlined_call_operand.vmem [shape: f32[2,1,64], index: 5, kind: input, shape index: {}]
  %s6 = inlined_call_operand.vmem [shape: f32[2,1,64], index: 6, kind: input, shape index: {}]
  %s7 = inlined_call_operand.hbm [shape: f32[2,64,128], index: 7, kind: input, shape index: {}]
  %s8 = inlined_call_operand.vmem [shape: f32[2,1,128], index: 8, kind: input, shape index: {}]
  %s9 = inlined_call_operand.vmem [shape: f32[2,128,64], index: 9, kind: input, shape index: {}]
  %s10 = inlined_call_operand.vmem [shape: f32[2,1,64], index: 10, kind: input, shape index: {}]
  %s11 = inlined_call_operand.vmem [shape: f32[2,1,64], index: 11, kind: input, shape index: {}]
  %s12 = inlined_call_operand.hbm [shape: f32[2,1,64], index: 12, kind: input, shape index: {}]
  %s13 = inlined_call_operand.vmem [shape: f32[64,768], index: 13, kind: input, shape index: {}]
  %s14 = inlined_call_operand.vmem [shape: f32[1,768], index: 14, kind: input, shape index: {}]
  %s15 = inlined_call_operand.hbm [shape: f32[2,768], index: 15, kind: output, shape index: {}]
  %s16 = sld [smem:[#allocation0]]
  $region90: #{tpu_custom_call.1} parent=0
    _
  %s18 = ssub.s32 1, %s16
  %s19 = scalar_select 0, %s18, %s16
  $region1: #{tpu_custom_call.1} parent=0
    #allocation2 [shape = 'u8[16384]{0}', space=vmem, size = 0x4000, scoped, tag = 'input window, operand 0, single buffered']
    #allocation3 [shape = 's32[1]{0}', space=sflag, size = 0x4, scoped, tag = 'scoped memory for tpu_custom_call.1']
    #allocation4 [shape = 's32[1]{0}', space=sflag, size = 0x4, scoped, tag = 'scoped memory for tpu_custom_call.1']
    #allocation5 [shape = 'u8[131072]{0}', space=vmem, size = 0x20000, scoped, tag = 'input window, operand 1, single buffered']
    #allocation6 [shape = 's32[1]{0}', space=sflag, size = 0x4, scoped, tag = 'scoped memory for tpu_custom_call.1']
    #allocation7 [shape = 'u8[65536]{0}', space=vmem, size = 0x10000, scoped, tag = 'input window, operand 3, single buffered']
    #allocation8 [shape = 'u8[65536]{0}', space=vmem, size = 0x10000, scoped, tag = 'input window, operand 7, single buffered']
    #allocation9 [shape = 's32[1]{0}', space=sflag, size = 0x4, scoped, tag = 'scoped memory for tpu_custom_call.1']
    #allocation10 [shape = 'u8[1024]{0}', space=vmem, size = 0x400, scoped, tag = 'input window, operand 12, single buffered']
    #allocation11 [shape = 'u8[6144]{0}', space=vmem, size = 0x1800, scoped, tag = 'output window, operand 0, single buffered']
    %20 = vsyncpa [#allocation3], 0
    %21 = vsyncpa [#allocation6], 0
    %22 = vsyncpa [#allocation9], 0
    %23 = vsyncpa [#allocation4], 0
    // Predicated region
    $region2: #{tpu_custom_call.1} parent=1 // pred_check
      _
    $region3: #{tpu_custom_call.1} parent=1 // pred_check_branch
      %25 = sbr.rel (0) target = $region5
    $region4: #{tpu_custom_call.1} parent=1 // pred_region
      %s27 = ssub.s32 512, 512
      %28 = vsyncadd [#allocation3], %s27
      %s29 = sshll.u32 [#allocation2], 4
      %s30 = int_to_ptr.vmem [resolvable:$true] %s29
      %35 = dma.hbm_to_vmem [thread:$0]  %s0, 512, %s30, [#allocation3], 128, 128, 8
    $region5: #{tpu_custom_call.1} parent=1 // pred_fallthru
      _
    // Predicated region
    $region6: #{tpu_custom_call.1} parent=1 // pred_check
      _
    $region7: #{tpu_custom_call.1} parent=1 // pred_check_branch
      %37 = sbr.rel (0) target = $region9
    $region8: #{tpu_custom_call.1} parent=1 // pred_region
      %s39 = ssub.s32 4096, 4096
      %40 = vsyncadd [#allocation6], %s39
      %s41 = sshll.u32 [#allocation5], 4
      %s42 = int_to_ptr.vmem [resolvable:$true] %s41
      %47 = dma.hbm_to_vmem [thread:$0]  %s1, 4096, %s42, [#allocation6], 256, 256, 16
    $region9: #{tpu_custom_call.1} parent=1 // pred_fallthru
      _
    // Predicated region
    $region10: #{tpu_custom_call.1} parent=1 // pred_check
      _
    $region11: #{tpu_custom_call.1} parent=1 // pred_check_branch
      %49 = sbr.rel (0) target = $region13
    $region12: #{tpu_custom_call.1} parent=1 // pred_region
      _
    $region13: #{tpu_custom_call.1} parent=1 // pred_fallthru
      _
    // Predicated region
    $region14: #{tpu_custom_call.1} parent=1 // pred_check
      _
    $region15: #{tpu_custom_call.1} parent=1 // pred_check_branch
      %51 = sbr.rel (0) target = $region17
    $region16: #{tpu_custom_call.1} parent=1 // pred_region
      %s53 = ssub.s32 2048, 2048
      %54 = vsyncadd [#allocation6], %s53
      %s55 = sshll.u32 [#allocation7], 4
      %s56 = int_to_ptr.vmem [resolvable:$true] %s55
      %61 = dma.hbm_to_vmem [thread:$0]  %s3, 2048, %s56, [#allocation6], 128, 128, 8
    $region17: #{tpu_custom_call.1} parent=1 // pred_fallthru
      _
    // Predicated region
    $region18: #{tpu_custom_call.1} parent=1 // pred_check
      _
    $region19: #{tpu_custom_call.1} parent=1 // pred_check_branch
      %63 = sbr.rel (0) target = $region21
    $region20: #{tpu_custom_call.1} parent=1 // pred_region
      _
    $region21: #{tpu_custom_call.1} parent=1 // pred_fallthru
      _
    // Predicated region
    $region22: #{tpu_custom_call.1} parent=1 // pred_check
      _
    $region23: #{tpu_custom_call.1} parent=1 // pred_check_branch
      %65 = sbr.rel (0) target = $region25
    $region24: #{tpu_custom_call.1} parent=1 // pred_region
      _
    $region25: #{tpu_custom_call.1} parent=1 // pred_fallthru
      _
    // Predicated region
    $region26: #{tpu_custom_call.1} parent=1 // pred_check
      _
    $region27: #{tpu_custom_call.1} parent=1 // pred_check_branch
      %67 = sbr.rel (0) target = $region29
    $region28: #{tpu_custom_call.1} parent=1 // pred_region
      _
    $region29: #{tpu_custom_call.1} parent=1 // pred_fallthru
      _
    // Predicated region
    $region30: #{tpu_custom_call.1} parent=1 // pred_check
      _
    $region31: #{tpu_custom_call.1} parent=1 // pred_check_branch
      %69 = sbr.rel (0) target = $region33
    $region32: #{tpu_custom_call.1} parent=1 // pred_region
      %s71 = ssub.s32 2048, 2048
      %72 = vsyncadd [#allocation9], %s71
      %s73 = sshll.u32 [#allocation8], 4
      %s74 = int_to_ptr.vmem [resolvable:$true] %s73
      %79 = dma.hbm_to_vmem [thread:$0]  %s7, 2048, %s74, [#allocation9], 128, 128, 8
    $region33: #{tpu_custom_call.1} parent=1 // pred_fallthru
      _
    // Predicated region
    $region34: #{tpu_custom_call.1} parent=1 // pred_check
      _
    $region35: #{tpu_custom_call.1} parent=1 // pred_check_branch
      %81 = sbr.rel (0) target = $region37
    $region36: #{tpu_custom_call.1} parent=1 // pred_region
      _
    $region37: #{tpu_custom_call.1} parent=1 // pred_fallthru
      _
    // Predicated region
    $region38: #{tpu_custom_call.1} parent=1 // pred_check
      _
    $region39: #{tpu_custom_call.1} parent=1 // pred_check_branch
      %83 = sbr.rel (0) target = $region41
    $region40: #{tpu_custom_call.1} parent=1 // pred_region
      _
    $region41: #{tpu_custom_call.1} parent=1 // pred_fallthru
      _
    // Predicated region
    $region42: #{tpu_custom_call.1} parent=1 // pred_check
      _
    $region43: #{tpu_custom_call.1} parent=1 // pred_check_branch
      %85 = sbr.rel (0) target = $region45
    $region44: #{tpu_custom_call.1} parent=1 // pred_region
      _
    $region45: #{tpu_custom_call.1} parent=1 // pred_fallthru
      _
    // Predicated region
    $region46: #{tpu_custom_call.1} parent=1 // pred_check
      _
    $region47: #{tpu_custom_call.1} parent=1 // pred_check_branch
      %87 = sbr.rel (0) target = $region49
    $region48: #{tpu_custom_call.1} parent=1 // pred_region
      _
    $region49: #{tpu_custom_call.1} parent=1 // pred_fallthru
      _
    // Predicated region
    $region50: #{tpu_custom_call.1} parent=1 // pred_check
      _
    $region51: #{tpu_custom_call.1} parent=1 // pred_check_branch
      %89 = sbr.rel (0) target = $region53
    $region52: #{tpu_custom_call.1} parent=1 // pred_region
      %s91 = ssub.s32 32, 32
      %92 = vsyncadd [#allocation9], %s91
      %s93 = sshll.u32 [#allocation10], 4
      %s94 = int_to_ptr.vmem [resolvable:$true] %s93
      %99 = dma.hbm_to_vmem [thread:$0]  %s12, 32, %s94, [#allocation9], 16, 16, 1
    $region53: #{tpu_custom_call.1} parent=1 // pred_fallthru
      _
    // Predicated region
    $region54: #{tpu_custom_call.1} parent=1 // pred_check
      _
    $region55: #{tpu_custom_call.1} parent=1 // pred_check_branch
      %101 = sbr.rel (0) target = $region57
    $region56: #{tpu_custom_call.1} parent=1 // pred_region
      _
    $region57: #{tpu_custom_call.1} parent=1 // pred_fallthru
      _
    // Predicated region
    $region58: #{tpu_custom_call.1} parent=1 // pred_check
      _
    $region59: #{tpu_custom_call.1} parent=1 // pred_check_branch
      %103 = sbr.rel (0) target = $region61
    $region60: #{tpu_custom_call.1} parent=1 // pred_region
      _
    $region61: #{tpu_custom_call.1} parent=1 // pred_fallthru
      _
    // Predicated region
    $region62: #{tpu_custom_call.1} parent=1 // pred_check
      _
    $region63: #{tpu_custom_call.1} parent=1 // pred_check_branch
      %105 = sbr.rel (0) target = $region65
    $region64: #{tpu_custom_call.1} parent=1 // pred_region
      %106 = dma.done [#allocation3], 512
    $region65: #{tpu_custom_call.1} parent=1 // pred_fallthru
      _
    // Predicated region
    $region66: #{tpu_custom_call.1} parent=1 // pred_check
      _
    $region67: #{tpu_custom_call.1} parent=1 // pred_check_branch
      %108 = sbr.rel (0) target = $region69
    $region68: #{tpu_custom_call.1} parent=1 // pred_region
      %109 = dma.done [#allocation6], 4096
    $region69: #{tpu_custom_call.1} parent=1 // pred_fallthru
      _
    // Predicated region
    $region70: #{tpu_custom_call.1} parent=1 // pred_check
      _
    $region71: #{tpu_custom_call.1} parent=1 // pred_check_branch
      %111 = sbr.rel (0) target = $region73
    $region72: #{tpu_custom_call.1} parent=1 // pred_region
      %112 = dma.done [#allocation6], 2048
    $region73: #{tpu_custom_call.1} parent=1 // pred_fallthru
      _
    // Predicated region
    $region74: #{tpu_custom_call.1} parent=1 // pred_check
      _
    $region75: #{tpu_custom_call.1} parent=1 // pred_check_branch
      %114 = sbr.rel (0) target = $region77
    $region76: #{tpu_custom_call.1} parent=1 // pred_region
      %115 = dma.done [#allocation9], 2048
    $region77: #{tpu_custom_call.1} parent=1 // pred_fallthru
      _
    // Predicated region
    $region78: #{tpu_custom_call.1} parent=1 // pred_check
      _
    $region79: #{tpu_custom_call.1} parent=1 // pred_check_branch
      %117 = sbr.rel (0) target = $region81
    $region80: #{tpu_custom_call.1} parent=1 // pred_region
      %118 = dma.done [#allocation9], 32
    $region81: #{tpu_custom_call.1} parent=1 // pred_fallthru
      _
    %v119 = vld [vmem:[#allocation2] sm:$0xff]
    %v120 = vld [vmem:[#allocation2 + $0x8] sm:$0xff]
    %v121 = vld [vmem:[#allocation2 + $0x10] sm:$0xff]
    %v122 = vld [vmem:[#allocation2 + $0x18] sm:$0xff]
    %v123 = vld [vmem:[#allocation5] sm:$0xff]
    %v124 = vld [vmem:[#allocation5 + $0x8] sm:$0xff]
    %v125 = vld [vmem:[#allocation5 + $0x10] sm:$0xff]
    %v126 = vld [vmem:[#allocation5 + $0x18] sm:$0xff]
    %v127 = vld [vmem:[#allocation5 + $0x20] sm:$0xff]
    %v128 = vld [vmem:[#allocation5 + $0x28] sm:$0xff]
    %v129 = vld [vmem:[#allocation5 + $0x30] sm:$0xff]
    %v130 = vld [vmem:[#allocation5 + $0x38] sm:$0xff]
    %v131 = vld [vmem:[#allocation5 + $0x40] sm:$0xff]
    %v132 = vld [vmem:[#allocation5 + $0x48] sm:$0xff]
    %v133 = vld [vmem:[#allocation5 + $0x50] sm:$0xff]
    %v134 = vld [vmem:[#allocation5 + $0x58] sm:$0xff]
    %v135 = vld [vmem:[#allocation5 + $0x60] sm:$0xff]
    %v136 = vld [vmem:[#allocation5 + $0x68] sm:$0xff]
    %v137 = vld [vmem:[#allocation5 + $0x70] sm:$0xff]
    %v138 = vld [vmem:[#allocation5 + $0x78] sm:$0xff]
    %v139 = vld [vmem:[%s2] sm:$0x3]
    %v141 = vlaneseq
    %v142 = vshrl.u32 %v141, 7
    %v143 = vsub.s32 0, %v142
    %v144 = vrot.slane %v139, %v143
    %v145 = vlaneseq
    %v146 = vshrl.u32 %v145, 7
    %v147 = vsub.s32 1, %v146
    %v148 = vrot.slane %v139, %v147
    %vm151 = vcmask 523264
    %v153 = vsel %vm151, %v119, 0
    %v156 = vsel %vm151, %v120, 0
    %v159 = vsel %vm151, %v121, 0
    %v162 = vsel %vm151, %v122, 0
    %164 = vmatprep.subr.mxu0 0.0
    %165 = vmatpush1.msra.mxu0 0.0
    %166 = vmatprep.subr.mxu0 0.0
    %167 = vmatpush1.msra.mxu0 0.0
    %168 = vmatprep.subr.mxu0 0.0
    %169 = vmatpush1.msra.mxu0 0.0
    %170 = vmatprep.subr.mxu0 0.0
    %171 = vmatpush1.msra.mxu0 0.0
    %172 = vmatprep.subr.mxu0 0.0
    %173 = vmatpush1.msra.mxu0 0.0
    %174 = vmatprep.subr.mxu0 0.0
    %175 = vmatpush1.msra.mxu0 0.0
    %176 = vmatprep.subr.mxu0 0.0
    %177 = vmatpush1.msra.mxu0 0.0
    %178 = vmatprep.subr.mxu0 0.0
    %179 = vmatpush1.msra.mxu0 0.0
    %180 = vmatprep.subr.mxu0 %v138
    %181 = vmatpush1.msra.mxu0 %v137
    %182 = vmatprep.subr.mxu0 %v136
    %183 = vmatpush1.msra.mxu0 %v135
    %184 = vmatprep.subr.mxu0 %v134
    %185 = vmatpush1.msra.mxu0 %v133
    %186 = vmatprep.subr.mxu0 %v132
    %187 = vmatpush1.msra.mxu0 %v131
    %188 = vmatprep.subr.mxu0 %v130
    %189 = vmatpush1.msra.mxu0 %v129
    %190 = vmatprep.subr.mxu0 %v128
    %191 = vmatpush1.msra.mxu0 %v127
    %192 = vmatprep.subr.mxu0 %v126
    %193 = vmatpush1.msra.mxu0 %v125
    %194 = vmatprep.subr.mxu0 %v124
    %195 = vmatpush1.msra.mxu0 %v123
    %196 = vmatprep.subr.mxu0 0.0
    %197 = vmatpush2.msra.mxu0 0.0
    %198 = vmatprep.subr.mxu0 0.0
    %199 = vmatpush2.msra.mxu0 0.0
    %200 = vmatprep.subr.mxu0 0.0
    %201 = vmatpush2.msra.mxu0 0.0
    %202 = vmatprep.subr.mxu0 0.0
    %203 = vmatpush2.msra.mxu0 0.0
    %204 = vmatprep.subr.mxu0 0.0
    %205 = vmatpush2.msra.mxu0 0.0
    %206 = vmatprep.subr.mxu0 0.0
    %207 = vmatpush2.msra.mxu0 0.0
    %208 = vmatprep.subr.mxu0 0.0
    %209 = vmatpush2.msra.mxu0 0.0
    %210 = vmatprep.subr.mxu0 0.0
    %211 = vmatpush2.msra.mxu0 0.0
    %212 = vmatprep.subr.mxu0 0.0
    %213 = vmatpush2.msra.mxu0 0.0
    %214 = vmatprep.subr.mxu0 0.0
    %215 = vmatpush2.msra.mxu0 0.0
    %216 = vmatprep.subr.mxu0 0.0
    %217 = vmatpush2.msra.mxu0 0.0
    %218 = vmatprep.subr.mxu0 0.0
    %219 = vmatpush2.msra.mxu0 0.0
    %220 = vmatprep.subr.mxu0 0.0
    %221 = vmatpush2.msra.mxu0 0.0
    %222 = vmatprep.subr.mxu0 0.0
    %223 = vmatpush2.msra.mxu0 0.0
    %224 = vmatprep.subr.mxu0 0.0
    %225 = vmatpush2.msra.mxu0 0.0
    %226 = vmatprep.subr.mxu0 0.0
    %227 = vmatpush2.msra.mxu0 0.0
    %228 = vmatprep.mubr.f32.mxu0 0.0
    %229 = vmatmul.mubr.f32.gmra.mxu0 %v153
    %v230 = vpop.f32.mrf.mxu0
    %v231 = vadd.f32 %v144, %v230
    %v232 = vpop.f32.mrf.mxu0
    %v233 = vadd.f32 %v148, %v232
    %234 = vmatprep.mubr.f32.mxu0 0.0
    %235 = vmatmul.mubr.f32.gmra.mxu0 %v156
    %v236 = vpop.f32.mrf.mxu0
    %v237 = vadd.f32 %v144, %v236
    %v238 = vpop.f32.mrf.mxu0
    %v239 = vadd.f32 %v148, %v238
    %240 = vmatprep.mubr.f32.mxu0 0.0
    %241 = vmatmul.mubr.f32.gmra.mxu0 %v159
    %v242 = vpop.f32.mrf.mxu0
    %v243 = vadd.f32 %v144, %v242
    %v244 = vpop.f32.mrf.mxu0
    %v245 = vadd.f32 %v148, %v244
    %246 = vmatprep.mubr.f32.mxu0 0.0
    %247 = vmatmul.mubr.f32.gmra.mxu0 %v162
    %v248 = vpop.f32.mrf.mxu0
    %v249 = vadd.f32 %v144, %v248
    %v250 = vpop.f32.mrf.mxu0
    %v251 = vadd.f32 %v148, %v250
    %252 = vdwg.mxu0
    %255 = vrot.lane.b32.xlu0 %v231, 64
    %v256 = vpop.permute.xlu0 %255
    %257 = vrot.lane.b32.xlu0 %v237, 64
    %v258 = vpop.permute.xlu0 %257
    %vm259 = vcmask 130048
    %v260 = vsel %vm259, %v231, 0
    %v262 = vsel %vm259, %v237, 0
    %v264 = vsel %vm259, %v256, 0
    %v266 = vsel %vm259, %v258, 0
    %268 = vmatprep.subr.mxu0 0.0
    %269 = vmatpush1.xpose.msra.mxu0 0.0
    %270 = vmatprep.subr.mxu0 0.0
    %271 = vmatpush1.xpose.msra.mxu0 0.0
    %272 = vmatprep.subr.mxu0 0.0
    %273 = vmatpush1.xpose.msra.mxu0 0.0
    %274 = vmatprep.subr.mxu0 0.0
    %275 = vmatpush1.xpose.msra.mxu0 0.0
    %276 = vmatprep.subr.mxu0 0.0
    %277 = vmatpush1.xpose.msra.mxu0 0.0
    %278 = vmatprep.subr.mxu0 0.0
    %279 = vmatpush1.xpose.msra.mxu0 0.0
    %280 = vmatprep.subr.mxu0 0.0
    %281 = vmatpush1.xpose.msra.mxu0 0.0
    %282 = vmatprep.subr.mxu0 0.0
    %283 = vmatpush1.xpose.msra.mxu0 0.0
    %284 = vmatprep.subr.mxu0 0.0
    %285 = vmatpush1.xpose.msra.mxu0 0.0
    %286 = vmatprep.subr.mxu0 0.0
    %287 = vmatpush1.xpose.msra.mxu0 0.0
    %288 = vmatprep.subr.mxu0 0.0
    %289 = vmatpush1.xpose.msra.mxu0 0.0
    %290 = vmatprep.subr.mxu0 0.0
    %291 = vmatpush1.xpose.msra.mxu0 0.0
    %292 = vmatprep.subr.mxu0 0.0
    %293 = vmatpush1.xpose.msra.mxu0 0.0
    %294 = vmatprep.subr.mxu0 0.0
    %295 = vmatpush1.xpose.msra.mxu0 0.0
    %296 = vmatprep.subr.mxu0 0.0
    %297 = vmatpush1.xpose.msra.mxu0 %v266
    %298 = vmatprep.subr.mxu0 0.0
    %299 = vmatpush1.xpose.msra.mxu0 %v264
    %300 = vmatprep.subr.mxu0 0.0
    %301 = vmatpush2.xpose.msra.mxu0 0.0
    %302 = vmatprep.subr.mxu0 0.0
    %303 = vmatpush2.xpose.msra.mxu0 0.0
    %304 = vmatprep.subr.mxu0 0.0
    %305 = vmatpush2.xpose.msra.mxu0 0.0
    %306 = vmatprep.subr.mxu0 0.0
    %307 = vmatpush2.xpose.msra.mxu0 0.0
    %308 = vmatprep.subr.mxu0 0.0
    %309 = vmatpush2.xpose.msra.mxu0 0.0
    %310 = vmatprep.subr.mxu0 0.0
    %311 = vmatpush2.xpose.msra.mxu0 0.0
    %312 = vmatprep.subr.mxu0 0.0
    %313 = vmatpush2.xpose.msra.mxu0 0.0
    %314 = vmatprep.subr.mxu0 0.0
    %315 = vmatpush2.xpose.msra.mxu0 0.0
    %316 = vmatprep.subr.mxu0 0.0
    %317 = vmatpush2.xpose.msra.mxu0 0.0
    %318 = vmatprep.subr.mxu0 0.0
    %319 = vmatpush2.xpose.msra.mxu0 0.0
    %320 = vmatprep.subr.mxu0 0.0
    %321 = vmatpush2.xpose.msra.mxu0 0.0
    %322 = vmatprep.subr.mxu0 0.0
    %323 = vmatpush2.xpose.msra.mxu0 0.0
    %324 = vmatprep.subr.mxu0 0.0
    %325 = vmatpush2.xpose.msra.mxu0 0.0
    %326 = vmatprep.subr.mxu0 0.0
    %327 = vmatpush2.xpose.msra.mxu0 0.0
    %328 = vmatprep.subr.mxu0 0.0
    %329 = vmatpush2.xpose.msra.mxu0 0.0
    %330 = vmatprep.subr.mxu0 0.0
    %331 = vmatpush2.xpose.msra.mxu0 0.0
    %332 = vmatprep.mubr.f32.mxu0 0.0
    %333 = vmatmul.mubr.f32.gmra.mxu0 %v260
    %v334 = vpop.f32.mrf.mxu0
    %v335 = vadd.f32 0.0, %v334
    %v336 = vpop.f32.mrf.mxu0
    %337 = vmatprep.mubr.f32.mxu0 0.0
    %338 = vmatmul.mubr.f32.gmra.mxu0 %v262
    %v339 = vpop.f32.mrf.mxu0
    %v340 = vadd.f32 0.0, %v339
    %v341 = vpop.f32.mrf.mxu0
    %342 = vdwg.mxu0
    %v343 = vsel %vm259, %v335, -inf
    %344 = vmax.xlane.f32.xlu0 %v343
    %v345 = vpop.xlane.xlu0 %344
    %v346 = vsel %vm259, %v340, -inf
    %347 = vmax.xlane.f32.xlu0 %v346
    %v348 = vpop.xlane.xlu0 %347
    %v349 = vsub.f32 %v335, %v345
    %v350 = vsub.f32 %v340, %v348
    %v351 = vmul.f32 %v349, 1.442695
    %v352 = vpow.pop %v351
    %v353 = vmul.f32 %v350, 1.442695
    %v354 = vpow.pop %v353
    %v355 = vsel %vm259, %v352, 0.0
    %356 = vadd.xlane.f32.xlu0 %v355
    %v357 = vpop.xlane.xlu0 %356
    %v358 = vsel %vm259, %v354, 0.0
    %359 = vadd.xlane.f32.xlu0 %v358
    %v360 = vpop.xlane.xlu0 %359
    %v361 = vrcp.pop %v357
    %v362 = vrcp.pop %v360
    %v363 = vmul.f32 %v352, %v361
    %v364 = vmul.f32 %v354, %v362
    %v366 = vsel %vm259, %v363, 0
    %v369 = vsel %vm259, %v364, 0
    %371 = vmatprep.subr.mxu0 0.0
    %372 = vmatpush1.msra.mxu0 0.0
    %373 = vmatprep.subr.mxu0 0.0
    %374 = vmatpush1.msra.mxu0 0.0
    %375 = vmatprep.subr.mxu0 0.0
    %376 = vmatpush1.msra.mxu0 0.0
    %377 = vmatprep.subr.mxu0 0.0
    %378 = vmatpush1.msra.mxu0 0.0
    %379 = vmatprep.subr.mxu0 0.0
    %380 = vmatpush1.msra.mxu0 0.0
    %381 = vmatprep.subr.mxu0 0.0
    %382 = vmatpush1.msra.mxu0 0.0
    %383 = vmatprep.subr.mxu0 0.0
    %384 = vmatpush1.msra.mxu0 0.0
    %385 = vmatprep.subr.mxu0 0.0
    %386 = vmatpush1.msra.mxu0 0.0
    %387 = vmatprep.subr.mxu0 0.0
    %388 = vmatpush1.msra.mxu0 0.0
    %389 = vmatprep.subr.mxu0 0.0
    %390 = vmatpush1.msra.mxu0 0.0
    %391 = vmatprep.subr.mxu0 0.0
    %392 = vmatpush1.msra.mxu0 0.0
    %393 = vmatprep.subr.mxu0 0.0
    %394 = vmatpush1.msra.mxu0 0.0
    %395 = vmatprep.subr.mxu0 0.0
    %396 = vmatpush1.msra.mxu0 0.0
    %397 = vmatprep.subr.mxu0 0.0
    %398 = vmatpush1.msra.mxu0 0.0
    %399 = vmatprep.subr.mxu0 0.0
    %400 = vmatpush1.msra.mxu0 %v239
    %401 = vmatprep.subr.mxu0 0.0
    %402 = vmatpush1.msra.mxu0 %v233
    %403 = vmatprep.subr.mxu0 0.0
    %404 = vmatpush2.msra.mxu0 0.0
    %405 = vmatprep.subr.mxu0 0.0
    %406 = vmatpush2.msra.mxu0 0.0
    %407 = vmatprep.subr.mxu0 0.0
    %408 = vmatpush2.msra.mxu0 0.0
    %409 = vmatprep.subr.mxu0 0.0
    %410 = vmatpush2.msra.mxu0 0.0
    %411 = vmatprep.subr.mxu0 0.0
    %412 = vmatpush2.msra.mxu0 0.0
    %413 = vmatprep.subr.mxu0 0.0
    %414 = vmatpush2.msra.mxu0 0.0
    %415 = vmatprep.subr.mxu0 0.0
    %416 = vmatpush2.msra.mxu0 0.0
    %417 = vmatprep.subr.mxu0 0.0
    %418 = vmatpush2.msra.mxu0 0.0
    %419 = vmatprep.subr.mxu0 0.0
    %420 = vmatpush2.msra.mxu0 0.0
    %421 = vmatprep.subr.mxu0 0.0
    %422 = vmatpush2.msra.mxu0 0.0
    %423 = vmatprep.subr.mxu0 0.0
    %424 = vmatpush2.msra.mxu0 0.0
    %425 = vmatprep.subr.mxu0 0.0
    %426 = vmatpush2.msra.mxu0 0.0
    %427 = vmatprep.subr.mxu0 0.0
    %428 = vmatpush2.msra.mxu0 0.0
    %429 = vmatprep.subr.mxu0 0.0
    %430 = vmatpush2.msra.mxu0 0.0
    %431 = vmatprep.subr.mxu0 0.0
    %432 = vmatpush2.msra.mxu0 0.0
    %433 = vmatprep.subr.mxu0 0.0
    %434 = vmatpush2.msra.mxu0 0.0
    %435 = vmatprep.mubr.f32.mxu0 0.0
    %436 = vmatmul.mubr.f32.gmra.mxu0 %v366
    %v437 = vpop.f32.mrf.mxu0
    %v438 = vadd.f32 0.0, %v437
    %v439 = vpop.f32.mrf.mxu0
    %440 = vmatprep.mubr.f32.mxu0 0.0
    %441 = vmatmul.mubr.f32.gmra.mxu0 %v369
    %v442 = vpop.f32.mrf.mxu0
    %v443 = vadd.f32 0.0, %v442
    %v444 = vpop.f32.mrf.mxu0
    %445 = vdwg.mxu0
    %446 = vrot.lane.b32.xlu0 %v231, 112
    %v447 = vpop.permute.xlu0 %446
    %448 = vrot.lane.b32.xlu0 %v237, 112
    %v449 = vpop.permute.xlu0 %448
    %450 = vrot.lane.b32.xlu0 %v231, 48
    %v451 = vpop.permute.xlu0 %450
    %452 = vrot.lane.b32.xlu0 %v237, 48
    %v453 = vpop.permute.xlu0 %452
    %v454 = vsel %vm259, %v447, 0
    %v456 = vsel %vm259, %v449, 0
    %v458 = vsel %vm259, %v451, 0
    %v460 = vsel %vm259, %v453, 0
    %462 = vmatprep.subr.mxu0 0.0
    %463 = vmatpush1.xpose.msra.mxu0 0.0
    %464 = vmatprep.subr.mxu0 0.0
    %465 = vmatpush1.xpose.msra.mxu0 0.0
    %466 = vmatprep.subr.mxu0 0.0
    %467 = vmatpush1.xpose.msra.mxu0 0.0
    %468 = vmatprep.subr.mxu0 0.0
    %469 = vmatpush1.xpose.msra.mxu0 0.0
    %470 = vmatprep.subr.mxu0 0.0
    %471 = vmatpush1.xpose.msra.mxu0 0.0
    %472 = vmatprep.subr.mxu0 0.0
    %473 = vmatpush1.xpose.msra.mxu0 0.0
    %474 = vmatprep.subr.mxu0 0.0
    %475 = vmatpush1.xpose.msra.mxu0 0.0
    %476 = vmatprep.subr.mxu0 0.0
    %477 = vmatpush1.xpose.msra.mxu0 0.0
    %478 = vmatprep.subr.mxu0 0.0
    %479 = vmatpush1.xpose.msra.mxu0 0.0
    %480 = vmatprep.subr.mxu0 0.0
    %481 = vmatpush1.xpose.msra.mxu0 0.0
    %482 = vmatprep.subr.mxu0 0.0
    %483 = vmatpush1.xpose.msra.mxu0 0.0
    %484 = vmatprep.subr.mxu0 0.0
    %485 = vmatpush1.xpose.msra.mxu0 0.0
    %486 = vmatprep.subr.mxu0 0.0
    %487 = vmatpush1.xpose.msra.mxu0 0.0
    %488 = vmatprep.subr.mxu0 0.0
    %489 = vmatpush1.xpose.msra.mxu0 0.0
    %490 = vmatprep.subr.mxu0 0.0
    %491 = vmatpush1.xpose.msra.mxu0 %v460
    %492 = vmatprep.subr.mxu0 0.0
    %493 = vmatpush1.xpose.msra.mxu0 %v458
    %494 = vmatprep.subr.mxu0 0.0
    %495 = vmatpush2.xpose.msra.mxu0 0.0
    %496 = vmatprep.subr.mxu0 0.0
    %497 = vmatpush2.xpose.msra.mxu0 0.0
    %498 = vmatprep.subr.mxu0 0.0
    %499 = vmatpush2.xpose.msra.mxu0 0.0
    %500 = vmatprep.subr.mxu0 0.0
    %501 = vmatpush2.xpose.msra.mxu0 0.0
    %502 = vmatprep.subr.mxu0 0.0
    %503 = vmatpush2.xpose.msra.mxu0 0.0
    %504 = vmatprep.subr.mxu0 0.0
    %505 = vmatpush2.xpose.msra.mxu0 0.0
    %506 = vmatprep.subr.mxu0 0.0
    %507 = vmatpush2.xpose.msra.mxu0 0.0
    %508 = vmatprep.subr.mxu0 0.0
    %509 = vmatpush2.xpose.msra.mxu0 0.0
    %510 = vmatprep.subr.mxu0 0.0
    %511 = vmatpush2.xpose.msra.mxu0 0.0
    %512 = vmatprep.subr.mxu0 0.0
    %513 = vmatpush2.xpose.msra.mxu0 0.0
    %514 = vmatprep.subr.mxu0 0.0
    %515 = vmatpush2.xpose.msra.mxu0 0.0
    %516 = vmatprep.subr.mxu0 0.0
    %517 = vmatpush2.xpose.msra.mxu0 0.0
    %518 = vmatprep.subr.mxu0 0.0
    %519 = vmatpush2.xpose.msra.mxu0 0.0
    %520 = vmatprep.subr.mxu0 0.0
    %521 = vmatpush2.xpose.msra.mxu0 0.0
    %522 = vmatprep.subr.mxu0 0.0
    %523 = vmatpush2.xpose.msra.mxu0 0.0
    %524 = vmatprep.subr.mxu0 0.0
    %525 = vmatpush2.xpose.msra.mxu0 0.0
    %526 = vmatprep.mubr.f32.mxu0 0.0
    %527 = vmatmul.mubr.f32.gmra.mxu0 %v454
    %v528 = vpop.f32.mrf.mxu0
    %v529 = vadd.f32 0.0, %v528
    %v530 = vpop.f32.mrf.mxu0
    %531 = vmatprep.mubr.f32.mxu0 0.0
    %532 = vmatmul.mubr.f32.gmra.mxu0 %v456
    %v533 = vpop.f32.mrf.mxu0
    %v534 = vadd.f32 0.0, %v533
    %v535 = vpop.f32.mrf.mxu0
    %536 = vdwg.mxu0
    %v537 = vsel %vm259, %v529, -inf
    %538 = vmax.xlane.f32.xlu0 %v537
    %v539 = vpop.xlane.xlu0 %538
    %v540 = vsel %vm259, %v534, -inf
    %541 = vmax.xlane.f32.xlu0 %v540
    %v542 = vpop.xlane.xlu0 %541
    %v543 = vsub.f32 %v529, %v539
    %v544 = vsub.f32 %v534, %v542
    %v545 = vmul.f32 %v543, 1.442695
    %v546 = vpow.pop %v545
    %v547 = vmul.f32 %v544, 1.442695
    %v548 = vpow.pop %v547
    %v549 = vsel %vm259, %v546, 0.0
    %550 = vadd.xlane.f32.xlu0 %v549
    %v551 = vpop.xlane.xlu0 %550
    %v552 = vsel %vm259, %v548, 0.0
    %553 = vadd.xlane.f32.xlu0 %v552
    %v554 = vpop.xlane.xlu0 %553
    %v555 = vrcp.pop %v551
    %v556 = vrcp.pop %v554
    %v557 = vmul.f32 %v546, %v555
    %v558 = vmul.f32 %v548, %v556
    %561 = vrot.lane.b32.xlu0 %v233, 112
    %v562 = vpop.permute.xlu0 %561
    %563 = vrot.lane.b32.xlu0 %v239, 112
    %v564 = vpop.permute.xlu0 %563
    %v568 = vsel %vm259, %v557, 0
    %v571 = vsel %vm259, %v558, 0
    %573 = vmatprep.subr.mxu0 0.0
    %574 = vmatpush1.msra.mxu0 0.0
    %575 = vmatprep.subr.mxu0 0.0
    %576 = vmatpush1.msra.mxu0 0.0
    %577 = vmatprep.subr.mxu0 0.0
    %578 = vmatpush1.msra.mxu0 0.0
    %579 = vmatprep.subr.mxu0 0.0
    %580 = vmatpush1.msra.mxu0 0.0
    %581 = vmatprep.subr.mxu0 0.0
    %582 = vmatpush1.msra.mxu0 0.0
    %583 = vmatprep.subr.mxu0 0.0
    %584 = vmatpush1.msra.mxu0 0.0
    %585 = vmatprep.subr.mxu0 0.0
    %586 = vmatpush1.msra.mxu0 0.0
    %587 = vmatprep.subr.mxu0 0.0
    %588 = vmatpush1.msra.mxu0 0.0
    %589 = vmatprep.subr.mxu0 0.0
    %590 = vmatpush1.msra.mxu0 0.0
    %591 = vmatprep.subr.mxu0 0.0
    %592 = vmatpush1.msra.mxu0 0.0
    %593 = vmatprep.subr.mxu0 0.0
    %594 = vmatpush1.msra.mxu0 0.0
    %595 = vmatprep.subr.mxu0 0.0
    %596 = vmatpush1.msra.mxu0 0.0
    %597 = vmatprep.subr.mxu0 0.0
    %598 = vmatpush1.msra.mxu0 0.0
    %599 = vmatprep.subr.mxu0 0.0
    %600 = vmatpush1.msra.mxu0 0.0
    %601 = vmatprep.subr.mxu0 0.0
    %602 = vmatpush1.msra.mxu0 %v564
    %603 = vmatprep.subr.mxu0 0.0
    %604 = vmatpush1.msra.mxu0 %v562
    %605 = vmatprep.subr.mxu0 0.0
    %606 = vmatpush2.msra.mxu0 0.0
    %607 = vmatprep.subr.mxu0 0.0
    %608 = vmatpush2.msra.mxu0 0.0
    %609 = vmatprep.subr.mxu0 0.0
    %610 = vmatpush2.msra.mxu0 0.0
    %611 = vmatprep.subr.mxu0 0.0
    %612 = vmatpush2.msra.mxu0 0.0
    %613 = vmatprep.subr.mxu0 0.0
    %614 = vmatpush2.msra.mxu0 0.0
    %615 = vmatprep.subr.mxu0 0.0
    %616 = vmatpush2.msra.mxu0 0.0
    %617 = vmatprep.subr.mxu0 0.0
    %618 = vmatpush2.msra.mxu0 0.0
    %619 = vmatprep.subr.mxu0 0.0
    %620 = vmatpush2.msra.mxu0 0.0
    %621 = vmatprep.subr.mxu0 0.0
    %622 = vmatpush2.msra.mxu0 0.0
    %623 = vmatprep.subr.mxu0 0.0
    %624 = vmatpush2.msra.mxu0 0.0
    %625 = vmatprep.subr.mxu0 0.0
    %626 = vmatpush2.msra.mxu0 0.0
    %627 = vmatprep.subr.mxu0 0.0
    %628 = vmatpush2.msra.mxu0 0.0
    %629 = vmatprep.subr.mxu0 0.0
    %630 = vmatpush2.msra.mxu0 0.0
    %631 = vmatprep.subr.mxu0 0.0
    %632 = vmatpush2.msra.mxu0 0.0
    %633 = vmatprep.subr.mxu0 0.0
    %634 = vmatpush2.msra.mxu0 0.0
    %635 = vmatprep.subr.mxu0 0.0
    %636 = vmatpush2.msra.mxu0 0.0
    %637 = vmatprep.mubr.f32.mxu0 0.0
    %638 = vmatmul.mubr.f32.gmra.mxu0 %v568
    %v639 = vpop.f32.mrf.mxu0
    %v640 = vadd.f32 0.0, %v639
    %v641 = vpop.f32.mrf.mxu0
    %642 = vmatprep.mubr.f32.mxu0 0.0
    %643 = vmatmul.mubr.f32.gmra.mxu0 %v571
    %v644 = vpop.f32.mrf.mxu0
    %v645 = vadd.f32 0.0, %v644
    %v646 = vpop.f32.mrf.mxu0
    %647 = vdwg.mxu0
    %648 = vrot.lane.b32.xlu0 %v231, 96
    %v649 = vpop.permute.xlu0 %648
    %650 = vrot.lane.b32.xlu0 %v237, 96
    %v651 = vpop.permute.xlu0 %650
    %652 = vrot.lane.b32.xlu0 %v231, 32
    %v653 = vpop.permute.xlu0 %652
    %654 = vrot.lane.b32.xlu0 %v237, 32
    %v655 = vpop.permute.xlu0 %654
    %v656 = vsel %vm259, %v649, 0
    %v658 = vsel %vm259, %v651, 0
    %v660 = vsel %vm259, %v653, 0
    %v662 = vsel %vm259, %v655, 0
    %664 = vmatprep.subr.mxu0 0.0
    %665 = vmatpush1.xpose.msra.mxu0 0.0
    %666 = vmatprep.subr.mxu0 0.0
    %667 = vmatpush1.xpose.msra.mxu0 0.0
    %668 = vmatprep.subr.mxu0 0.0
    %669 = vmatpush1.xpose.msra.mxu0 0.0
    %670 = vmatprep.subr.mxu0 0.0
    %671 = vmatpush1.xpose.msra.mxu0 0.0
    %672 = vmatprep.subr.mxu0 0.0
    %673 = vmatpush1.xpose.msra.mxu0 0.0
    %674 = vmatprep.subr.mxu0 0.0
    %675 = vmatpush1.xpose.msra.mxu0 0.0
    %676 = vmatprep.subr.mxu0 0.0
    %677 = vmatpush1.xpose.msra.mxu0 0.0
    %678 = vmatprep.subr.mxu0 0.0
    %679 = vmatpush1.xpose.msra.mxu0 0.0
    %680 = vmatprep.subr.mxu0 0.0
    %681 = vmatpush1.xpose.msra.mxu0 0.0
    %682 = vmatprep.subr.mxu0 0.0
    %683 = vmatpush1.xpose.msra.mxu0 0.0
    %684 = vmatprep.subr.mxu0 0.0
    %685 = vmatpush1.xpose.msra.mxu0 0.0
    %686 = vmatprep.subr.mxu0 0.0
    %687 = vmatpush1.xpose.msra.mxu0 0.0
    %688 = vmatprep.subr.mxu0 0.0
    %689 = vmatpush1.xpose.msra.mxu0 0.0
    %690 = vmatprep.subr.mxu0 0.0
    %691 = vmatpush1.xpose.msra.mxu0 0.0
    %692 = vmatprep.subr.mxu0 0.0
    %693 = vmatpush1.xpose.msra.mxu0 %v662
    %694 = vmatprep.subr.mxu0 0.0
    %695 = vmatpush1.xpose.msra.mxu0 %v660
    %696 = vmatprep.subr.mxu0 0.0
    %697 = vmatpush2.xpose.msra.mxu0 0.0
    %698 = vmatprep.subr.mxu0 0.0
    %699 = vmatpush2.xpose.msra.mxu0 0.0
    %700 = vmatprep.subr.mxu0 0.0
    %701 = vmatpush2.xpose.msra.mxu0 0.0
    %702 = vmatprep.subr.mxu0 0.0
    %703 = vmatpush2.xpose.msra.mxu0 0.0
    %704 = vmatprep.subr.mxu0 0.0
    %705 = vmatpush2.xpose.msra.mxu0 0.0
    %706 = vmatprep.subr.mxu0 0.0
    %707 = vmatpush2.xpose.msra.mxu0 0.0
    %708 = vmatprep.subr.mxu0 0.0
    %709 = vmatpush2.xpose.msra.mxu0 0.0
    %710 = vmatprep.subr.mxu0 0.0
    %711 = vmatpush2.xpose.msra.mxu0 0.0
    %712 = vmatprep.subr.mxu0 0.0
    %713 = vmatpush2.xpose.msra.mxu0 0.0
    %714 = vmatprep.subr.mxu0 0.0
    %715 = vmatpush2.xpose.msra.mxu0 0.0
    %716 = vmatprep.subr.mxu0 0.0
    %717 = vmatpush2.xpose.msra.mxu0 0.0
    %718 = vmatprep.subr.mxu0 0.0
    %719 = vmatpush2.xpose.msra.mxu0 0.0
    %720 = vmatprep.subr.mxu0 0.0
    %721 = vmatpush2.xpose.msra.mxu0 0.0
    %722 = vmatprep.subr.mxu0 0.0
    %723 = vmatpush2.xpose.msra.mxu0 0.0
    %724 = vmatprep.subr.mxu0 0.0
    %725 = vmatpush2.xpose.msra.mxu0 0.0
    %726 = vmatprep.subr.mxu0 0.0
    %727 = vmatpush2.xpose.msra.mxu0 0.0
    %728 = vmatprep.mubr.f32.mxu0 0.0
    %729 = vmatmul.mubr.f32.gmra.mxu0 %v656
    %v730 = vpop.f32.mrf.mxu0
    %v731 = vadd.f32 0.0, %v730
    %v732 = vpop.f32.mrf.mxu0
    %733 = vmatprep.mubr.f32.mxu0 0.0
    %734 = vmatmul.mubr.f32.gmra.mxu0 %v658
    %v735 = vpop.f32.mrf.mxu0
    %v736 = vadd.f32 0.0, %v735
    %v737 = vpop.f32.mrf.mxu0
    %738 = vdwg.mxu0
    %v739 = vsel %vm259, %v731, -inf
    %740 = vmax.xlane.f32.xlu0 %v739
    %v741 = vpop.xlane.xlu0 %740
    %v742 = vsel %vm259, %v736, -inf
    %743 = vmax.xlane.f32.xlu0 %v742
    %v744 = vpop.xlane.xlu0 %743
    %v745 = vsub.f32 %v731, %v741
    %v746 = vsub.f32 %v736, %v744
    %v747 = vmul.f32 %v745, 1.442695
    %v748 = vpow.pop %v747
    %v749 = vmul.f32 %v746, 1.442695
    %v750 = vpow.pop %v749
    %v751 = vsel %vm259, %v748, 0.0
    %752 = vadd.xlane.f32.xlu0 %v751
    %v753 = vpop.xlane.xlu0 %752
    %v754 = vsel %vm259, %v750, 0.0
    %755 = vadd.xlane.f32.xlu0 %v754
    %v756 = vpop.xlane.xlu0 %755
    %v757 = vrcp.pop %v753
    %v758 = vrcp.pop %v756
    %v759 = vmul.f32 %v748, %v757
    %v760 = vmul.f32 %v750, %v758
    %761 = vrot.lane.b32.xlu0 %v233, 96
    %v762 = vpop.permute.xlu0 %761
    %763 = vrot.lane.b32.xlu0 %v239, 96
    %v764 = vpop.permute.xlu0 %763
    %v768 = vsel %vm259, %v759, 0
    %v771 = vsel %vm259, %v760, 0
    %773 = vmatprep.subr.mxu0 0.0
    %774 = vmatpush1.msra.mxu0 0.0
    %775 = vmatprep.subr.mxu0 0.0
    %776 = vmatpush1.msra.mxu0 0.0
    %777 = vmatprep.subr.mxu0 0.0
    %778 = vmatpush1.msra.mxu0 0.0
    %779 = vmatprep.subr.mxu0 0.0
    %780 = vmatpush1.msra.mxu0 0.0
    %781 = vmatprep.subr.mxu0 0.0
    %782 = vmatpush1.msra.mxu0 0.0
    %783 = vmatprep.subr.mxu0 0.0
    %784 = vmatpush1.msra.mxu0 0.0
    %785 = vmatprep.subr.mxu0 0.0
    %786 = vmatpush1.msra.mxu0 0.0
    %787 = vmatprep.subr.mxu0 0.0
    %788 = vmatpush1.msra.mxu0 0.0
    %789 = vmatprep.subr.mxu0 0.0
    %790 = vmatpush1.msra.mxu0 0.0
    %791 = vmatprep.subr.mxu0 0.0
    %792 = vmatpush1.msra.mxu0 0.0
    %793 = vmatprep.subr.mxu0 0.0
    %794 = vmatpush1.msra.mxu0 0.0
    %795 = vmatprep.subr.mxu0 0.0
    %796 = vmatpush1.msra.mxu0 0.0
    %797 = vmatprep.subr.mxu0 0.0
    %798 = vmatpush1.msra.mxu0 0.0
    %799 = vmatprep.subr.mxu0 0.0
    %800 = vmatpush1.msra.mxu0 0.0
    %801 = vmatprep.subr.mxu0 0.0
    %802 = vmatpush1.msra.mxu0 %v764
    %803 = vmatprep.subr.mxu0 0.0
    %804 = vmatpush1.msra.mxu0 %v762
    %805 = vmatprep.subr.mxu0 0.0
    %806 = vmatpush2.msra.mxu0 0.0
    %807 = vmatprep.subr.mxu0 0.0
    %808 = vmatpush2.msra.mxu0 0.0
    %809 = vmatprep.subr.mxu0 0.0
    %810 = vmatpush2.msra.mxu0 0.0
    %811 = vmatprep.subr.mxu0 0.0
    %812 = vmatpush2.msra.mxu0 0.0
    %813 = vmatprep.subr.mxu0 0.0
    %814 = vmatpush2.msra.mxu0 0.0
    %815 = vmatprep.subr.mxu0 0.0
    %816 = vmatpush2.msra.mxu0 0.0
    %817 = vmatprep.subr.mxu0 0.0
    %818 = vmatpush2.msra.mxu0 0.0
    %819 = vmatprep.subr.mxu0 0.0
    %820 = vmatpush2.msra.mxu0 0.0
    %821 = vmatprep.subr.mxu0 0.0
    %822 = vmatpush2.msra.mxu0 0.0
    %823 = vmatprep.subr.mxu0 0.0
    %824 = vmatpush2.msra.mxu0 0.0
    %825 = vmatprep.subr.mxu0 0.0
    %826 = vmatpush2.msra.mxu0 0.0
    %827 = vmatprep.subr.mxu0 0.0
    %828 = vmatpush2.msra.mxu0 0.0
    %829 = vmatprep.subr.mxu0 0.0
    %830 = vmatpush2.msra.mxu0 0.0
    %831 = vmatprep.subr.mxu0 0.0
    %832 = vmatpush2.msra.mxu0 0.0
    %833 = vmatprep.subr.mxu0 0.0
    %834 = vmatpush2.msra.mxu0 0.0
    %835 = vmatprep.subr.mxu0 0.0
    %836 = vmatpush2.msra.mxu0 0.0
    %837 = vmatprep.mubr.f32.mxu0 0.0
    %838 = vmatmul.mubr.f32.gmra.mxu0 %v768
    %v839 = vpop.f32.mrf.mxu0
    %v840 = vadd.f32 0.0, %v839
    %v841 = vpop.f32.mrf.mxu0
    %842 = vmatprep.mubr.f32.mxu0 0.0
    %843 = vmatmul.mubr.f32.gmra.mxu0 %v771
    %v844 = vpop.f32.mrf.mxu0
    %v845 = vadd.f32 0.0, %v844
    %v846 = vpop.f32.mrf.mxu0
    %847 = vdwg.mxu0
    %848 = vrot.lane.b32.xlu0 %v231, 80
    %v849 = vpop.permute.xlu0 %848
    %850 = vrot.lane.b32.xlu0 %v237, 80
    %v851 = vpop.permute.xlu0 %850
    %852 = vrot.lane.b32.xlu0 %v231, 16
    %v853 = vpop.permute.xlu0 %852
    %854 = vrot.lane.b32.xlu0 %v237, 16
    %v855 = vpop.permute.xlu0 %854
    %v856 = vsel %vm259, %v849, 0
    %v858 = vsel %vm259, %v851, 0
    %v860 = vsel %vm259, %v853, 0
    %v862 = vsel %vm259, %v855, 0
    %864 = vmatprep.subr.mxu0 0.0
    %865 = vmatpush1.xpose.msra.mxu0 0.0
    %866 = vmatprep.subr.mxu0 0.0
    %867 = vmatpush1.xpose.msra.mxu0 0.0
    %868 = vmatprep.subr.mxu0 0.0
    %869 = vmatpush1.xpose.msra.mxu0 0.0
    %870 = vmatprep.subr.mxu0 0.0
    %871 = vmatpush1.xpose.msra.mxu0 0.0
    %872 = vmatprep.subr.mxu0 0.0
    %873 = vmatpush1.xpose.msra.mxu0 0.0
    %874 = vmatprep.subr.mxu0 0.0
    %875 = vmatpush1.xpose.msra.mxu0 0.0
    %876 = vmatprep.subr.mxu0 0.0
    %877 = vmatpush1.xpose.msra.mxu0 0.0
    %878 = vmatprep.subr.mxu0 0.0
    %879 = vmatpush1.xpose.msra.mxu0 0.0
    %880 = vmatprep.subr.mxu0 0.0
    %881 = vmatpush1.xpose.msra.mxu0 0.0
    %882 = vmatprep.subr.mxu0 0.0
    %883 = vmatpush1.xpose.msra.mxu0 0.0
    %884 = vmatprep.subr.mxu0 0.0
    %885 = vmatpush1.xpose.msra.mxu0 0.0
    %886 = vmatprep.subr.mxu0 0.0
    %887 = vmatpush1.xpose.msra.mxu0 0.0
    %888 = vmatprep.subr.mxu0 0.0
    %889 = vmatpush1.xpose.msra.mxu0 0.0
    %890 = vmatprep.subr.mxu0 0.0
    %891 = vmatpush1.xpose.msra.mxu0 0.0
    %892 = vmatprep.subr.mxu0 0.0
    %893 = vmatpush1.xpose.msra.mxu0 %v862
    %894 = vmatprep.subr.mxu0 0.0
    %895 = vmatpush1.xpose.msra.mxu0 %v860
    %896 = vmatprep.subr.mxu0 0.0
    %897 = vmatpush2.xpose.msra.mxu0 0.0
    %898 = vmatprep.subr.mxu0 0.0
    %899 = vmatpush2.xpose.msra.mxu0 0.0
    %900 = vmatprep.subr.mxu0 0.0
    %901 = vmatpush2.xpose.msra.mxu0 0.0
    %902 = vmatprep.subr.mxu0 0.0
    %903 = vmatpush2.xpose.msra.mxu0 0.0
    %904 = vmatprep.subr.mxu0 0.0
    %905 = vmatpush2.xpose.msra.mxu0 0.0
    %906 = vmatprep.subr.mxu0 0.0
    %907 = vmatpush2.xpose.msra.mxu0 0.0
    %908 = vmatprep.subr.mxu0 0.0
    %909 = vmatpush2.xpose.msra.mxu0 0.0
    %910 = vmatprep.subr.mxu0 0.0
    %911 = vmatpush2.xpose.msra.mxu0 0.0
    %912 = vmatprep.subr.mxu0 0.0
    %913 = vmatpush2.xpose.msra.mxu0 0.0
    %914 = vmatprep.subr.mxu0 0.0
    %915 = vmatpush2.xpose.msra.mxu0 0.0
    %916 = vmatprep.subr.mxu0 0.0
    %917 = vmatpush2.xpose.msra.mxu0 0.0
    %918 = vmatprep.subr.mxu0 0.0
    %919 = vmatpush2.xpose.msra.mxu0 0.0
    %920 = vmatprep.subr.mxu0 0.0
    %921 = vmatpush2.xpose.msra.mxu0 0.0
    %922 = vmatprep.subr.mxu0 0.0
    %923 = vmatpush2.xpose.msra.mxu0 0.0
    %924 = vmatprep.subr.mxu0 0.0
    %925 = vmatpush2.xpose.msra.mxu0 0.0
    %926 = vmatprep.subr.mxu0 0.0
    %927 = vmatpush2.xpose.msra.mxu0 0.0
    %928 = vmatprep.mubr.f32.mxu0 0.0
    %929 = vmatmul.mubr.f32.gmra.mxu0 %v856
    %v930 = vpop.f32.mrf.mxu0
    %v931 = vadd.f32 0.0, %v930
    %v932 = vpop.f32.mrf.mxu0
    %933 = vmatprep.mubr.f32.mxu0 0.0
    %934 = vmatmul.mubr.f32.gmra.mxu0 %v858
    %v935 = vpop.f32.mrf.mxu0
    %v936 = vadd.f32 0.0, %v935
    %v937 = vpop.f32.mrf.mxu0
    %938 = vdwg.mxu0
    %v939 = vsel %vm259, %v931, -inf
    %940 = vmax.xlane.f32.xlu0 %v939
    %v941 = vpop.xlane.xlu0 %940
    %v942 = vsel %vm259, %v936, -inf
    %943 = vmax.xlane.f32.xlu0 %v942
    %v944 = vpop.xlane.xlu0 %943
    %v945 = vsub.f32 %v931, %v941
    %v946 = vsub.f32 %v936, %v944
    %v947 = vmul.f32 %v945, 1.442695
    %v948 = vpow.pop %v947
    %v949 = vmul.f32 %v946, 1.442695
    %v950 = vpow.pop %v949
    %v951 = vsel %vm259, %v948, 0.0
    %952 = vadd.xlane.f32.xlu0 %v951
    %v953 = vpop.xlane.xlu0 %952
    %v954 = vsel %vm259, %v950, 0.0
    %955 = vadd.xlane.f32.xlu0 %v954
    %v956 = vpop.xlane.xlu0 %955
    %v957 = vrcp.pop %v953
    %v958 = vrcp.pop %v956
    %v959 = vmul.f32 %v948, %v957
    %v960 = vmul.f32 %v950, %v958
    %961 = vrot.lane.b32.xlu0 %v233, 80
    %v962 = vpop.permute.xlu0 %961
    %963 = vrot.lane.b32.xlu0 %v239, 80
    %v964 = vpop.permute.xlu0 %963
    %v968 = vsel %vm259, %v959, 0
    %v971 = vsel %vm259, %v960, 0
    %973 = vmatprep.subr.mxu0 0.0
    %974 = vmatpush1.msra.mxu0 0.0
    %975 = vmatprep.subr.mxu0 0.0
    %976 = vmatpush1.msra.mxu0 0.0
    %977 = vmatprep.subr.mxu0 0.0
    %978 = vmatpush1.msra.mxu0 0.0
    %979 = vmatprep.subr.mxu0 0.0
    %980 = vmatpush1.msra.mxu0 0.0
    %981 = vmatprep.subr.mxu0 0.0
    %982 = vmatpush1.msra.mxu0 0.0
    %983 = vmatprep.subr.mxu0 0.0
    %984 = vmatpush1.msra.mxu0 0.0
    %985 = vmatprep.subr.mxu0 0.0
    %986 = vmatpush1.msra.mxu0 0.0
    %987 = vmatprep.subr.mxu0 0.0
    %988 = vmatpush1.msra.mxu0 0.0
    %989 = vmatprep.subr.mxu0 0.0
    %990 = vmatpush1.msra.mxu0 0.0
    %991 = vmatprep.subr.mxu0 0.0
    %992 = vmatpush1.msra.mxu0 0.0
    %993 = vmatprep.subr.mxu0 0.0
    %994 = vmatpush1.msra.mxu0 0.0
    %995 = vmatprep.subr.mxu0 0.0
    %996 = vmatpush1.msra.mxu0 0.0
    %997 = vmatprep.subr.mxu0 0.0
    %998 = vmatpush1.msra.mxu0 0.0
    %999 = vmatprep.subr.mxu0 0.0
    %1000 = vmatpush1.msra.mxu0 0.0
    %1001 = vmatprep.subr.mxu0 0.0
    %1002 = vmatpush1.msra.mxu0 %v964
    %1003 = vmatprep.subr.mxu0 0.0
    %1004 = vmatpush1.msra.mxu0 %v962
    %1005 = vmatprep.subr.mxu0 0.0
    %1006 = vmatpush2.msra.mxu0 0.0
    %1007 = vmatprep.subr.mxu0 0.0
    %1008 = vmatpush2.msra.mxu0 0.0
    %1009 = vmatprep.subr.mxu0 0.0
    %1010 = vmatpush2.msra.mxu0 0.0
    %1011 = vmatprep.subr.mxu0 0.0
    %1012 = vmatpush2.msra.mxu0 0.0
    %1013 = vmatprep.subr.mxu0 0.0
    %1014 = vmatpush2.msra.mxu0 0.0
    %1015 = vmatprep.subr.mxu0 0.0
    %1016 = vmatpush2.msra.mxu0 0.0
    %1017 = vmatprep.subr.mxu0 0.0
    %1018 = vmatpush2.msra.mxu0 0.0
    %1019 = vmatprep.subr.mxu0 0.0
    %1020 = vmatpush2.msra.mxu0 0.0
    %1021 = vmatprep.subr.mxu0 0.0
    %1022 = vmatpush2.msra.mxu0 0.0
    %1023 = vmatprep.subr.mxu0 0.0
    %1024 = vmatpush2.msra.mxu0 0.0
    %1025 = vmatprep.subr.mxu0 0.0
    %1026 = vmatpush2.msra.mxu0 0.0
    %1027 = vmatprep.subr.mxu0 0.0
    %1028 = vmatpush2.msra.mxu0 0.0
    %1029 = vmatprep.subr.mxu0 0.0
    %1030 = vmatpush2.msra.mxu0 0.0
    %1031 = vmatprep.subr.mxu0 0.0
    %1032 = vmatpush2.msra.mxu0 0.0
    %1033 = vmatprep.subr.mxu0 0.0
    %1034 = vmatpush2.msra.mxu0 0.0
    %1035 = vmatprep.subr.mxu0 0.0
    %1036 = vmatpush2.msra.mxu0 0.0
    %1037 = vmatprep.mubr.f32.mxu0 0.0
    %1038 = vmatmul.mubr.f32.gmra.mxu0 %v968
    %v1039 = vpop.f32.mrf.mxu0
    %v1040 = vadd.f32 0.0, %v1039
    %v1041 = vpop.f32.mrf.mxu0
    %1042 = vmatprep.mubr.f32.mxu0 0.0
    %1043 = vmatmul.mubr.f32.gmra.mxu0 %v971
    %v1044 = vpop.f32.mrf.mxu0
    %v1045 = vadd.f32 0.0, %v1044
    %v1046 = vpop.f32.mrf.mxu0
    %1047 = vdwg.mxu0
    %1050 = vrot.lane.b32.xlu0 %v640, 16
    %v1051 = vpop.permute.xlu0 %1050
    %1052 = vrot.lane.b32.xlu0 %v645, 16
    %v1053 = vpop.permute.xlu0 %1052
    %1058 = vrot.lane.b32.xlu0 %v840, 32
    %v1059 = vpop.permute.xlu0 %1058
    %1060 = vrot.lane.b32.xlu0 %v845, 32
    %v1061 = vpop.permute.xlu0 %1060
    %1066 = vrot.lane.b32.xlu0 %v1040, 48
    %v1067 = vpop.permute.xlu0 %1066
    %1068 = vrot.lane.b32.xlu0 %v1045, 48
    %v1069 = vpop.permute.xlu0 %1068
    %v1072 = vsel %vm259, %v438, %v1051
    %v1073 = vsel %vm259, %v443, %v1053
    %vm1074 = vcmask 261120
    %v1075 = vsel %vm1074, %v1072, %v1059
    %v1076 = vsel %vm1074, %v1073, %v1061
    %vm1077 = vcmask 392192
    %v1078 = vsel %vm1077, %v1075, %v1067
    %v1079 = vsel %vm1077, %v1076, %v1069
    %v1080 = vld [vmem:[#allocation7] sm:$0xff]
    %v1081 = vld [vmem:[#allocation7 + $0x8] sm:$0xff]
    %v1082 = vld [vmem:[#allocation7 + $0x10] sm:$0xff]
    %v1083 = vld [vmem:[#allocation7 + $0x18] sm:$0xff]
    %v1084 = vld [vmem:[#allocation7 + $0x20] sm:$0xff]
    %v1085 = vld [vmem:[#allocation7 + $0x28] sm:$0xff]
    %v1086 = vld [vmem:[#allocation7 + $0x30] sm:$0xff]
    %v1087 = vld [vmem:[#allocation7 + $0x38] sm:$0xff]
    %v1089 = vsel %vm151, %v1078, 0
    %v1092 = vsel %vm151, %v1079, 0
    %1094 = vmatprep.subr.mxu0 0.0
    %1095 = vmatpush1.msra.mxu0 0.0
    %1096 = vmatprep.subr.mxu0 0.0
    %1097 = vmatpush1.msra.mxu0 0.0
    %1098 = vmatprep.subr.mxu0 0.0
    %1099 = vmatpush1.msra.mxu0 0.0
    %1100 = vmatprep.subr.mxu0 0.0
    %1101 = vmatpush1.msra.mxu0 0.0
    %1102 = vmatprep.subr.mxu0 0.0
    %1103 = vmatpush1.msra.mxu0 0.0
    %1104 = vmatprep.subr.mxu0 0.0
    %1105 = vmatpush1.msra.mxu0 0.0
    %1106 = vmatprep.subr.mxu0 0.0
    %1107 = vmatpush1.msra.mxu0 0.0
    %1108 = vmatprep.subr.mxu0 0.0
    %1109 = vmatpush1.msra.mxu0 0.0
    %1110 = vmatprep.subr.mxu0 0.0
    %1111 = vmatpush1.msra.mxu0 %v1087
    %1112 = vmatprep.subr.mxu0 0.0
    %1113 = vmatpush1.msra.mxu0 %v1086
    %1114 = vmatprep.subr.mxu0 0.0
    %1115 = vmatpush1.msra.mxu0 %v1085
    %1116 = vmatprep.subr.mxu0 0.0
    %1117 = vmatpush1.msra.mxu0 %v1084
    %1118 = vmatprep.subr.mxu0 0.0
    %1119 = vmatpush1.msra.mxu0 %v1083
    %1120 = vmatprep.subr.mxu0 0.0
    %1121 = vmatpush1.msra.mxu0 %v1082
    %1122 = vmatprep.subr.mxu0 0.0
    %1123 = vmatpush1.msra.mxu0 %v1081
    %1124 = vmatprep.subr.mxu0 0.0
    %1125 = vmatpush1.msra.mxu0 %v1080
    %1126 = vmatprep.subr.mxu0 0.0
    %1127 = vmatpush2.msra.mxu0 0.0
    %1128 = vmatprep.subr.mxu0 0.0
    %1129 = vmatpush2.msra.mxu0 0.0
    %1130 = vmatprep.subr.mxu0 0.0
    %1131 = vmatpush2.msra.mxu0 0.0
    %1132 = vmatprep.subr.mxu0 0.0
    %1133 = vmatpush2.msra.mxu0 0.0
    %1134 = vmatprep.subr.mxu0 0.0
    %1135 = vmatpush2.msra.mxu0 0.0
    %1136 = vmatprep.subr.mxu0 0.0
    %1137 = vmatpush2.msra.mxu0 0.0
    %1138 = vmatprep.subr.mxu0 0.0
    %1139 = vmatpush2.msra.mxu0 0.0
    %1140 = vmatprep.subr.mxu0 0.0
    %1141 = vmatpush2.msra.mxu0 0.0
    %1142 = vmatprep.subr.mxu0 0.0
    %1143 = vmatpush2.msra.mxu0 0.0
    %1144 = vmatprep.subr.mxu0 0.0
    %1145 = vmatpush2.msra.mxu0 0.0
    %1146 = vmatprep.subr.mxu0 0.0
    %1147 = vmatpush2.msra.mxu0 0.0
    %1148 = vmatprep.subr.mxu0 0.0
    %1149 = vmatpush2.msra.mxu0 0.0
    %1150 = vmatprep.subr.mxu0 0.0
    %1151 = vmatpush2.msra.mxu0 0.0
    %1152 = vmatprep.subr.mxu0 0.0
    %1153 = vmatpush2.msra.mxu0 0.0
    %1154 = vmatprep.subr.mxu0 0.0
    %1155 = vmatpush2.msra.mxu0 0.0
    %1156 = vmatprep.subr.mxu0 0.0
    %1157 = vmatpush2.msra.mxu0 0.0
    %1158 = vmatprep.mubr.f32.mxu0 0.0
    %1159 = vmatmul.mubr.f32.gmra.mxu0 %v1089
    %v1160 = vpop.f32.mrf.mxu0
    %v1161 = vadd.f32 0.0, %v1160
    %v1162 = vpop.f32.mrf.mxu0
    %1163 = vmatprep.mubr.f32.mxu0 0.0
    %1164 = vmatmul.mubr.f32.gmra.mxu0 %v1092
    %v1165 = vpop.f32.mrf.mxu0
    %v1166 = vadd.f32 0.0, %v1165
    %v1167 = vpop.f32.mrf.mxu0
    %1168 = vdwg.mxu0
    %1171 = vrot.lane.b32.xlu0 %v243, 64
    %v1172 = vpop.permute.xlu0 %1171
    %1173 = vrot.lane.b32.xlu0 %v249, 64
    %v1174 = vpop.permute.xlu0 %1173
    %v1175 = vsel %vm259, %v243, 0
    %v1177 = vsel %vm259, %v249, 0
    %v1179 = vsel %vm259, %v1172, 0
    %v1181 = vsel %vm259, %v1174, 0
    %1183 = vmatprep.subr.mxu0 0.0
    %1184 = vmatpush1.xpose.msra.mxu0 0.0
    %1185 = vmatprep.subr.mxu0 0.0
    %1186 = vmatpush1.xpose.msra.mxu0 0.0
    %1187 = vmatprep.subr.mxu0 0.0
    %1188 = vmatpush1.xpose.msra.mxu0 0.0
    %1189 = vmatprep.subr.mxu0 0.0
    %1190 = vmatpush1.xpose.msra.mxu0 0.0
    %1191 = vmatprep.subr.mxu0 0.0
    %1192 = vmatpush1.xpose.msra.mxu0 0.0
    %1193 = vmatprep.subr.mxu0 0.0
    %1194 = vmatpush1.xpose.msra.mxu0 0.0
    %1195 = vmatprep.subr.mxu0 0.0
    %1196 = vmatpush1.xpose.msra.mxu0 0.0
    %1197 = vmatprep.subr.mxu0 0.0
    %1198 = vmatpush1.xpose.msra.mxu0 0.0
    %1199 = vmatprep.subr.mxu0 0.0
    %1200 = vmatpush1.xpose.msra.mxu0 0.0
    %1201 = vmatprep.subr.mxu0 0.0
    %1202 = vmatpush1.xpose.msra.mxu0 0.0
    %1203 = vmatprep.subr.mxu0 0.0
    %1204 = vmatpush1.xpose.msra.mxu0 0.0
    %1205 = vmatprep.subr.mxu0 0.0
    %1206 = vmatpush1.xpose.msra.mxu0 0.0
    %1207 = vmatprep.subr.mxu0 0.0
    %1208 = vmatpush1.xpose.msra.mxu0 0.0
    %1209 = vmatprep.subr.mxu0 0.0
    %1210 = vmatpush1.xpose.msra.mxu0 0.0
    %1211 = vmatprep.subr.mxu0 0.0
    %1212 = vmatpush1.xpose.msra.mxu0 %v1181
    %1213 = vmatprep.subr.mxu0 0.0
    %1214 = vmatpush1.xpose.msra.mxu0 %v1179
    %1215 = vmatprep.subr.mxu0 0.0
    %1216 = vmatpush2.xpose.msra.mxu0 0.0
    %1217 = vmatprep.subr.mxu0 0.0
    %1218 = vmatpush2.xpose.msra.mxu0 0.0
    %1219 = vmatprep.subr.mxu0 0.0
    %1220 = vmatpush2.xpose.msra.mxu0 0.0
    %1221 = vmatprep.subr.mxu0 0.0
    %1222 = vmatpush2.xpose.msra.mxu0 0.0
    %1223 = vmatprep.subr.mxu0 0.0
    %1224 = vmatpush2.xpose.msra.mxu0 0.0
    %1225 = vmatprep.subr.mxu0 0.0
    %1226 = vmatpush2.xpose.msra.mxu0 0.0
    %1227 = vmatprep.subr.mxu0 0.0
    %1228 = vmatpush2.xpose.msra.mxu0 0.0
    %1229 = vmatprep.subr.mxu0 0.0
    %1230 = vmatpush2.xpose.msra.mxu0 0.0
    %1231 = vmatprep.subr.mxu0 0.0
    %1232 = vmatpush2.xpose.msra.mxu0 0.0
    %1233 = vmatprep.subr.mxu0 0.0
    %1234 = vmatpush2.xpose.msra.mxu0 0.0
    %1235 = vmatprep.subr.mxu0 0.0
    %1236 = vmatpush2.xpose.msra.mxu0 0.0
    %1237 = vmatprep.subr.mxu0 0.0
    %1238 = vmatpush2.xpose.msra.mxu0 0.0
    %1239 = vmatprep.subr.mxu0 0.0
    %1240 = vmatpush2.xpose.msra.mxu0 0.0
    %1241 = vmatprep.subr.mxu0 0.0
    %1242 = vmatpush2.xpose.msra.mxu0 0.0
    %1243 = vmatprep.subr.mxu0 0.0
    %1244 = vmatpush2.xpose.msra.mxu0 0.0
    %1245 = vmatprep.subr.mxu0 0.0
    %1246 = vmatpush2.xpose.msra.mxu0 0.0
    %1247 = vmatprep.mubr.f32.mxu0 0.0
    %1248 = vmatmul.mubr.f32.gmra.mxu0 %v1175
    %v1249 = vpop.f32.mrf.mxu0
    %v1250 = vadd.f32 0.0, %v1249
    %v1251 = vpop.f32.mrf.mxu0
    %1252 = vmatprep.mubr.f32.mxu0 0.0
    %1253 = vmatmul.mubr.f32.gmra.mxu0 %v1177
    %v1254 = vpop.f32.mrf.mxu0
    %v1255 = vadd.f32 0.0, %v1254
    %v1256 = vpop.f32.mrf.mxu0
    %1257 = vdwg.mxu0
    %v1258 = vsel %vm259, %v1250, -inf
    %1259 = vmax.xlane.f32.xlu0 %v1258
    %v1260 = vpop.xlane.xlu0 %1259
    %v1261 = vsel %vm259, %v1255, -inf
    %1262 = vmax.xlane.f32.xlu0 %v1261
    %v1263 = vpop.xlane.xlu0 %1262
    %v1264 = vsub.f32 %v1250, %v1260
    %v1265 = vsub.f32 %v1255, %v1263
    %v1266 = vmul.f32 %v1264, 1.442695
    %v1267 = vpow.pop %v1266
    %v1268 = vmul.f32 %v1265, 1.442695
    %v1269 = vpow.pop %v1268
    %v1270 = vsel %vm259, %v1267, 0.0
    %1271 = vadd.xlane.f32.xlu0 %v1270
    %v1272 = vpop.xlane.xlu0 %1271
    %v1273 = vsel %vm259, %v1269, 0.0
    %1274 = vadd.xlane.f32.xlu0 %v1273
    %v1275 = vpop.xlane.xlu0 %1274
    %v1276 = vrcp.pop %v1272
    %v1277 = vrcp.pop %v1275
    %v1278 = vmul.f32 %v1267, %v1276
    %v1279 = vmul.f32 %v1269, %v1277
    %v1281 = vsel %vm259, %v1278, 0
    %v1284 = vsel %vm259, %v1279, 0
    %1286 = vmatprep.subr.mxu0 0.0
    %1287 = vmatpush1.msra.mxu0 0.0
    %1288 = vmatprep.subr.mxu0 0.0
    %1289 = vmatpush1.msra.mxu0 0.0
    %1290 = vmatprep.subr.mxu0 0.0
    %1291 = vmatpush1.msra.mxu0 0.0
    %1292 = vmatprep.subr.mxu0 0.0
    %1293 = vmatpush1.msra.mxu0 0.0
    %1294 = vmatprep.subr.mxu0 0.0
    %1295 = vmatpush1.msra.mxu0 0.0
    %1296 = vmatprep.subr.mxu0 0.0
    %1297 = vmatpush1.msra.mxu0 0.0
    %1298 = vmatprep.subr.mxu0 0.0
    %1299 = vmatpush1.msra.mxu0 0.0
    %1300 = vmatprep.subr.mxu0 0.0
    %1301 = vmatpush1.msra.mxu0 0.0
    %1302 = vmatprep.subr.mxu0 0.0
    %1303 = vmatpush1.msra.mxu0 0.0
    %1304 = vmatprep.subr.mxu0 0.0
    %1305 = vmatpush1.msra.mxu0 0.0
    %1306 = vmatprep.subr.mxu0 0.0
    %1307 = vmatpush1.msra.mxu0 0.0
    %1308 = vmatprep.subr.mxu0 0.0
    %1309 = vmatpush1.msra.mxu0 0.0
    %1310 = vmatprep.subr.mxu0 0.0
    %1311 = vmatpush1.msra.mxu0 0.0
    %1312 = vmatprep.subr.mxu0 0.0
    %1313 = vmatpush1.msra.mxu0 0.0
    %1314 = vmatprep.subr.mxu0 0.0
    %1315 = vmatpush1.msra.mxu0 %v251
    %1316 = vmatprep.subr.mxu0 0.0
    %1317 = vmatpush1.msra.mxu0 %v245
    %1318 = vmatprep.subr.mxu0 0.0
    %1319 = vmatpush2.msra.mxu0 0.0
    %1320 = vmatprep.subr.mxu0 0.0
    %1321 = vmatpush2.msra.mxu0 0.0
    %1322 = vmatprep.subr.mxu0 0.0
    %1323 = vmatpush2.msra.mxu0 0.0
    %1324 = vmatprep.subr.mxu0 0.0
    %1325 = vmatpush2.msra.mxu0 0.0
    %1326 = vmatprep.subr.mxu0 0.0
    %1327 = vmatpush2.msra.mxu0 0.0
    %1328 = vmatprep.subr.mxu0 0.0
    %1329 = vmatpush2.msra.mxu0 0.0
    %1330 = vmatprep.subr.mxu0 0.0
    %1331 = vmatpush2.msra.mxu0 0.0
    %1332 = vmatprep.subr.mxu0 0.0
    %1333 = vmatpush2.msra.mxu0 0.0
    %1334 = vmatprep.subr.mxu0 0.0
    %1335 = vmatpush2.msra.mxu0 0.0
    %1336 = vmatprep.subr.mxu0 0.0
    %1337 = vmatpush2.msra.mxu0 0.0
    %1338 = vmatprep.subr.mxu0 0.0
    %1339 = vmatpush2.msra.mxu0 0.0
    %1340 = vmatprep.subr.mxu0 0.0
    %1341 = vmatpush2.msra.mxu0 0.0
    %1342 = vmatprep.subr.mxu0 0.0
    %1343 = vmatpush2.msra.mxu0 0.0
    %1344 = vmatprep.subr.mxu0 0.0
    %1345 = vmatpush2.msra.mxu0 0.0
    %1346 = vmatprep.subr.mxu0 0.0
    %1347 = vmatpush2.msra.mxu0 0.0
    %1348 = vmatprep.subr.mxu0 0.0
    %1349 = vmatpush2.msra.mxu0 0.0
    %1350 = vmatprep.mubr.f32.mxu0 0.0
    %1351 = vmatmul.mubr.f32.gmra.mxu0 %v1281
    %v1352 = vpop.f32.mrf.mxu0
    %v1353 = vadd.f32 0.0, %v1352
    %v1354 = vpop.f32.mrf.mxu0
    %1355 = vmatprep.mubr.f32.mxu0 0.0
    %1356 = vmatmul.mubr.f32.gmra.mxu0 %v1284
    %v1357 = vpop.f32.mrf.mxu0
    %v1358 = vadd.f32 0.0, %v1357
    %v1359 = vpop.f32.mrf.mxu0
    %1360 = vdwg.mxu0
    %1361 = vrot.lane.b32.xlu0 %v243, 112
    %v1362 = vpop.permute.xlu0 %1361
    %1363 = vrot.lane.b32.xlu0 %v249, 112
    %v1364 = vpop.permute.xlu0 %1363
    %1365 = vrot.lane.b32.xlu0 %v243, 48
    %v1366 = vpop.permute.xlu0 %1365
    %1367 = vrot.lane.b32.xlu0 %v249, 48
    %v1368 = vpop.permute.xlu0 %1367
    %v1369 = vsel %vm259, %v1362, 0
    %v1371 = vsel %vm259, %v1364, 0
    %v1373 = vsel %vm259, %v1366, 0
    %v1375 = vsel %vm259, %v1368, 0
    %1377 = vmatprep.subr.mxu0 0.0
    %1378 = vmatpush1.xpose.msra.mxu0 0.0
    %1379 = vmatprep.subr.mxu0 0.0
    %1380 = vmatpush1.xpose.msra.mxu0 0.0
    %1381 = vmatprep.subr.mxu0 0.0
    %1382 = vmatpush1.xpose.msra.mxu0 0.0
    %1383 = vmatprep.subr.mxu0 0.0
    %1384 = vmatpush1.xpose.msra.mxu0 0.0
    %1385 = vmatprep.subr.mxu0 0.0
    %1386 = vmatpush1.xpose.msra.mxu0 0.0
    %1387 = vmatprep.subr.mxu0 0.0
    %1388 = vmatpush1.xpose.msra.mxu0 0.0
    %1389 = vmatprep.subr.mxu0 0.0
    %1390 = vmatpush1.xpose.msra.mxu0 0.0
    %1391 = vmatprep.subr.mxu0 0.0
    %1392 = vmatpush1.xpose.msra.mxu0 0.0
    %1393 = vmatprep.subr.mxu0 0.0
    %1394 = vmatpush1.xpose.msra.mxu0 0.0
    %1395 = vmatprep.subr.mxu0 0.0
    %1396 = vmatpush1.xpose.msra.mxu0 0.0
    %1397 = vmatprep.subr.mxu0 0.0
    %1398 = vmatpush1.xpose.msra.mxu0 0.0
    %1399 = vmatprep.subr.mxu0 0.0
    %1400 = vmatpush1.xpose.msra.mxu0 0.0
    %1401 = vmatprep.subr.mxu0 0.0
    %1402 = vmatpush1.xpose.msra.mxu0 0.0
    %1403 = vmatprep.subr.mxu0 0.0
    %1404 = vmatpush1.xpose.msra.mxu0 0.0
    %1405 = vmatprep.subr.mxu0 0.0
    %1406 = vmatpush1.xpose.msra.mxu0 %v1375
    %1407 = vmatprep.subr.mxu0 0.0
    %1408 = vmatpush1.xpose.msra.mxu0 %v1373
    %1409 = vmatprep.subr.mxu0 0.0
    %1410 = vmatpush2.xpose.msra.mxu0 0.0
    %1411 = vmatprep.subr.mxu0 0.0
    %1412 = vmatpush2.xpose.msra.mxu0 0.0
    %1413 = vmatprep.subr.mxu0 0.0
    %1414 = vmatpush2.xpose.msra.mxu0 0.0
    %1415 = vmatprep.subr.mxu0 0.0
    %1416 = vmatpush2.xpose.msra.mxu0 0.0
    %1417 = vmatprep.subr.mxu0 0.0
    %1418 = vmatpush2.xpose.msra.mxu0 0.0
    %1419 = vmatprep.subr.mxu0 0.0
    %1420 = vmatpush2.xpose.msra.mxu0 0.0
    %1421 = vmatprep.subr.mxu0 0.0
    %1422 = vmatpush2.xpose.msra.mxu0 0.0
    %1423 = vmatprep.subr.mxu0 0.0
    %1424 = vmatpush2.xpose.msra.mxu0 0.0
    %1425 = vmatprep.subr.mxu0 0.0
    %1426 = vmatpush2.xpose.msra.mxu0 0.0
    %1427 = vmatprep.subr.mxu0 0.0
    %1428 = vmatpush2.xpose.msra.mxu0 0.0
    %1429 = vmatprep.subr.mxu0 0.0
    %1430 = vmatpush2.xpose.msra.mxu0 0.0
    %1431 = vmatprep.subr.mxu0 0.0
    %1432 = vmatpush2.xpose.msra.mxu0 0.0
    %1433 = vmatprep.subr.mxu0 0.0
    %1434 = vmatpush2.xpose.msra.mxu0 0.0
    %1435 = vmatprep.subr.mxu0 0.0
    %1436 = vmatpush2.xpose.msra.mxu0 0.0
    %1437 = vmatprep.subr.mxu0 0.0
    %1438 = vmatpush2.xpose.msra.mxu0 0.0
    %1439 = vmatprep.subr.mxu0 0.0
    %1440 = vmatpush2.xpose.msra.mxu0 0.0
    %1441 = vmatprep.mubr.f32.mxu0 0.0
    %1442 = vmatmul.mubr.f32.gmra.mxu0 %v1369
    %v1443 = vpop.f32.mrf.mxu0
    %v1444 = vadd.f32 0.0, %v1443
    %v1445 = vpop.f32.mrf.mxu0
    %1446 = vmatprep.mubr.f32.mxu0 0.0
    %1447 = vmatmul.mubr.f32.gmra.mxu0 %v1371
    %v1448 = vpop.f32.mrf.mxu0
    %v1449 = vadd.f32 0.0, %v1448
    %v1450 = vpop.f32.mrf.mxu0
    %1451 = vdwg.mxu0
    %v1452 = vsel %vm259, %v1444, -inf
    %1453 = vmax.xlane.f32.xlu0 %v1452
    %v1454 = vpop.xlane.xlu0 %1453
    %v1455 = vsel %vm259, %v1449, -inf
    %1456 = vmax.xlane.f32.xlu0 %v1455
    %v1457 = vpop.xlane.xlu0 %1456
    %v1458 = vsub.f32 %v1444, %v1454
    %v1459 = vsub.f32 %v1449, %v1457
    %v1460 = vmul.f32 %v1458, 1.442695
    %v1461 = vpow.pop %v1460
    %v1462 = vmul.f32 %v1459, 1.442695
    %v1463 = vpow.pop %v1462
    %v1464 = vsel %vm259, %v1461, 0.0
    %1465 = vadd.xlane.f32.xlu0 %v1464
    %v1466 = vpop.xlane.xlu0 %1465
    %v1467 = vsel %vm259, %v1463, 0.0
    %1468 = vadd.xlane.f32.xlu0 %v1467
    %v1469 = vpop.xlane.xlu0 %1468
    %v1470 = vrcp.pop %v1466
    %v1471 = vrcp.pop %v1469
    %v1472 = vmul.f32 %v1461, %v1470
    %v1473 = vmul.f32 %v1463, %v1471
    %1476 = vrot.lane.b32.xlu0 %v245, 112
    %v1477 = vpop.permute.xlu0 %1476
    %1478 = vrot.lane.b32.xlu0 %v251, 112
    %v1479 = vpop.permute.xlu0 %1478
    %v1483 = vsel %vm259, %v1472, 0
    %v1486 = vsel %vm259, %v1473, 0
    %1488 = vmatprep.subr.mxu0 0.0
    %1489 = vmatpush1.msra.mxu0 0.0
    %1490 = vmatprep.subr.mxu0 0.0
    %1491 = vmatpush1.msra.mxu0 0.0
    %1492 = vmatprep.subr.mxu0 0.0
    %1493 = vmatpush1.msra.mxu0 0.0
    %1494 = vmatprep.subr.mxu0 0.0
    %1495 = vmatpush1.msra.mxu0 0.0
    %1496 = vmatprep.subr.mxu0 0.0
    %1497 = vmatpush1.msra.mxu0 0.0
    %1498 = vmatprep.subr.mxu0 0.0
    %1499 = vmatpush1.msra.mxu0 0.0
    %1500 = vmatprep.subr.mxu0 0.0
    %1501 = vmatpush1.msra.mxu0 0.0
    %1502 = vmatprep.subr.mxu0 0.0
    %1503 = vmatpush1.msra.mxu0 0.0
    %1504 = vmatprep.subr.mxu0 0.0
    %1505 = vmatpush1.msra.mxu0 0.0
    %1506 = vmatprep.subr.mxu0 0.0
    %1507 = vmatpush1.msra.mxu0 0.0
    %1508 = vmatprep.subr.mxu0 0.0
    %1509 = vmatpush1.msra.mxu0 0.0
    %1510 = vmatprep.subr.mxu0 0.0
    %1511 = vmatpush1.msra.mxu0 0.0
    %1512 = vmatprep.subr.mxu0 0.0
    %1513 = vmatpush1.msra.mxu0 0.0
    %1514 = vmatprep.subr.mxu0 0.0
    %1515 = vmatpush1.msra.mxu0 0.0
    %1516 = vmatprep.subr.mxu0 0.0
    %1517 = vmatpush1.msra.mxu0 %v1479
    %1518 = vmatprep.subr.mxu0 0.0
    %1519 = vmatpush1.msra.mxu0 %v1477
    %1520 = vmatprep.subr.mxu0 0.0
    %1521 = vmatpush2.msra.mxu0 0.0
    %1522 = vmatprep.subr.mxu0 0.0
    %1523 = vmatpush2.msra.mxu0 0.0
    %1524 = vmatprep.subr.mxu0 0.0
    %1525 = vmatpush2.msra.mxu0 0.0
    %1526 = vmatprep.subr.mxu0 0.0
    %1527 = vmatpush2.msra.mxu0 0.0
    %1528 = vmatprep.subr.mxu0 0.0
    %1529 = vmatpush2.msra.mxu0 0.0
    %1530 = vmatprep.subr.mxu0 0.0
    %1531 = vmatpush2.msra.mxu0 0.0
    %1532 = vmatprep.subr.mxu0 0.0
    %1533 = vmatpush2.msra.mxu0 0.0
    %1534 = vmatprep.subr.mxu0 0.0
    %1535 = vmatpush2.msra.mxu0 0.0
    %1536 = vmatprep.subr.mxu0 0.0
    %1537 = vmatpush2.msra.mxu0 0.0
    %1538 = vmatprep.subr.mxu0 0.0
    %1539 = vmatpush2.msra.mxu0 0.0
    %1540 = vmatprep.subr.mxu0 0.0
    %1541 = vmatpush2.msra.mxu0 0.0
    %1542 = vmatprep.subr.mxu0 0.0
    %1543 = vmatpush2.msra.mxu0 0.0
    %1544 = vmatprep.subr.mxu0 0.0
    %1545 = vmatpush2.msra.mxu0 0.0
    %1546 = vmatprep.subr.mxu0 0.0
    %1547 = vmatpush2.msra.mxu0 0.0
    %1548 = vmatprep.subr.mxu0 0.0
    %1549 = vmatpush2.msra.mxu0 0.0
    %1550 = vmatprep.subr.mxu0 0.0
    %1551 = vmatpush2.msra.mxu0 0.0
    %1552 = vmatprep.mubr.f32.mxu0 0.0
    %1553 = vmatmul.mubr.f32.gmra.mxu0 %v1483
    %v1554 = vpop.f32.mrf.mxu0
    %v1555 = vadd.f32 0.0, %v1554
    %v1556 = vpop.f32.mrf.mxu0
    %1557 = vmatprep.mubr.f32.mxu0 0.0
    %1558 = vmatmul.mubr.f32.gmra.mxu0 %v1486
    %v1559 = vpop.f32.mrf.mxu0
    %v1560 = vadd.f32 0.0, %v1559
    %v1561 = vpop.f32.mrf.mxu0
    %1562 = vdwg.mxu0
    %1563 = vrot.lane.b32.xlu0 %v243, 96
    %v1564 = vpop.permute.xlu0 %1563
    %1565 = vrot.lane.b32.xlu0 %v249, 96
    %v1566 = vpop.permute.xlu0 %1565
    %1567 = vrot.lane.b32.xlu0 %v243, 32
    %v1568 = vpop.permute.xlu0 %1567
    %1569 = vrot.lane.b32.xlu0 %v249, 32
    %v1570 = vpop.permute.xlu0 %1569
    %v1571 = vsel %vm259, %v1564, 0
    %v1573 = vsel %vm259, %v1566, 0
    %v1575 = vsel %vm259, %v1568, 0
    %v1577 = vsel %vm259, %v1570, 0
    %1579 = vmatprep.subr.mxu0 0.0
    %1580 = vmatpush1.xpose.msra.mxu0 0.0
    %1581 = vmatprep.subr.mxu0 0.0
    %1582 = vmatpush1.xpose.msra.mxu0 0.0
    %1583 = vmatprep.subr.mxu0 0.0
    %1584 = vmatpush1.xpose.msra.mxu0 0.0
    %1585 = vmatprep.subr.mxu0 0.0
    %1586 = vmatpush1.xpose.msra.mxu0 0.0
    %1587 = vmatprep.subr.mxu0 0.0
    %1588 = vmatpush1.xpose.msra.mxu0 0.0
    %1589 = vmatprep.subr.mxu0 0.0
    %1590 = vmatpush1.xpose.msra.mxu0 0.0
    %1591 = vmatprep.subr.mxu0 0.0
    %1592 = vmatpush1.xpose.msra.mxu0 0.0
    %1593 = vmatprep.subr.mxu0 0.0
    %1594 = vmatpush1.xpose.msra.mxu0 0.0
    %1595 = vmatprep.subr.mxu0 0.0
    %1596 = vmatpush1.xpose.msra.mxu0 0.0
    %1597 = vmatprep.subr.mxu0 0.0
    %1598 = vmatpush1.xpose.msra.mxu0 0.0
    %1599 = vmatprep.subr.mxu0 0.0
    %1600 = vmatpush1.xpose.msra.mxu0 0.0
    %1601 = vmatprep.subr.mxu0 0.0
    %1602 = vmatpush1.xpose.msra.mxu0 0.0
    %1603 = vmatprep.subr.mxu0 0.0
    %1604 = vmatpush1.xpose.msra.mxu0 0.0
    %1605 = vmatprep.subr.mxu0 0.0
    %1606 = vmatpush1.xpose.msra.mxu0 0.0
    %1607 = vmatprep.subr.mxu0 0.0
    %1608 = vmatpush1.xpose.msra.mxu0 %v1577
    %1609 = vmatprep.subr.mxu0 0.0
    %1610 = vmatpush1.xpose.msra.mxu0 %v1575
    %1611 = vmatprep.subr.mxu0 0.0
    %1612 = vmatpush2.xpose.msra.mxu0 0.0
    %1613 = vmatprep.subr.mxu0 0.0
    %1614 = vmatpush2.xpose.msra.mxu0 0.0
    %1615 = vmatprep.subr.mxu0 0.0
    %1616 = vmatpush2.xpose.msra.mxu0 0.0
    %1617 = vmatprep.subr.mxu0 0.0
    %1618 = vmatpush2.xpose.msra.mxu0 0.0
    %1619 = vmatprep.subr.mxu0 0.0
    %1620 = vmatpush2.xpose.msra.mxu0 0.0
    %1621 = vmatprep.subr.mxu0 0.0
    %1622 = vmatpush2.xpose.msra.mxu0 0.0
    %1623 = vmatprep.subr.mxu0 0.0
    %1624 = vmatpush2.xpose.msra.mxu0 0.0
    %1625 = vmatprep.subr.mxu0 0.0
    %1626 = vmatpush2.xpose.msra.mxu0 0.0
    %1627 = vmatprep.subr.mxu0 0.0
    %1628 = vmatpush2.xpose.msra.mxu0 0.0
    %1629 = vmatprep.subr.mxu0 0.0
    %1630 = vmatpush2.xpose.msra.mxu0 0.0
    %1631 = vmatprep.subr.mxu0 0.0
    %1632 = vmatpush2.xpose.msra.mxu0 0.0
    %1633 = vmatprep.subr.mxu0 0.0
    %1634 = vmatpush2.xpose.msra.mxu0 0.0
    %1635 = vmatprep.subr.mxu0 0.0
    %1636 = vmatpush2.xpose.msra.mxu0 0.0
    %1637 = vmatprep.subr.mxu0 0.0
    %1638 = vmatpush2.xpose.msra.mxu0 0.0
    %1639 = vmatprep.subr.mxu0 0.0
    %1640 = vmatpush2.xpose.msra.mxu0 0.0
    %1641 = vmatprep.subr.mxu0 0.0
    %1642 = vmatpush2.xpose.msra.mxu0 0.0
    %1643 = vmatprep.mubr.f32.mxu0 0.0
    %1644 = vmatmul.mubr.f32.gmra.mxu0 %v1571
    %v1645 = vpop.f32.mrf.mxu0
    %v1646 = vadd.f32 0.0, %v1645
    %v1647 = vpop.f32.mrf.mxu0
    %1648 = vmatprep.mubr.f32.mxu0 0.0
    %1649 = vmatmul.mubr.f32.gmra.mxu0 %v1573
    %v1650 = vpop.f32.mrf.mxu0
    %v1651 = vadd.f32 0.0, %v1650
    %v1652 = vpop.f32.mrf.mxu0
    %1653 = vdwg.mxu0
    %v1654 = vsel %vm259, %v1646, -inf
    %1655 = vmax.xlane.f32.xlu0 %v1654
    %v1656 = vpop.xlane.xlu0 %1655
    %v1657 = vsel %vm259, %v1651, -inf
    %1658 = vmax.xlane.f32.xlu0 %v1657
    %v1659 = vpop.xlane.xlu0 %1658
    %v1660 = vsub.f32 %v1646, %v1656
    %v1661 = vsub.f32 %v1651, %v1659
    %v1662 = vmul.f32 %v1660, 1.442695
    %v1663 = vpow.pop %v1662
    %v1664 = vmul.f32 %v1661, 1.442695
    %v1665 = vpow.pop %v1664
    %v1666 = vsel %vm259, %v1663, 0.0
    %1667 = vadd.xlane.f32.xlu0 %v1666
    %v1668 = vpop.xlane.xlu0 %1667
    %v1669 = vsel %vm259, %v1665, 0.0
    %1670 = vadd.xlane.f32.xlu0 %v1669
    %v1671 = vpop.xlane.xlu0 %1670
    %v1672 = vrcp.pop %v1668
    %v1673 = vrcp.pop %v1671
    %v1674 = vmul.f32 %v1663, %v1672
    %v1675 = vmul.f32 %v1665, %v1673
    %1676 = vrot.lane.b32.xlu0 %v245, 96
    %v1677 = vpop.permute.xlu0 %1676
    %1678 = vrot.lane.b32.xlu0 %v251, 96
    %v1679 = vpop.permute.xlu0 %1678
    %v1683 = vsel %vm259, %v1674, 0
    %v1686 = vsel %vm259, %v1675, 0
    %1688 = vmatprep.subr.mxu0 0.0
    %1689 = vmatpush1.msra.mxu0 0.0
    %1690 = vmatprep.subr.mxu0 0.0
    %1691 = vmatpush1.msra.mxu0 0.0
    %1692 = vmatprep.subr.mxu0 0.0
    %1693 = vmatpush1.msra.mxu0 0.0
    %1694 = vmatprep.subr.mxu0 0.0
    %1695 = vmatpush1.msra.mxu0 0.0
    %1696 = vmatprep.subr.mxu0 0.0
    %1697 = vmatpush1.msra.mxu0 0.0
    %1698 = vmatprep.subr.mxu0 0.0
    %1699 = vmatpush1.msra.mxu0 0.0
    %1700 = vmatprep.subr.mxu0 0.0
    %1701 = vmatpush1.msra.mxu0 0.0
    %1702 = vmatprep.subr.mxu0 0.0
    %1703 = vmatpush1.msra.mxu0 0.0
    %1704 = vmatprep.subr.mxu0 0.0
    %1705 = vmatpush1.msra.mxu0 0.0
    %1706 = vmatprep.subr.mxu0 0.0
    %1707 = vmatpush1.msra.mxu0 0.0
    %1708 = vmatprep.subr.mxu0 0.0
    %1709 = vmatpush1.msra.mxu0 0.0
    %1710 = vmatprep.subr.mxu0 0.0
    %1711 = vmatpush1.msra.mxu0 0.0
    %1712 = vmatprep.subr.mxu0 0.0
    %1713 = vmatpush1.msra.mxu0 0.0
    %1714 = vmatprep.subr.mxu0 0.0
    %1715 = vmatpush1.msra.mxu0 0.0
    %1716 = vmatprep.subr.mxu0 0.0
    %1717 = vmatpush1.msra.mxu0 %v1679
    %1718 = vmatprep.subr.mxu0 0.0
    %1719 = vmatpush1.msra.mxu0 %v1677
    %1720 = vmatprep.subr.mxu0 0.0
    %1721 = vmatpush2.msra.mxu0 0.0
    %1722 = vmatprep.subr.mxu0 0.0
    %1723 = vmatpush2.msra.mxu0 0.0
    %1724 = vmatprep.subr.mxu0 0.0
    %1725 = vmatpush2.msra.mxu0 0.0
    %1726 = vmatprep.subr.mxu0 0.0
    %1727 = vmatpush2.msra.mxu0 0.0
    %1728 = vmatprep.subr.mxu0 0.0
    %1729 = vmatpush2.msra.mxu0 0.0
    %1730 = vmatprep.subr.mxu0 0.0
    %1731 = vmatpush2.msra.mxu0 0.0
    %1732 = vmatprep.subr.mxu0 0.0
    %1733 = vmatpush2.msra.mxu0 0.0
    %1734 = vmatprep.subr.mxu0 0.0
    %1735 = vmatpush2.msra.mxu0 0.0
    %1736 = vmatprep.subr.mxu0 0.0
    %1737 = vmatpush2.msra.mxu0 0.0
    %1738 = vmatprep.subr.mxu0 0.0
    %1739 = vmatpush2.msra.mxu0 0.0
    %1740 = vmatprep.subr.mxu0 0.0
    %1741 = vmatpush2.msra.mxu0 0.0
    %1742 = vmatprep.subr.mxu0 0.0
    %1743 = vmatpush2.msra.mxu0 0.0
    %1744 = vmatprep.subr.mxu0 0.0
    %1745 = vmatpush2.msra.mxu0 0.0
    %1746 = vmatprep.subr.mxu0 0.0
    %1747 = vmatpush2.msra.mxu0 0.0
    %1748 = vmatprep.subr.mxu0 0.0
    %1749 = vmatpush2.msra.mxu0 0.0
    %1750 = vmatprep.subr.mxu0 0.0
    %1751 = vmatpush2.msra.mxu0 0.0
    %1752 = vmatprep.mubr.f32.mxu0 0.0
    %1753 = vmatmul.mubr.f32.gmra.mxu0 %v1683
    %v1754 = vpop.f32.mrf.mxu0
    %v1755 = vadd.f32 0.0, %v1754
    %v1756 = vpop.f32.mrf.mxu0
    %1757 = vmatprep.mubr.f32.mxu0 0.0
    %1758 = vmatmul.mubr.f32.gmra.mxu0 %v1686
    %v1759 = vpop.f32.mrf.mxu0
    %v1760 = vadd.f32 0.0, %v1759
    %v1761 = vpop.f32.mrf.mxu0
    %1762 = vdwg.mxu0
    %1763 = vrot.lane.b32.xlu0 %v243, 80
    %v1764 = vpop.permute.xlu0 %1763
    %1765 = vrot.lane.b32.xlu0 %v249, 80
    %v1766 = vpop.permute.xlu0 %1765
    %1767 = vrot.lane.b32.xlu0 %v243, 16
    %v1768 = vpop.permute.xlu0 %1767
    %1769 = vrot.lane.b32.xlu0 %v249, 16
    %v1770 = vpop.permute.xlu0 %1769
    %v1771 = vsel %vm259, %v1764, 0
    %v1773 = vsel %vm259, %v1766, 0
    %v1775 = vsel %vm259, %v1768, 0
    %v1777 = vsel %vm259, %v1770, 0
    %1779 = vmatprep.subr.mxu0 0.0
    %1780 = vmatpush1.xpose.msra.mxu0 0.0
    %1781 = vmatprep.subr.mxu0 0.0
    %1782 = vmatpush1.xpose.msra.mxu0 0.0
    %1783 = vmatprep.subr.mxu0 0.0
    %1784 = vmatpush1.xpose.msra.mxu0 0.0
    %1785 = vmatprep.subr.mxu0 0.0
    %1786 = vmatpush1.xpose.msra.mxu0 0.0
    %1787 = vmatprep.subr.mxu0 0.0
    %1788 = vmatpush1.xpose.msra.mxu0 0.0
    %1789 = vmatprep.subr.mxu0 0.0
    %1790 = vmatpush1.xpose.msra.mxu0 0.0
    %1791 = vmatprep.subr.mxu0 0.0
    %1792 = vmatpush1.xpose.msra.mxu0 0.0
    %1793 = vmatprep.subr.mxu0 0.0
    %1794 = vmatpush1.xpose.msra.mxu0 0.0
    %1795 = vmatprep.subr.mxu0 0.0
    %1796 = vmatpush1.xpose.msra.mxu0 0.0
    %1797 = vmatprep.subr.mxu0 0.0
    %1798 = vmatpush1.xpose.msra.mxu0 0.0
    %1799 = vmatprep.subr.mxu0 0.0
    %1800 = vmatpush1.xpose.msra.mxu0 0.0
    %1801 = vmatprep.subr.mxu0 0.0
    %1802 = vmatpush1.xpose.msra.mxu0 0.0
    %1803 = vmatprep.subr.mxu0 0.0
    %1804 = vmatpush1.xpose.msra.mxu0 0.0
    %1805 = vmatprep.subr.mxu0 0.0
    %1806 = vmatpush1.xpose.msra.mxu0 0.0
    %1807 = vmatprep.subr.mxu0 0.0
    %1808 = vmatpush1.xpose.msra.mxu0 %v1777
    %1809 = vmatprep.subr.mxu0 0.0
    %1810 = vmatpush1.xpose.msra.mxu0 %v1775
    %1811 = vmatprep.subr.mxu0 0.0
    %1812 = vmatpush2.xpose.msra.mxu0 0.0
    %1813 = vmatprep.subr.mxu0 0.0
    %1814 = vmatpush2.xpose.msra.mxu0 0.0
    %1815 = vmatprep.subr.mxu0 0.0
    %1816 = vmatpush2.xpose.msra.mxu0 0.0
    %1817 = vmatprep.subr.mxu0 0.0
    %1818 = vmatpush2.xpose.msra.mxu0 0.0
    %1819 = vmatprep.subr.mxu0 0.0
    %1820 = vmatpush2.xpose.msra.mxu0 0.0
    %1821 = vmatprep.subr.mxu0 0.0
    %1822 = vmatpush2.xpose.msra.mxu0 0.0
    %1823 = vmatprep.subr.mxu0 0.0
    %1824 = vmatpush2.xpose.msra.mxu0 0.0
    %1825 = vmatprep.subr.mxu0 0.0
    %1826 = vmatpush2.xpose.msra.mxu0 0.0
    %1827 = vmatprep.subr.mxu0 0.0
    %1828 = vmatpush2.xpose.msra.mxu0 0.0
    %1829 = vmatprep.subr.mxu0 0.0
    %1830 = vmatpush2.xpose.msra.mxu0 0.0
    %1831 = vmatprep.subr.mxu0 0.0
    %1832 = vmatpush2.xpose.msra.mxu0 0.0
    %1833 = vmatprep.subr.mxu0 0.0
    %1834 = vmatpush2.xpose.msra.mxu0 0.0
    %1835 = vmatprep.subr.mxu0 0.0
    %1836 = vmatpush2.xpose.msra.mxu0 0.0
    %1837 = vmatprep.subr.mxu0 0.0
    %1838 = vmatpush2.xpose.msra.mxu0 0.0
    %1839 = vmatprep.subr.mxu0 0.0
    %1840 = vmatpush2.xpose.msra.mxu0 0.0
    %1841 = vmatprep.subr.mxu0 0.0
    %1842 = vmatpush2.xpose.msra.mxu0 0.0
    %1843 = vmatprep.mubr.f32.mxu0 0.0
    %1844 = vmatmul.mubr.f32.gmra.mxu0 %v1771
    %v1845 = vpop.f32.mrf.mxu0
    %v1846 = vadd.f32 0.0, %v1845
    %v1847 = vpop.f32.mrf.mxu0
    %1848 = vmatprep.mubr.f32.mxu0 0.0
    %1849 = vmatmul.mubr.f32.gmra.mxu0 %v1773
    %v1850 = vpop.f32.mrf.mxu0
    %v1851 = vadd.f32 0.0, %v1850
    %v1852 = vpop.f32.mrf.mxu0
    %1853 = vdwg.mxu0
    %v1854 = vsel %vm259, %v1846, -inf
    %1855 = vmax.xlane.f32.xlu0 %v1854
    %v1856 = vpop.xlane.xlu0 %1855
    %v1857 = vsel %vm259, %v1851, -inf
    %1858 = vmax.xlane.f32.xlu0 %v1857
    %v1859 = vpop.xlane.xlu0 %1858
    %v1860 = vsub.f32 %v1846, %v1856
    %v1861 = vsub.f32 %v1851, %v1859
    %v1862 = vmul.f32 %v1860, 1.442695
    %v1863 = vpow.pop %v1862
    %v1864 = vmul.f32 %v1861, 1.442695
    %v1865 = vpow.pop %v1864
    %v1866 = vsel %vm259, %v1863, 0.0
    %1867 = vadd.xlane.f32.xlu0 %v1866
    %v1868 = vpop.xlane.xlu0 %1867
    %v1869 = vsel %vm259, %v1865, 0.0
    %1870 = vadd.xlane.f32.xlu0 %v1869
    %v1871 = vpop.xlane.xlu0 %1870
    %v1872 = vrcp.pop %v1868
    %v1873 = vrcp.pop %v1871
    %v1874 = vmul.f32 %v1863, %v1872
    %v1875 = vmul.f32 %v1865, %v1873
    %1876 = vrot.lane.b32.xlu0 %v245, 80
    %v1877 = vpop.permute.xlu0 %1876
    %1878 = vrot.lane.b32.xlu0 %v251, 80
    %v1879 = vpop.permute.xlu0 %1878
    %v1883 = vsel %vm259, %v1874, 0
    %v1886 = vsel %vm259, %v1875, 0
    %1888 = vmatprep.subr.mxu0 0.0
    %1889 = vmatpush1.msra.mxu0 0.0
    %1890 = vmatprep.subr.mxu0 0.0
    %1891 = vmatpush1.msra.mxu0 0.0
    %1892 = vmatprep.subr.mxu0 0.0
    %1893 = vmatpush1.msra.mxu0 0.0
    %1894 = vmatprep.subr.mxu0 0.0
    %1895 = vmatpush1.msra.mxu0 0.0
    %1896 = vmatprep.subr.mxu0 0.0
    %1897 = vmatpush1.msra.mxu0 0.0
    %1898 = vmatprep.subr.mxu0 0.0
    %1899 = vmatpush1.msra.mxu0 0.0
    %1900 = vmatprep.subr.mxu0 0.0
    %1901 = vmatpush1.msra.mxu0 0.0
    %1902 = vmatprep.subr.mxu0 0.0
    %1903 = vmatpush1.msra.mxu0 0.0
    %1904 = vmatprep.subr.mxu0 0.0
    %1905 = vmatpush1.msra.mxu0 0.0
    %1906 = vmatprep.subr.mxu0 0.0
    %1907 = vmatpush1.msra.mxu0 0.0
    %1908 = vmatprep.subr.mxu0 0.0
    %1909 = vmatpush1.msra.mxu0 0.0
    %1910 = vmatprep.subr.mxu0 0.0
    %1911 = vmatpush1.msra.mxu0 0.0
    %1912 = vmatprep.subr.mxu0 0.0
    %1913 = vmatpush1.msra.mxu0 0.0
    %1914 = vmatprep.subr.mxu0 0.0
    %1915 = vmatpush1.msra.mxu0 0.0
    %1916 = vmatprep.subr.mxu0 0.0
    %1917 = vmatpush1.msra.mxu0 %v1879
    %1918 = vmatprep.subr.mxu0 0.0
    %1919 = vmatpush1.msra.mxu0 %v1877
    %1920 = vmatprep.subr.mxu0 0.0
    %1921 = vmatpush2.msra.mxu0 0.0
    %1922 = vmatprep.subr.mxu0 0.0
    %1923 = vmatpush2.msra.mxu0 0.0
    %1924 = vmatprep.subr.mxu0 0.0
    %1925 = vmatpush2.msra.mxu0 0.0
    %1926 = vmatprep.subr.mxu0 0.0
    %1927 = vmatpush2.msra.mxu0 0.0
    %1928 = vmatprep.subr.mxu0 0.0
    %1929 = vmatpush2.msra.mxu0 0.0
    %1930 = vmatprep.subr.mxu0 0.0
    %1931 = vmatpush2.msra.mxu0 0.0
    %1932 = vmatprep.subr.mxu0 0.0
    %1933 = vmatpush2.msra.mxu0 0.0
    %1934 = vmatprep.subr.mxu0 0.0
    %1935 = vmatpush2.msra.mxu0 0.0
    %1936 = vmatprep.subr.mxu0 0.0
    %1937 = vmatpush2.msra.mxu0 0.0
    %1938 = vmatprep.subr.mxu0 0.0
    %1939 = vmatpush2.msra.mxu0 0.0
    %1940 = vmatprep.subr.mxu0 0.0
    %1941 = vmatpush2.msra.mxu0 0.0
    %1942 = vmatprep.subr.mxu0 0.0
    %1943 = vmatpush2.msra.mxu0 0.0
    %1944 = vmatprep.subr.mxu0 0.0
    %1945 = vmatpush2.msra.mxu0 0.0
    %1946 = vmatprep.subr.mxu0 0.0
    %1947 = vmatpush2.msra.mxu0 0.0
    %1948 = vmatprep.subr.mxu0 0.0
    %1949 = vmatpush2.msra.mxu0 0.0
    %1950 = vmatprep.subr.mxu0 0.0
    %1951 = vmatpush2.msra.mxu0 0.0
    %1952 = vmatprep.mubr.f32.mxu0 0.0
    %1953 = vmatmul.mubr.f32.gmra.mxu0 %v1883
    %v1954 = vpop.f32.mrf.mxu0
    %v1955 = vadd.f32 0.0, %v1954
    %v1956 = vpop.f32.mrf.mxu0
    %1957 = vmatprep.mubr.f32.mxu0 0.0
    %1958 = vmatmul.mubr.f32.gmra.mxu0 %v1886
    %v1959 = vpop.f32.mrf.mxu0
    %v1960 = vadd.f32 0.0, %v1959
    %v1961 = vpop.f32.mrf.mxu0
    %1962 = vdwg.mxu0
    %1965 = vrot.lane.b32.xlu0 %v1555, 16
    %v1966 = vpop.permute.xlu0 %1965
    %1967 = vrot.lane.b32.xlu0 %v1560, 16
    %v1968 = vpop.permute.xlu0 %1967
    %1973 = vrot.lane.b32.xlu0 %v1755, 32
    %v1974 = vpop.permute.xlu0 %1973
    %1975 = vrot.lane.b32.xlu0 %v1760, 32
    %v1976 = vpop.permute.xlu0 %1975
    %1981 = vrot.lane.b32.xlu0 %v1955, 48
    %v1982 = vpop.permute.xlu0 %1981
    %1983 = vrot.lane.b32.xlu0 %v1960, 48
    %v1984 = vpop.permute.xlu0 %1983
    %v1987 = vsel %vm259, %v1353, %v1966
    %v1988 = vsel %vm259, %v1358, %v1968
    %v1989 = vsel %vm1074, %v1987, %v1974
    %v1990 = vsel %vm1074, %v1988, %v1976
    %v1991 = vsel %vm1077, %v1989, %v1982
    %v1992 = vsel %vm1077, %v1990, %v1984
    %v1994 = vsel %vm151, %v1991, 0
    %v1997 = vsel %vm151, %v1992, 0
    %1999 = vmatprep.subr.mxu0 0.0
    %2000 = vmatpush1.msra.mxu0 0.0
    %2001 = vmatprep.subr.mxu0 0.0
    %2002 = vmatpush1.msra.mxu0 0.0
    %2003 = vmatprep.subr.mxu0 0.0
    %2004 = vmatpush1.msra.mxu0 0.0
    %2005 = vmatprep.subr.mxu0 0.0
    %2006 = vmatpush1.msra.mxu0 0.0
    %2007 = vmatprep.subr.mxu0 0.0
    %2008 = vmatpush1.msra.mxu0 0.0
    %2009 = vmatprep.subr.mxu0 0.0
    %2010 = vmatpush1.msra.mxu0 0.0
    %2011 = vmatprep.subr.mxu0 0.0
    %2012 = vmatpush1.msra.mxu0 0.0
    %2013 = vmatprep.subr.mxu0 0.0
    %2014 = vmatpush1.msra.mxu0 0.0
    %2015 = vmatprep.subr.mxu0 0.0
    %2016 = vmatpush1.msra.mxu0 %v1087
    %2017 = vmatprep.subr.mxu0 0.0
    %2018 = vmatpush1.msra.mxu0 %v1086
    %2019 = vmatprep.subr.mxu0 0.0
    %2020 = vmatpush1.msra.mxu0 %v1085
    %2021 = vmatprep.subr.mxu0 0.0
    %2022 = vmatpush1.msra.mxu0 %v1084
    %2023 = vmatprep.subr.mxu0 0.0
    %2024 = vmatpush1.msra.mxu0 %v1083
    %2025 = vmatprep.subr.mxu0 0.0
    %2026 = vmatpush1.msra.mxu0 %v1082
    %2027 = vmatprep.subr.mxu0 0.0
    %2028 = vmatpush1.msra.mxu0 %v1081
    %2029 = vmatprep.subr.mxu0 0.0
    %2030 = vmatpush1.msra.mxu0 %v1080
    %2031 = vmatprep.subr.mxu0 0.0
    %2032 = vmatpush2.msra.mxu0 0.0
    %2033 = vmatprep.subr.mxu0 0.0
    %2034 = vmatpush2.msra.mxu0 0.0
    %2035 = vmatprep.subr.mxu0 0.0
    %2036 = vmatpush2.msra.mxu0 0.0
    %2037 = vmatprep.subr.mxu0 0.0
    %2038 = vmatpush2.msra.mxu0 0.0
    %2039 = vmatprep.subr.mxu0 0.0
    %2040 = vmatpush2.msra.mxu0 0.0
    %2041 = vmatprep.subr.mxu0 0.0
    %2042 = vmatpush2.msra.mxu0 0.0
    %2043 = vmatprep.subr.mxu0 0.0
    %2044 = vmatpush2.msra.mxu0 0.0
    %2045 = vmatprep.subr.mxu0 0.0
    %2046 = vmatpush2.msra.mxu0 0.0
    %2047 = vmatprep.subr.mxu0 0.0
    %2048 = vmatpush2.msra.mxu0 0.0
    %2049 = vmatprep.subr.mxu0 0.0
    %2050 = vmatpush2.msra.mxu0 0.0
    %2051 = vmatprep.subr.mxu0 0.0
    %2052 = vmatpush2.msra.mxu0 0.0
    %2053 = vmatprep.subr.mxu0 0.0
    %2054 = vmatpush2.msra.mxu0 0.0
    %2055 = vmatprep.subr.mxu0 0.0
    %2056 = vmatpush2.msra.mxu0 0.0
    %2057 = vmatprep.subr.mxu0 0.0
    %2058 = vmatpush2.msra.mxu0 0.0
    %2059 = vmatprep.subr.mxu0 0.0
    %2060 = vmatpush2.msra.mxu0 0.0
    %2061 = vmatprep.subr.mxu0 0.0
    %2062 = vmatpush2.msra.mxu0 0.0
    %2063 = vmatprep.mubr.f32.mxu0 0.0
    %2064 = vmatmul.mubr.f32.gmra.mxu0 %v1994
    %v2065 = vpop.f32.mrf.mxu0
    %v2066 = vadd.f32 0.0, %v2065
    %v2067 = vpop.f32.mrf.mxu0
    %2068 = vmatprep.mubr.f32.mxu0 0.0
    %2069 = vmatmul.mubr.f32.gmra.mxu0 %v1997
    %v2070 = vpop.f32.mrf.mxu0
    %v2071 = vadd.f32 0.0, %v2070
    %v2072 = vpop.f32.mrf.mxu0
    %2073 = vdwg.mxu0
    %v2074 = vld [vmem:[%s4] sm:$0x1]
    %v2076 = vlaneseq
    %v2077 = vshrl.u32 %v2076, 7
    %v2078 = vsub.s32 0, %v2077
    %v2079 = vrot.slane %v2074, %v2078
    %v2081 = vadd.f32 %v1161, %v2079
    %v2082 = vadd.f32 %v1166, %v2079
    %v2083 = vadd.f32 %v2066, %v2079
    %v2084 = vadd.f32 %v2071, %v2079
    %v2085 = vadd.f32 %v119, %v2081
    %v2086 = vadd.f32 %v120, %v2082
    %v2087 = vadd.f32 %v121, %v2083
    %v2088 = vadd.f32 %v122, %v2084
    %v2089 = vld [vmem:[%s5] sm:$0x1]
    %v2090 = vld [vmem:[%s6] sm:$0x1]
    %v2091 = vsel %vm151, %v2085, 0.0
    %2092 = vadd.xlane.f32.xlu0 %v2091
    %v2093 = vpop.xlane.xlu0 %2092
    %v2094 = vsel %vm151, %v2086, 0.0
    %2095 = vadd.xlane.f32.xlu0 %v2094
    %v2096 = vpop.xlane.xlu0 %2095
    %v2097 = vsel %vm151, %v2087, 0.0
    %2098 = vadd.xlane.f32.xlu0 %v2097
    %v2099 = vpop.xlane.xlu0 %2098
    %v2100 = vsel %vm151, %v2088, 0.0
    %2101 = vadd.xlane.f32.xlu0 %v2100
    %v2102 = vpop.xlane.xlu0 %2101
    %v2103 = vrcp.pop 64.0
    %v2104 = vmul.f32 %v2093, %v2103
    %v2105 = vmul.f32 %v2096, %v2103
    %v2106 = vmul.f32 %v2099, %v2103
    %v2107 = vmul.f32 %v2102, %v2103
    %v2108 = vsub.f32 %v2085, %v2104
    %v2109 = vsub.f32 %v2086, %v2105
    %v2110 = vsub.f32 %v2087, %v2106
    %v2111 = vsub.f32 %v2088, %v2107
    %v2112 = vmul.f32 %v2108, %v2108
    %v2113 = vmul.f32 %v2109, %v2109
    %v2114 = vmul.f32 %v2110, %v2110
    %v2115 = vmul.f32 %v2111, %v2111
    %v2116 = vsel %vm151, %v2112, 0.0
    %2117 = vadd.xlane.f32.xlu0 %v2116
    %v2118 = vpop.xlane.xlu0 %2117
    %v2119 = vsel %vm151, %v2113, 0.0
    %2120 = vadd.xlane.f32.xlu0 %v2119
    %v2121 = vpop.xlane.xlu0 %2120
    %v2122 = vsel %vm151, %v2114, 0.0
    %2123 = vadd.xlane.f32.xlu0 %v2122
    %v2124 = vpop.xlane.xlu0 %2123
    %v2125 = vsel %vm151, %v2115, 0.0
    %2126 = vadd.xlane.f32.xlu0 %v2125
    %v2127 = vpop.xlane.xlu0 %2126
    %v2128 = vmul.f32 %v2118, %v2103
    %v2129 = vmul.f32 %v2121, %v2103
    %v2130 = vmul.f32 %v2124, %v2103
    %v2131 = vmul.f32 %v2127, %v2103
    %v2132 = vadd.f32 %v2128, 1e-05
    %v2133 = vadd.f32 %v2129, 1e-05
    %v2134 = vadd.f32 %v2130, 1e-05
    %v2135 = vadd.f32 %v2131, 1e-05
    %v2136 = vrsqrt.pop %v2132
    %v2137 = vrsqrt.pop %v2133
    %v2138 = vrsqrt.pop %v2134
    %v2139 = vrsqrt.pop %v2135
    %v2140 = vmul.f32 %v2108, %v2136
    %v2141 = vmul.f32 %v2109, %v2137
    %v2142 = vmul.f32 %v2110, %v2138
    %v2143 = vmul.f32 %v2111, %v2139
    %v2145 = vlaneseq
    %v2146 = vshrl.u32 %v2145, 7
    %v2147 = vsub.s32 0, %v2146
    %v2148 = vrot.slane %v2089, %v2147
    %v2150 = vmul.f32 %v2140, %v2148
    %v2151 = vmul.f32 %v2141, %v2148
    %v2152 = vmul.f32 %v2142, %v2148
    %v2153 = vmul.f32 %v2143, %v2148
    %v2155 = vlaneseq
    %v2156 = vshrl.u32 %v2155, 7
    %v2157 = vsub.s32 0, %v2156
    %v2158 = vrot.slane %v2090, %v2157
    %v2160 = vadd.f32 %v2150, %v2158
    %v2161 = vadd.f32 %v2151, %v2158
    %v2162 = vadd.f32 %v2152, %v2158
    %v2163 = vadd.f32 %v2153, %v2158
    %v2164 = vld [vmem:[#allocation8] sm:$0xff]
    %v2165 = vld [vmem:[#allocation8 + $0x8] sm:$0xff]
    %v2166 = vld [vmem:[#allocation8 + $0x10] sm:$0xff]
    %v2167 = vld [vmem:[#allocation8 + $0x18] sm:$0xff]
    %v2168 = vld [vmem:[#allocation8 + $0x20] sm:$0xff]
    %v2169 = vld [vmem:[#allocation8 + $0x28] sm:$0xff]
    %v2170 = vld [vmem:[#allocation8 + $0x30] sm:$0xff]
    %v2171 = vld [vmem:[#allocation8 + $0x38] sm:$0xff]
    %v2172 = vld [vmem:[%s8] sm:$0x1]
    %v2174 = vlaneseq
    %v2175 = vshrl.u32 %v2174, 7
    %v2176 = vsub.s32 0, %v2175
    %v2177 = vrot.slane %v2172, %v2176
    %v2180 = vsel %vm151, %v2160, 0
    %v2183 = vsel %vm151, %v2161, 0
    %v2186 = vsel %vm151, %v2162, 0
    %v2189 = vsel %vm151, %v2163, 0
    %2191 = vmatprep.subr.mxu0 0.0
    %2192 = vmatpush1.msra.mxu0 0.0
    %2193 = vmatprep.subr.mxu0 0.0
    %2194 = vmatpush1.msra.mxu0 0.0
    %2195 = vmatprep.subr.mxu0 0.0
    %2196 = vmatpush1.msra.mxu0 0.0
    %2197 = vmatprep.subr.mxu0 0.0
    %2198 = vmatpush1.msra.mxu0 0.0
    %2199 = vmatprep.subr.mxu0 0.0
    %2200 = vmatpush1.msra.mxu0 0.0
    %2201 = vmatprep.subr.mxu0 0.0
    %2202 = vmatpush1.msra.mxu0 0.0
    %2203 = vmatprep.subr.mxu0 0.0
    %2204 = vmatpush1.msra.mxu0 0.0
    %2205 = vmatprep.subr.mxu0 0.0
    %2206 = vmatpush1.msra.mxu0 0.0
    %2207 = vmatprep.subr.mxu0 0.0
    %2208 = vmatpush1.msra.mxu0 %v2171
    %2209 = vmatprep.subr.mxu0 0.0
    %2210 = vmatpush1.msra.mxu0 %v2170
    %2211 = vmatprep.subr.mxu0 0.0
    %2212 = vmatpush1.msra.mxu0 %v2169
    %2213 = vmatprep.subr.mxu0 0.0
    %2214 = vmatpush1.msra.mxu0 %v2168
    %2215 = vmatprep.subr.mxu0 0.0
    %2216 = vmatpush1.msra.mxu0 %v2167
    %2217 = vmatprep.subr.mxu0 0.0
    %2218 = vmatpush1.msra.mxu0 %v2166
    %2219 = vmatprep.subr.mxu0 0.0
    %2220 = vmatpush1.msra.mxu0 %v2165
    %2221 = vmatprep.subr.mxu0 0.0
    %2222 = vmatpush1.msra.mxu0 %v2164
    %2223 = vmatprep.subr.mxu0 0.0
    %2224 = vmatpush2.msra.mxu0 0.0
    %2225 = vmatprep.subr.mxu0 0.0
    %2226 = vmatpush2.msra.mxu0 0.0
    %2227 = vmatprep.subr.mxu0 0.0
    %2228 = vmatpush2.msra.mxu0 0.0
    %2229 = vmatprep.subr.mxu0 0.0
    %2230 = vmatpush2.msra.mxu0 0.0
    %2231 = vmatprep.subr.mxu0 0.0
    %2232 = vmatpush2.msra.mxu0 0.0
    %2233 = vmatprep.subr.mxu0 0.0
    %2234 = vmatpush2.msra.mxu0 0.0
    %2235 = vmatprep.subr.mxu0 0.0
    %2236 = vmatpush2.msra.mxu0 0.0
    %2237 = vmatprep.subr.mxu0 0.0
    %2238 = vmatpush2.msra.mxu0 0.0
    %2239 = vmatprep.subr.mxu0 0.0
    %2240 = vmatpush2.msra.mxu0 0.0
    %2241 = vmatprep.subr.mxu0 0.0
    %2242 = vmatpush2.msra.mxu0 0.0
    %2243 = vmatprep.subr.mxu0 0.0
    %2244 = vmatpush2.msra.mxu0 0.0
    %2245 = vmatprep.subr.mxu0 0.0
    %2246 = vmatpush2.msra.mxu0 0.0
    %2247 = vmatprep.subr.mxu0 0.0
    %2248 = vmatpush2.msra.mxu0 0.0
    %2249 = vmatprep.subr.mxu0 0.0
    %2250 = vmatpush2.msra.mxu0 0.0
    %2251 = vmatprep.subr.mxu0 0.0
    %2252 = vmatpush2.msra.mxu0 0.0
    %2253 = vmatprep.subr.mxu0 0.0
    %2254 = vmatpush2.msra.mxu0 0.0
    %2255 = vmatprep.mubr.f32.mxu0 0.0
    %2256 = vmatmul.mubr.f32.gmra.mxu0 %v2180
    %v2257 = vpop.f32.mrf.mxu0
    %v2258 = vadd.f32 %v2177, %v2257
    %v2259 = vpop.f32.mrf.mxu0
    %2260 = vmatprep.mubr.f32.mxu0 0.0
    %2261 = vmatmul.mubr.f32.gmra.mxu0 %v2183
    %v2262 = vpop.f32.mrf.mxu0
    %v2263 = vadd.f32 %v2177, %v2262
    %v2264 = vpop.f32.mrf.mxu0
    %2265 = vmatprep.mubr.f32.mxu0 0.0
    %2266 = vmatmul.mubr.f32.gmra.mxu0 %v2186
    %v2267 = vpop.f32.mrf.mxu0
    %v2268 = vadd.f32 %v2177, %v2267
    %v2269 = vpop.f32.mrf.mxu0
    %2270 = vmatprep.mubr.f32.mxu0 0.0
    %2271 = vmatmul.mubr.f32.gmra.mxu0 %v2189
    %v2272 = vpop.f32.mrf.mxu0
    %v2273 = vadd.f32 %v2177, %v2272
    %v2274 = vpop.f32.mrf.mxu0
    %2275 = vdwg.mxu0
    %v2276 = vmax.f32 %v2258, 0.0
    %v2277 = vmax.f32 %v2263, 0.0
    %v2278 = vmax.f32 %v2268, 0.0
    %v2279 = vmax.f32 %v2273, 0.0
    %v2280 = vld [vmem:[%s9] sm:$0xff]
    %v2281 = vld [vmem:[%s9 + $0x8] sm:$0xff]
    %v2282 = vld [vmem:[%s9 + $0x10] sm:$0xff]
    %v2283 = vld [vmem:[%s9 + $0x18] sm:$0xff]
    %v2284 = vld [vmem:[%s9 + $0x20] sm:$0xff]
    %v2285 = vld [vmem:[%s9 + $0x28] sm:$0xff]
    %v2286 = vld [vmem:[%s9 + $0x30] sm:$0xff]
    %v2287 = vld [vmem:[%s9 + $0x38] sm:$0xff]
    %v2288 = vld [vmem:[%s9 + $0x40] sm:$0xff]
    %v2289 = vld [vmem:[%s9 + $0x48] sm:$0xff]
    %v2290 = vld [vmem:[%s9 + $0x50] sm:$0xff]
    %v2291 = vld [vmem:[%s9 + $0x58] sm:$0xff]
    %v2292 = vld [vmem:[%s9 + $0x60] sm:$0xff]
    %v2293 = vld [vmem:[%s9 + $0x68] sm:$0xff]
    %v2294 = vld [vmem:[%s9 + $0x70] sm:$0xff]
    %v2295 = vld [vmem:[%s9 + $0x78] sm:$0xff]
    %v2296 = vld [vmem:[%s10] sm:$0x1]
    %v2298 = vlaneseq
    %v2299 = vshrl.u32 %v2298, 7
    %v2300 = vsub.s32 0, %v2299
    %v2301 = vrot.slane %v2296, %v2300
    %2303 = vmatprep.subr.mxu0 0.0
    %2304 = vmatpush1.msra.mxu0 %v2295
    %2305 = vmatprep.subr.mxu0 0.0
    %2306 = vmatpush1.msra.mxu0 %v2294
    %2307 = vmatprep.subr.mxu0 0.0
    %2308 = vmatpush1.msra.mxu0 %v2293
    %2309 = vmatprep.subr.mxu0 0.0
    %2310 = vmatpush1.msra.mxu0 %v2292
    %2311 = vmatprep.subr.mxu0 0.0
    %2312 = vmatpush1.msra.mxu0 %v2291
    %2313 = vmatprep.subr.mxu0 0.0
    %2314 = vmatpush1.msra.mxu0 %v2290
    %2315 = vmatprep.subr.mxu0 0.0
    %2316 = vmatpush1.msra.mxu0 %v2289
    %2317 = vmatprep.subr.mxu0 0.0
    %2318 = vmatpush1.msra.mxu0 %v2288
    %2319 = vmatprep.subr.mxu0 0.0
    %2320 = vmatpush1.msra.mxu0 %v2287
    %2321 = vmatprep.subr.mxu0 0.0
    %2322 = vmatpush1.msra.mxu0 %v2286
    %2323 = vmatprep.subr.mxu0 0.0
    %2324 = vmatpush1.msra.mxu0 %v2285
    %2325 = vmatprep.subr.mxu0 0.0
    %2326 = vmatpush1.msra.mxu0 %v2284
    %2327 = vmatprep.subr.mxu0 0.0
    %2328 = vmatpush1.msra.mxu0 %v2283
    %2329 = vmatprep.subr.mxu0 0.0
    %2330 = vmatpush1.msra.mxu0 %v2282
    %2331 = vmatprep.subr.mxu0 0.0
    %2332 = vmatpush1.msra.mxu0 %v2281
    %2333 = vmatprep.subr.mxu0 0.0
    %2334 = vmatpush1.msra.mxu0 %v2280
    %2335 = vmatprep.subr.mxu0 0.0
    %2336 = vmatpush2.msra.mxu0 0.0
    %2337 = vmatprep.subr.mxu0 0.0
    %2338 = vmatpush2.msra.mxu0 0.0
    %2339 = vmatprep.subr.mxu0 0.0
    %2340 = vmatpush2.msra.mxu0 0.0
    %2341 = vmatprep.subr.mxu0 0.0
    %2342 = vmatpush2.msra.mxu0 0.0
    %2343 = vmatprep.subr.mxu0 0.0
    %2344 = vmatpush2.msra.mxu0 0.0
    %2345 = vmatprep.subr.mxu0 0.0
    %2346 = vmatpush2.msra.mxu0 0.0
    %2347 = vmatprep.subr.mxu0 0.0
    %2348 = vmatpush2.msra.mxu0 0.0
    %2349 = vmatprep.subr.mxu0 0.0
    %2350 = vmatpush2.msra.mxu0 0.0
    %2351 = vmatprep.subr.mxu0 0.0
    %2352 = vmatpush2.msra.mxu0 0.0
    %2353 = vmatprep.subr.mxu0 0.0
    %2354 = vmatpush2.msra.mxu0 0.0
    %2355 = vmatprep.subr.mxu0 0.0
    %2356 = vmatpush2.msra.mxu0 0.0
    %2357 = vmatprep.subr.mxu0 0.0
    %2358 = vmatpush2.msra.mxu0 0.0
    %2359 = vmatprep.subr.mxu0 0.0
    %2360 = vmatpush2.msra.mxu0 0.0
    %2361 = vmatprep.subr.mxu0 0.0
    %2362 = vmatpush2.msra.mxu0 0.0
    %2363 = vmatprep.subr.mxu0 0.0
    %2364 = vmatpush2.msra.mxu0 0.0
    %2365 = vmatprep.subr.mxu0 0.0
    %2366 = vmatpush2.msra.mxu0 0.0
    %2367 = vmatprep.mubr.f32.mxu0 0.0
    %2368 = vmatmul.mubr.f32.gmra.mxu0 %v2276
    %v2369 = vpop.f32.mrf.mxu0
    %v2370 = vadd.f32 %v2301, %v2369
    %v2371 = vpop.f32.mrf.mxu0
    %2372 = vmatprep.mubr.f32.mxu0 0.0
    %2373 = vmatmul.mubr.f32.gmra.mxu0 %v2277
    %v2374 = vpop.f32.mrf.mxu0
    %v2375 = vadd.f32 %v2301, %v2374
    %v2376 = vpop.f32.mrf.mxu0
    %2377 = vmatprep.mubr.f32.mxu0 0.0
    %2378 = vmatmul.mubr.f32.gmra.mxu0 %v2278
    %v2379 = vpop.f32.mrf.mxu0
    %v2380 = vadd.f32 %v2301, %v2379
    %v2381 = vpop.f32.mrf.mxu0
    %2382 = vmatprep.mubr.f32.mxu0 0.0
    %2383 = vmatmul.mubr.f32.gmra.mxu0 %v2279
    %v2384 = vpop.f32.mrf.mxu0
    %v2385 = vadd.f32 %v2301, %v2384
    %v2386 = vpop.f32.mrf.mxu0
    %2387 = vdwg.mxu0
    %v2388 = vadd.f32 %v2160, %v2370
    %v2389 = vadd.f32 %v2161, %v2375
    %v2390 = vadd.f32 %v2162, %v2380
    %v2391 = vadd.f32 %v2163, %v2385
    %v2392 = vld [vmem:[%s11] sm:$0x1]
    %v2393 = vld [vmem:[#allocation10] sm:$0x1]
    %v2394 = vsel %vm151, %v2388, 0.0
    %2395 = vadd.xlane.f32.xlu0 %v2394
    %v2396 = vpop.xlane.xlu0 %2395
    %v2397 = vsel %vm151, %v2389, 0.0
    %2398 = vadd.xlane.f32.xlu0 %v2397
    %v2399 = vpop.xlane.xlu0 %2398
    %v2400 = vsel %vm151, %v2390, 0.0
    %2401 = vadd.xlane.f32.xlu0 %v2400
    %v2402 = vpop.xlane.xlu0 %2401
    %v2403 = vsel %vm151, %v2391, 0.0
    %2404 = vadd.xlane.f32.xlu0 %v2403
    %v2405 = vpop.xlane.xlu0 %2404
    %v2406 = vmul.f32 %v2396, %v2103
    %v2407 = vmul.f32 %v2399, %v2103
    %v2408 = vmul.f32 %v2402, %v2103
    %v2409 = vmul.f32 %v2405, %v2103
    %v2410 = vsub.f32 %v2388, %v2406
    %v2411 = vsub.f32 %v2389, %v2407
    %v2412 = vsub.f32 %v2390, %v2408
    %v2413 = vsub.f32 %v2391, %v2409
    %v2414 = vmul.f32 %v2410, %v2410
    %v2415 = vmul.f32 %v2411, %v2411
    %v2416 = vmul.f32 %v2412, %v2412
    %v2417 = vmul.f32 %v2413, %v2413
    %v2418 = vsel %vm151, %v2414, 0.0
    %2419 = vadd.xlane.f32.xlu0 %v2418
    %v2420 = vpop.xlane.xlu0 %2419
    %v2421 = vsel %vm151, %v2415, 0.0
    %2422 = vadd.xlane.f32.xlu0 %v2421
    %v2423 = vpop.xlane.xlu0 %2422
    %v2424 = vsel %vm151, %v2416, 0.0
    %2425 = vadd.xlane.f32.xlu0 %v2424
    %v2426 = vpop.xlane.xlu0 %2425
    %v2427 = vsel %vm151, %v2417, 0.0
    %2428 = vadd.xlane.f32.xlu0 %v2427
    %v2429 = vpop.xlane.xlu0 %2428
    %v2430 = vmul.f32 %v2420, %v2103
    %v2431 = vmul.f32 %v2423, %v2103
    %v2432 = vmul.f32 %v2426, %v2103
    %v2433 = vmul.f32 %v2429, %v2103
    %v2434 = vadd.f32 %v2430, 1e-05
    %v2435 = vadd.f32 %v2431, 1e-05
    %v2436 = vadd.f32 %v2432, 1e-05
    %v2437 = vadd.f32 %v2433, 1e-05
    %v2438 = vrsqrt.pop %v2434
    %v2439 = vrsqrt.pop %v2435
    %v2440 = vrsqrt.pop %v2436
    %v2441 = vrsqrt.pop %v2437
    %v2442 = vmul.f32 %v2410, %v2438
    %v2443 = vmul.f32 %v2411, %v2439
    %v2444 = vmul.f32 %v2412, %v2440
    %v2445 = vmul.f32 %v2413, %v2441
    %v2447 = vlaneseq
    %v2448 = vshrl.u32 %v2447, 7
    %v2449 = vsub.s32 0, %v2448
    %v2450 = vrot.slane %v2392, %v2449
    %v2452 = vmul.f32 %v2442, %v2450
    %v2453 = vmul.f32 %v2443, %v2450
    %v2454 = vmul.f32 %v2444, %v2450
    %v2455 = vmul.f32 %v2445, %v2450
    %v2457 = vlaneseq
    %v2458 = vshrl.u32 %v2457, 7
    %v2459 = vsub.s32 0, %v2458
    %v2460 = vrot.slane %v2393, %v2459
    %v2462 = vadd.f32 %v2452, %v2460
    %v2463 = vadd.f32 %v2453, %v2460
    %v2464 = vadd.f32 %v2454, %v2460
    %v2465 = vadd.f32 %v2455, %v2460
    %s2466 = scalar_lea.vmem [#allocation5], 128
    %v2467 = vld [vmem:[%s2466] sm:$0xff]
    %v2468 = vld [vmem:[%s2466 + $0x8] sm:$0xff]
    %v2469 = vld [vmem:[%s2466 + $0x10] sm:$0xff]
    %v2470 = vld [vmem:[%s2466 + $0x18] sm:$0xff]
    %v2471 = vld [vmem:[%s2466 + $0x20] sm:$0xff]
    %v2472 = vld [vmem:[%s2466 + $0x28] sm:$0xff]
    %v2473 = vld [vmem:[%s2466 + $0x30] sm:$0xff]
    %v2474 = vld [vmem:[%s2466 + $0x38] sm:$0xff]
    %v2475 = vld [vmem:[%s2466 + $0x40] sm:$0xff]
    %v2476 = vld [vmem:[%s2466 + $0x48] sm:$0xff]
    %v2477 = vld [vmem:[%s2466 + $0x50] sm:$0xff]
    %v2478 = vld [vmem:[%s2466 + $0x58] sm:$0xff]
    %v2479 = vld [vmem:[%s2466 + $0x60] sm:$0xff]
    %v2480 = vld [vmem:[%s2466 + $0x68] sm:$0xff]
    %v2481 = vld [vmem:[%s2466 + $0x70] sm:$0xff]
    %v2482 = vld [vmem:[%s2466 + $0x78] sm:$0xff]
    %s2483 = scalar_lea.vmem %s2, 2
    %v2484 = vld [vmem:[%s2483] sm:$0x3]
    %v2486 = vlaneseq
    %v2487 = vshrl.u32 %v2486, 7
    %v2488 = vsub.s32 0, %v2487
    %v2489 = vrot.slane %v2484, %v2488
    %v2490 = vlaneseq
    %v2491 = vshrl.u32 %v2490, 7
    %v2492 = vsub.s32 1, %v2491
    %v2493 = vrot.slane %v2484, %v2492
    %v2497 = vsel %vm151, %v2462, 0
    %v2500 = vsel %vm151, %v2463, 0
    %v2503 = vsel %vm151, %v2464, 0
    %v2506 = vsel %vm151, %v2465, 0
    %2508 = vmatprep.subr.mxu0 0.0
    %2509 = vmatpush1.msra.mxu0 0.0
    %2510 = vmatprep.subr.mxu0 0.0
    %2511 = vmatpush1.msra.mxu0 0.0
    %2512 = vmatprep.subr.mxu0 0.0
    %2513 = vmatpush1.msra.mxu0 0.0
    %2514 = vmatprep.subr.mxu0 0.0
    %2515 = vmatpush1.msra.mxu0 0.0
    %2516 = vmatprep.subr.mxu0 0.0
    %2517 = vmatpush1.msra.mxu0 0.0
    %2518 = vmatprep.subr.mxu0 0.0
    %2519 = vmatpush1.msra.mxu0 0.0
    %2520 = vmatprep.subr.mxu0 0.0
    %2521 = vmatpush1.msra.mxu0 0.0
    %2522 = vmatprep.subr.mxu0 0.0
    %2523 = vmatpush1.msra.mxu0 0.0
    %2524 = vmatprep.subr.mxu0 %v2482
    %2525 = vmatpush1.msra.mxu0 %v2481
    %2526 = vmatprep.subr.mxu0 %v2480
    %2527 = vmatpush1.msra.mxu0 %v2479
    %2528 = vmatprep.subr.mxu0 %v2478
    %2529 = vmatpush1.msra.mxu0 %v2477
    %2530 = vmatprep.subr.mxu0 %v2476
    %2531 = vmatpush1.msra.mxu0 %v2475
    %2532 = vmatprep.subr.mxu0 %v2474
    %2533 = vmatpush1.msra.mxu0 %v2473
    %2534 = vmatprep.subr.mxu0 %v2472
    %2535 = vmatpush1.msra.mxu0 %v2471
    %2536 = vmatprep.subr.mxu0 %v2470
    %2537 = vmatpush1.msra.mxu0 %v2469
    %2538 = vmatprep.subr.mxu0 %v2468
    %2539 = vmatpush1.msra.mxu0 %v2467
    %2540 = vmatprep.subr.mxu0 0.0
    %2541 = vmatpush2.msra.mxu0 0.0
    %2542 = vmatprep.subr.mxu0 0.0
    %2543 = vmatpush2.msra.mxu0 0.0
    %2544 = vmatprep.subr.mxu0 0.0
    %2545 = vmatpush2.msra.mxu0 0.0
    %2546 = vmatprep.subr.mxu0 0.0
    %2547 = vmatpush2.msra.mxu0 0.0
    %2548 = vmatprep.subr.mxu0 0.0
    %2549 = vmatpush2.msra.mxu0 0.0
    %2550 = vmatprep.subr.mxu0 0.0
    %2551 = vmatpush2.msra.mxu0 0.0
    %2552 = vmatprep.subr.mxu0 0.0
    %2553 = vmatpush2.msra.mxu0 0.0
    %2554 = vmatprep.subr.mxu0 0.0
    %2555 = vmatpush2.msra.mxu0 0.0
    %2556 = vmatprep.subr.mxu0 0.0
    %2557 = vmatpush2.msra.mxu0 0.0
    %2558 = vmatprep.subr.mxu0 0.0
    %2559 = vmatpush2.msra.mxu0 0.0
    %2560 = vmatprep.subr.mxu0 0.0
    %2561 = vmatpush2.msra.mxu0 0.0
    %2562 = vmatprep.subr.mxu0 0.0
    %2563 = vmatpush2.msra.mxu0 0.0
    %2564 = vmatprep.subr.mxu0 0.0
    %2565 = vmatpush2.msra.mxu0 0.0
    %2566 = vmatprep.subr.mxu0 0.0
    %2567 = vmatpush2.msra.mxu0 0.0
    %2568 = vmatprep.subr.mxu0 0.0
    %2569 = vmatpush2.msra.mxu0 0.0
    %2570 = vmatprep.subr.mxu0 0.0
    %2571 = vmatpush2.msra.mxu0 0.0
    %2572 = vmatprep.mubr.f32.mxu0 0.0
    %2573 = vmatmul.mubr.f32.gmra.mxu0 %v2497
    %v2574 = vpop.f32.mrf.mxu0
    %v2575 = vadd.f32 %v2489, %v2574
    %v2576 = vpop.f32.mrf.mxu0
    %v2577 = vadd.f32 %v2493, %v2576
    %2578 = vmatprep.mubr.f32.mxu0 0.0
    %2579 = vmatmul.mubr.f32.gmra.mxu0 %v2500
    %v2580 = vpop.f32.mrf.mxu0
    %v2581 = vadd.f32 %v2489, %v2580
    %v2582 = vpop.f32.mrf.mxu0
    %v2583 = vadd.f32 %v2493, %v2582
    %2584 = vmatprep.mubr.f32.mxu0 0.0
    %2585 = vmatmul.mubr.f32.gmra.mxu0 %v2503
    %v2586 = vpop.f32.mrf.mxu0
    %v2587 = vadd.f32 %v2489, %v2586
    %v2588 = vpop.f32.mrf.mxu0
    %v2589 = vadd.f32 %v2493, %v2588
    %2590 = vmatprep.mubr.f32.mxu0 0.0
    %2591 = vmatmul.mubr.f32.gmra.mxu0 %v2506
    %v2592 = vpop.f32.mrf.mxu0
    %v2593 = vadd.f32 %v2489, %v2592
    %v2594 = vpop.f32.mrf.mxu0
    %v2595 = vadd.f32 %v2493, %v2594
    %2596 = vdwg.mxu0
    %2599 = vrot.lane.b32.xlu0 %v2575, 64
    %v2600 = vpop.permute.xlu0 %2599
    %2601 = vrot.lane.b32.xlu0 %v2581, 64
    %v2602 = vpop.permute.xlu0 %2601
    %v2603 = vsel %vm259, %v2575, 0
    %v2605 = vsel %vm259, %v2581, 0
    %v2607 = vsel %vm259, %v2600, 0
    %v2609 = vsel %vm259, %v2602, 0
    %2611 = vmatprep.subr.mxu0 0.0
    %2612 = vmatpush1.xpose.msra.mxu0 0.0
    %2613 = vmatprep.subr.mxu0 0.0
    %2614 = vmatpush1.xpose.msra.mxu0 0.0
    %2615 = vmatprep.subr.mxu0 0.0
    %2616 = vmatpush1.xpose.msra.mxu0 0.0
    %2617 = vmatprep.subr.mxu0 0.0
    %2618 = vmatpush1.xpose.msra.mxu0 0.0
    %2619 = vmatprep.subr.mxu0 0.0
    %2620 = vmatpush1.xpose.msra.mxu0 0.0
    %2621 = vmatprep.subr.mxu0 0.0
    %2622 = vmatpush1.xpose.msra.mxu0 0.0
    %2623 = vmatprep.subr.mxu0 0.0
    %2624 = vmatpush1.xpose.msra.mxu0 0.0
    %2625 = vmatprep.subr.mxu0 0.0
    %2626 = vmatpush1.xpose.msra.mxu0 0.0
    %2627 = vmatprep.subr.mxu0 0.0
    %2628 = vmatpush1.xpose.msra.mxu0 0.0
    %2629 = vmatprep.subr.mxu0 0.0
    %2630 = vmatpush1.xpose.msra.mxu0 0.0
    %2631 = vmatprep.subr.mxu0 0.0
    %2632 = vmatpush1.xpose.msra.mxu0 0.0
    %2633 = vmatprep.subr.mxu0 0.0
    %2634 = vmatpush1.xpose.msra.mxu0 0.0
    %2635 = vmatprep.subr.mxu0 0.0
    %2636 = vmatpush1.xpose.msra.mxu0 0.0
    %2637 = vmatprep.subr.mxu0 0.0
    %2638 = vmatpush1.xpose.msra.mxu0 0.0
    %2639 = vmatprep.subr.mxu0 0.0
    %2640 = vmatpush1.xpose.msra.mxu0 %v2609
    %2641 = vmatprep.subr.mxu0 0.0
    %2642 = vmatpush1.xpose.msra.mxu0 %v2607
    %2643 = vmatprep.subr.mxu0 0.0
    %2644 = vmatpush2.xpose.msra.mxu0 0.0
    %2645 = vmatprep.subr.mxu0 0.0
    %2646 = vmatpush2.xpose.msra.mxu0 0.0
    %2647 = vmatprep.subr.mxu0 0.0
    %2648 = vmatpush2.xpose.msra.mxu0 0.0
    %2649 = vmatprep.subr.mxu0 0.0
    %2650 = vmatpush2.xpose.msra.mxu0 0.0
    %2651 = vmatprep.subr.mxu0 0.0
    %2652 = vmatpush2.xpose.msra.mxu0 0.0
    %2653 = vmatprep.subr.mxu0 0.0
    %2654 = vmatpush2.xpose.msra.mxu0 0.0
    %2655 = vmatprep.subr.mxu0 0.0
    %2656 = vmatpush2.xpose.msra.mxu0 0.0
    %2657 = vmatprep.subr.mxu0 0.0
    %2658 = vmatpush2.xpose.msra.mxu0 0.0
    %2659 = vmatprep.subr.mxu0 0.0
    %2660 = vmatpush2.xpose.msra.mxu0 0.0
    %2661 = vmatprep.subr.mxu0 0.0
    %2662 = vmatpush2.xpose.msra.mxu0 0.0
    %2663 = vmatprep.subr.mxu0 0.0
    %2664 = vmatpush2.xpose.msra.mxu0 0.0
    %2665 = vmatprep.subr.mxu0 0.0
    %2666 = vmatpush2.xpose.msra.mxu0 0.0
    %2667 = vmatprep.subr.mxu0 0.0
    %2668 = vmatpush2.xpose.msra.mxu0 0.0
    %2669 = vmatprep.subr.mxu0 0.0
    %2670 = vmatpush2.xpose.msra.mxu0 0.0
    %2671 = vmatprep.subr.mxu0 0.0
    %2672 = vmatpush2.xpose.msra.mxu0 0.0
    %2673 = vmatprep.subr.mxu0 0.0
    %2674 = vmatpush2.xpose.msra.mxu0 0.0
    %2675 = vmatprep.mubr.f32.mxu0 0.0
    %2676 = vmatmul.mubr.f32.gmra.mxu0 %v2603
    %v2677 = vpop.f32.mrf.mxu0
    %v2678 = vadd.f32 0.0, %v2677
    %v2679 = vpop.f32.mrf.mxu0
    %2680 = vmatprep.mubr.f32.mxu0 0.0
    %2681 = vmatmul.mubr.f32.gmra.mxu0 %v2605
    %v2682 = vpop.f32.mrf.mxu0
    %v2683 = vadd.f32 0.0, %v2682
    %v2684 = vpop.f32.mrf.mxu0
    %2685 = vdwg.mxu0
    %v2686 = vsel %vm259, %v2678, -inf
    %2687 = vmax.xlane.f32.xlu0 %v2686
    %v2688 = vpop.xlane.xlu0 %2687
    %v2689 = vsel %vm259, %v2683, -inf
    %2690 = vmax.xlane.f32.xlu0 %v2689
    %v2691 = vpop.xlane.xlu0 %2690
    %v2692 = vsub.f32 %v2678, %v2688
    %v2693 = vsub.f32 %v2683, %v2691
    %v2694 = vmul.f32 %v2692, 1.442695
    %v2695 = vpow.pop %v2694
    %v2696 = vmul.f32 %v2693, 1.442695
    %v2697 = vpow.pop %v2696
    %v2698 = vsel %vm259, %v2695, 0.0
    %2699 = vadd.xlane.f32.xlu0 %v2698
    %v2700 = vpop.xlane.xlu0 %2699
    %v2701 = vsel %vm259, %v2697, 0.0
    %2702 = vadd.xlane.f32.xlu0 %v2701
    %v2703 = vpop.xlane.xlu0 %2702
    %v2704 = vrcp.pop %v2700
    %v2705 = vrcp.pop %v2703
    %v2706 = vmul.f32 %v2695, %v2704
    %v2707 = vmul.f32 %v2697, %v2705
    %v2709 = vsel %vm259, %v2706, 0
    %v2712 = vsel %vm259, %v2707, 0
    %2714 = vmatprep.subr.mxu0 0.0
    %2715 = vmatpush1.msra.mxu0 0.0
    %2716 = vmatprep.subr.mxu0 0.0
    %2717 = vmatpush1.msra.mxu0 0.0
    %2718 = vmatprep.subr.mxu0 0.0
    %2719 = vmatpush1.msra.mxu0 0.0
    %2720 = vmatprep.subr.mxu0 0.0
    %2721 = vmatpush1.msra.mxu0 0.0
    %2722 = vmatprep.subr.mxu0 0.0
    %2723 = vmatpush1.msra.mxu0 0.0
    %2724 = vmatprep.subr.mxu0 0.0
    %2725 = vmatpush1.msra.mxu0 0.0
    %2726 = vmatprep.subr.mxu0 0.0
    %2727 = vmatpush1.msra.mxu0 0.0
    %2728 = vmatprep.subr.mxu0 0.0
    %2729 = vmatpush1.msra.mxu0 0.0
    %2730 = vmatprep.subr.mxu0 0.0
    %2731 = vmatpush1.msra.mxu0 0.0
    %2732 = vmatprep.subr.mxu0 0.0
    %2733 = vmatpush1.msra.mxu0 0.0
    %2734 = vmatprep.subr.mxu0 0.0
    %2735 = vmatpush1.msra.mxu0 0.0
    %2736 = vmatprep.subr.mxu0 0.0
    %2737 = vmatpush1.msra.mxu0 0.0
    %2738 = vmatprep.subr.mxu0 0.0
    %2739 = vmatpush1.msra.mxu0 0.0
    %2740 = vmatprep.subr.mxu0 0.0
    %2741 = vmatpush1.msra.mxu0 0.0
    %2742 = vmatprep.subr.mxu0 0.0
    %2743 = vmatpush1.msra.mxu0 %v2583
    %2744 = vmatprep.subr.mxu0 0.0
    %2745 = vmatpush1.msra.mxu0 %v2577
    %2746 = vmatprep.subr.mxu0 0.0
    %2747 = vmatpush2.msra.mxu0 0.0
    %2748 = vmatprep.subr.mxu0 0.0
    %2749 = vmatpush2.msra.mxu0 0.0
    %2750 = vmatprep.subr.mxu0 0.0
    %2751 = vmatpush2.msra.mxu0 0.0
    %2752 = vmatprep.subr.mxu0 0.0
    %2753 = vmatpush2.msra.mxu0 0.0
    %2754 = vmatprep.subr.mxu0 0.0
    %2755 = vmatpush2.msra.mxu0 0.0
    %2756 = vmatprep.subr.mxu0 0.0
    %2757 = vmatpush2.msra.mxu0 0.0
    %2758 = vmatprep.subr.mxu0 0.0
    %2759 = vmatpush2.msra.mxu0 0.0
    %2760 = vmatprep.subr.mxu0 0.0
    %2761 = vmatpush2.msra.mxu0 0.0
    %2762 = vmatprep.subr.mxu0 0.0
    %2763 = vmatpush2.msra.mxu0 0.0
    %2764 = vmatprep.subr.mxu0 0.0
    %2765 = vmatpush2.msra.mxu0 0.0
    %2766 = vmatprep.subr.mxu0 0.0
    %2767 = vmatpush2.msra.mxu0 0.0
    %2768 = vmatprep.subr.mxu0 0.0
    %2769 = vmatpush2.msra.mxu0 0.0
    %2770 = vmatprep.subr.mxu0 0.0
    %2771 = vmatpush2.msra.mxu0 0.0
    %2772 = vmatprep.subr.mxu0 0.0
    %2773 = vmatpush2.msra.mxu0 0.0
    %2774 = vmatprep.subr.mxu0 0.0
    %2775 = vmatpush2.msra.mxu0 0.0
    %2776 = vmatprep.subr.mxu0 0.0
    %2777 = vmatpush2.msra.mxu0 0.0
    %2778 = vmatprep.mubr.f32.mxu0 0.0
    %2779 = vmatmul.mubr.f32.gmra.mxu0 %v2709
    %v2780 = vpop.f32.mrf.mxu0
    %v2781 = vadd.f32 0.0, %v2780
    %v2782 = vpop.f32.mrf.mxu0
    %2783 = vmatprep.mubr.f32.mxu0 0.0
    %2784 = vmatmul.mubr.f32.gmra.mxu0 %v2712
    %v2785 = vpop.f32.mrf.mxu0
    %v2786 = vadd.f32 0.0, %v2785
    %v2787 = vpop.f32.mrf.mxu0
    %2788 = vdwg.mxu0
    %2789 = vrot.lane.b32.xlu0 %v2575, 112
    %v2790 = vpop.permute.xlu0 %2789
    %2791 = vrot.lane.b32.xlu0 %v2581, 112
    %v2792 = vpop.permute.xlu0 %2791
    %2793 = vrot.lane.b32.xlu0 %v2575, 48
    %v2794 = vpop.permute.xlu0 %2793
    %2795 = vrot.lane.b32.xlu0 %v2581, 48
    %v2796 = vpop.permute.xlu0 %2795
    %v2797 = vsel %vm259, %v2790, 0
    %v2799 = vsel %vm259, %v2792, 0
    %v2801 = vsel %vm259, %v2794, 0
    %v2803 = vsel %vm259, %v2796, 0
    %2805 = vmatprep.subr.mxu0 0.0
    %2806 = vmatpush1.xpose.msra.mxu0 0.0
    %2807 = vmatprep.subr.mxu0 0.0
    %2808 = vmatpush1.xpose.msra.mxu0 0.0
    %2809 = vmatprep.subr.mxu0 0.0
    %2810 = vmatpush1.xpose.msra.mxu0 0.0
    %2811 = vmatprep.subr.mxu0 0.0
    %2812 = vmatpush1.xpose.msra.mxu0 0.0
    %2813 = vmatprep.subr.mxu0 0.0
    %2814 = vmatpush1.xpose.msra.mxu0 0.0
    %2815 = vmatprep.subr.mxu0 0.0
    %2816 = vmatpush1.xpose.msra.mxu0 0.0
    %2817 = vmatprep.subr.mxu0 0.0
    %2818 = vmatpush1.xpose.msra.mxu0 0.0
    %2819 = vmatprep.subr.mxu0 0.0
    %2820 = vmatpush1.xpose.msra.mxu0 0.0
    %2821 = vmatprep.subr.mxu0 0.0
    %2822 = vmatpush1.xpose.msra.mxu0 0.0
    %2823 = vmatprep.subr.mxu0 0.0
    %2824 = vmatpush1.xpose.msra.mxu0 0.0
    %2825 = vmatprep.subr.mxu0 0.0
    %2826 = vmatpush1.xpose.msra.mxu0 0.0
    %2827 = vmatprep.subr.mxu0 0.0
    %2828 = vmatpush1.xpose.msra.mxu0 0.0
    %2829 = vmatprep.subr.mxu0 0.0
    %2830 = vmatpush1.xpose.msra.mxu0 0.0
    %2831 = vmatprep.subr.mxu0 0.0
    %2832 = vmatpush1.xpose.msra.mxu0 0.0
    %2833 = vmatprep.subr.mxu0 0.0
    %2834 = vmatpush1.xpose.msra.mxu0 %v2803
    %2835 = vmatprep.subr.mxu0 0.0
    %2836 = vmatpush1.xpose.msra.mxu0 %v2801
    %2837 = vmatprep.subr.mxu0 0.0
    %2838 = vmatpush2.xpose.msra.mxu0 0.0
    %2839 = vmatprep.subr.mxu0 0.0
    %2840 = vmatpush2.xpose.msra.mxu0 0.0
    %2841 = vmatprep.subr.mxu0 0.0
    %2842 = vmatpush2.xpose.msra.mxu0 0.0
    %2843 = vmatprep.subr.mxu0 0.0
    %2844 = vmatpush2.xpose.msra.mxu0 0.0
    %2845 = vmatprep.subr.mxu0 0.0
    %2846 = vmatpush2.xpose.msra.mxu0 0.0
    %2847 = vmatprep.subr.mxu0 0.0
    %2848 = vmatpush2.xpose.msra.mxu0 0.0
    %2849 = vmatprep.subr.mxu0 0.0
    %2850 = vmatpush2.xpose.msra.mxu0 0.0
    %2851 = vmatprep.subr.mxu0 0.0
    %2852 = vmatpush2.xpose.msra.mxu0 0.0
    %2853 = vmatprep.subr.mxu0 0.0
    %2854 = vmatpush2.xpose.msra.mxu0 0.0
    %2855 = vmatprep.subr.mxu0 0.0
    %2856 = vmatpush2.xpose.msra.mxu0 0.0
    %2857 = vmatprep.subr.mxu0 0.0
    %2858 = vmatpush2.xpose.msra.mxu0 0.0
    %2859 = vmatprep.subr.mxu0 0.0
    %2860 = vmatpush2.xpose.msra.mxu0 0.0
    %2861 = vmatprep.subr.mxu0 0.0
    %2862 = vmatpush2.xpose.msra.mxu0 0.0
    %2863 = vmatprep.subr.mxu0 0.0
    %2864 = vmatpush2.xpose.msra.mxu0 0.0
    %2865 = vmatprep.subr.mxu0 0.0
    %2866 = vmatpush2.xpose.msra.mxu0 0.0
    %2867 = vmatprep.subr.mxu0 0.0
    %2868 = vmatpush2.xpose.msra.mxu0 0.0
    %2869 = vmatprep.mubr.f32.mxu0 0.0
    %2870 = vmatmul.mubr.f32.gmra.mxu0 %v2797
    %v2871 = vpop.f32.mrf.mxu0
    %v2872 = vadd.f32 0.0, %v2871
    %v2873 = vpop.f32.mrf.mxu0
    %2874 = vmatprep.mubr.f32.mxu0 0.0
    %2875 = vmatmul.mubr.f32.gmra.mxu0 %v2799
    %v2876 = vpop.f32.mrf.mxu0
    %v2877 = vadd.f32 0.0, %v2876
    %v2878 = vpop.f32.mrf.mxu0
    %2879 = vdwg.mxu0
    %v2880 = vsel %vm259, %v2872, -inf
    %2881 = vmax.xlane.f32.xlu0 %v2880
    %v2882 = vpop.xlane.xlu0 %2881
    %v2883 = vsel %vm259, %v2877, -inf
    %2884 = vmax.xlane.f32.xlu0 %v2883
    %v2885 = vpop.xlane.xlu0 %2884
    %v2886 = vsub.f32 %v2872, %v2882
    %v2887 = vsub.f32 %v2877, %v2885
    %v2888 = vmul.f32 %v2886, 1.442695
    %v2889 = vpow.pop %v2888
    %v2890 = vmul.f32 %v2887, 1.442695
    %v2891 = vpow.pop %v2890
    %v2892 = vsel %vm259, %v2889, 0.0
    %2893 = vadd.xlane.f32.xlu0 %v2892
    %v2894 = vpop.xlane.xlu0 %2893
    %v2895 = vsel %vm259, %v2891, 0.0
    %2896 = vadd.xlane.f32.xlu0 %v2895
    %v2897 = vpop.xlane.xlu0 %2896
    %v2898 = vrcp.pop %v2894
    %v2899 = vrcp.pop %v2897
    %v2900 = vmul.f32 %v2889, %v2898
    %v2901 = vmul.f32 %v2891, %v2899
    %2904 = vrot.lane.b32.xlu0 %v2577, 112
    %v2905 = vpop.permute.xlu0 %2904
    %2906 = vrot.lane.b32.xlu0 %v2583, 112
    %v2907 = vpop.permute.xlu0 %2906
    %v2911 = vsel %vm259, %v2900, 0
    %v2914 = vsel %vm259, %v2901, 0
    %2916 = vmatprep.subr.mxu0 0.0
    %2917 = vmatpush1.msra.mxu0 0.0
    %2918 = vmatprep.subr.mxu0 0.0
    %2919 = vmatpush1.msra.mxu0 0.0
    %2920 = vmatprep.subr.mxu0 0.0
    %2921 = vmatpush1.msra.mxu0 0.0
    %2922 = vmatprep.subr.mxu0 0.0
    %2923 = vmatpush1.msra.mxu0 0.0
    %2924 = vmatprep.subr.mxu0 0.0
    %2925 = vmatpush1.msra.mxu0 0.0
    %2926 = vmatprep.subr.mxu0 0.0
    %2927 = vmatpush1.msra.mxu0 0.0
    %2928 = vmatprep.subr.mxu0 0.0
    %2929 = vmatpush1.msra.mxu0 0.0
    %2930 = vmatprep.subr.mxu0 0.0
    %2931 = vmatpush1.msra.mxu0 0.0
    %2932 = vmatprep.subr.mxu0 0.0
    %2933 = vmatpush1.msra.mxu0 0.0
    %2934 = vmatprep.subr.mxu0 0.0
    %2935 = vmatpush1.msra.mxu0 0.0
    %2936 = vmatprep.subr.mxu0 0.0
    %2937 = vmatpush1.msra.mxu0 0.0
    %2938 = vmatprep.subr.mxu0 0.0
    %2939 = vmatpush1.msra.mxu0 0.0
    %2940 = vmatprep.subr.mxu0 0.0
    %2941 = vmatpush1.msra.mxu0 0.0
    %2942 = vmatprep.subr.mxu0 0.0
    %2943 = vmatpush1.msra.mxu0 0.0
    %2944 = vmatprep.subr.mxu0 0.0
    %2945 = vmatpush1.msra.mxu0 %v2907
    %2946 = vmatprep.subr.mxu0 0.0
    %2947 = vmatpush1.msra.mxu0 %v2905
    %2948 = vmatprep.subr.mxu0 0.0
    %2949 = vmatpush2.msra.mxu0 0.0
    %2950 = vmatprep.subr.mxu0 0.0
    %2951 = vmatpush2.msra.mxu0 0.0
    %2952 = vmatprep.subr.mxu0 0.0
    %2953 = vmatpush2.msra.mxu0 0.0
    %2954 = vmatprep.subr.mxu0 0.0
    %2955 = vmatpush2.msra.mxu0 0.0
    %2956 = vmatprep.subr.mxu0 0.0
    %2957 = vmatpush2.msra.mxu0 0.0
    %2958 = vmatprep.subr.mxu0 0.0
    %2959 = vmatpush2.msra.mxu0 0.0
    %2960 = vmatprep.subr.mxu0 0.0
    %2961 = vmatpush2.msra.mxu0 0.0
    %2962 = vmatprep.subr.mxu0 0.0
    %2963 = vmatpush2.msra.mxu0 0.0
    %2964 = vmatprep.subr.mxu0 0.0
    %2965 = vmatpush2.msra.mxu0 0.0
    %2966 = vmatprep.subr.mxu0 0.0
    %2967 = vmatpush2.msra.mxu0 0.0
    %2968 = vmatprep.subr.mxu0 0.0
    %2969 = vmatpush2.msra.mxu0 0.0
    %2970 = vmatprep.subr.mxu0 0.0
    %2971 = vmatpush2.msra.mxu0 0.0
    %2972 = vmatprep.subr.mxu0 0.0
    %2973 = vmatpush2.msra.mxu0 0.0
    %2974 = vmatprep.subr.mxu0 0.0
    %2975 = vmatpush2.msra.mxu0 0.0
    %2976 = vmatprep.subr.mxu0 0.0
    %2977 = vmatpush2.msra.mxu0 0.0
    %2978 = vmatprep.subr.mxu0 0.0
    %2979 = vmatpush2.msra.mxu0 0.0
    %2980 = vmatprep.mubr.f32.mxu0 0.0
    %2981 = vmatmul.mubr.f32.gmra.mxu0 %v2911
    %v2982 = vpop.f32.mrf.mxu0
    %v2983 = vadd.f32 0.0, %v2982
    %v2984 = vpop.f32.mrf.mxu0
    %2985 = vmatprep.mubr.f32.mxu0 0.0
    %2986 = vmatmul.mubr.f32.gmra.mxu0 %v2914
    %v2987 = vpop.f32.mrf.mxu0
    %v2988 = vadd.f32 0.0, %v2987
    %v2989 = vpop.f32.mrf.mxu0
    %2990 = vdwg.mxu0
    %2991 = vrot.lane.b32.xlu0 %v2575, 96
    %v2992 = vpop.permute.xlu0 %2991
    %2993 = vrot.lane.b32.xlu0 %v2581, 96
    %v2994 = vpop.permute.xlu0 %2993
    %2995 = vrot.lane.b32.xlu0 %v2575, 32
    %v2996 = vpop.permute.xlu0 %2995
    %2997 = vrot.lane.b32.xlu0 %v2581, 32
    %v2998 = vpop.permute.xlu0 %2997
    %v2999 = vsel %vm259, %v2992, 0
    %v3001 = vsel %vm259, %v2994, 0
    %v3003 = vsel %vm259, %v2996, 0
    %v3005 = vsel %vm259, %v2998, 0
    %3007 = vmatprep.subr.mxu0 0.0
    %3008 = vmatpush1.xpose.msra.mxu0 0.0
    %3009 = vmatprep.subr.mxu0 0.0
    %3010 = vmatpush1.xpose.msra.mxu0 0.0
    %3011 = vmatprep.subr.mxu0 0.0
    %3012 = vmatpush1.xpose.msra.mxu0 0.0
    %3013 = vmatprep.subr.mxu0 0.0
    %3014 = vmatpush1.xpose.msra.mxu0 0.0
    %3015 = vmatprep.subr.mxu0 0.0
    %3016 = vmatpush1.xpose.msra.mxu0 0.0
    %3017 = vmatprep.subr.mxu0 0.0
    %3018 = vmatpush1.xpose.msra.mxu0 0.0
    %3019 = vmatprep.subr.mxu0 0.0
    %3020 = vmatpush1.xpose.msra.mxu0 0.0
    %3021 = vmatprep.subr.mxu0 0.0
    %3022 = vmatpush1.xpose.msra.mxu0 0.0
    %3023 = vmatprep.subr.mxu0 0.0
    %3024 = vmatpush1.xpose.msra.mxu0 0.0
    %3025 = vmatprep.subr.mxu0 0.0
    %3026 = vmatpush1.xpose.msra.mxu0 0.0
    %3027 = vmatprep.subr.mxu0 0.0
    %3028 = vmatpush1.xpose.msra.mxu0 0.0
    %3029 = vmatprep.subr.mxu0 0.0
    %3030 = vmatpush1.xpose.msra.mxu0 0.0
    %3031 = vmatprep.subr.mxu0 0.0
    %3032 = vmatpush1.xpose.msra.mxu0 0.0
    %3033 = vmatprep.subr.mxu0 0.0
    %3034 = vmatpush1.xpose.msra.mxu0 0.0
    %3035 = vmatprep.subr.mxu0 0.0
    %3036 = vmatpush1.xpose.msra.mxu0 %v3005
    %3037 = vmatprep.subr.mxu0 0.0
    %3038 = vmatpush1.xpose.msra.mxu0 %v3003
    %3039 = vmatprep.subr.mxu0 0.0
    %3040 = vmatpush2.xpose.msra.mxu0 0.0
    %3041 = vmatprep.subr.mxu0 0.0
    %3042 = vmatpush2.xpose.msra.mxu0 0.0
    %3043 = vmatprep.subr.mxu0 0.0
    %3044 = vmatpush2.xpose.msra.mxu0 0.0
    %3045 = vmatprep.subr.mxu0 0.0
    %3046 = vmatpush2.xpose.msra.mxu0 0.0
    %3047 = vmatprep.subr.mxu0 0.0
    %3048 = vmatpush2.xpose.msra.mxu0 0.0
    %3049 = vmatprep.subr.mxu0 0.0
    %3050 = vmatpush2.xpose.msra.mxu0 0.0
    %3051 = vmatprep.subr.mxu0 0.0
    %3052 = vmatpush2.xpose.msra.mxu0 0.0
    %3053 = vmatprep.subr.mxu0 0.0
    %3054 = vmatpush2.xpose.msra.mxu0 0.0
    %3055 = vmatprep.subr.mxu0 0.0
    %3056 = vmatpush2.xpose.msra.mxu0 0.0
    %3057 = vmatprep.subr.mxu0 0.0
    %3058 = vmatpush2.xpose.msra.mxu0 0.0
    %3059 = vmatprep.subr.mxu0 0.0
    %3060 = vmatpush2.xpose.msra.mxu0 0.0
    %3061 = vmatprep.subr.mxu0 0.0
    %3062 = vmatpush2.xpose.msra.mxu0 0.0
    %3063 = vmatprep.subr.mxu0 0.0
    %3064 = vmatpush2.xpose.msra.mxu0 0.0
    %3065 = vmatprep.subr.mxu0 0.0
    %3066 = vmatpush2.xpose.msra.mxu0 0.0
    %3067 = vmatprep.subr.mxu0 0.0
    %3068 = vmatpush2.xpose.msra.mxu0 0.0
    %3069 = vmatprep.subr.mxu0 0.0
    %3070 = vmatpush2.xpose.msra.mxu0 0.0
    %3071 = vmatprep.mubr.f32.mxu0 0.0
    %3072 = vmatmul.mubr.f32.gmra.mxu0 %v2999
    %v3073 = vpop.f32.mrf.mxu0
    %v3074 = vadd.f32 0.0, %v3073
    %v3075 = vpop.f32.mrf.mxu0
    %3076 = vmatprep.mubr.f32.mxu0 0.0
    %3077 = vmatmul.mubr.f32.gmra.mxu0 %v3001
    %v3078 = vpop.f32.mrf.mxu0
    %v3079 = vadd.f32 0.0, %v3078
    %v3080 = vpop.f32.mrf.mxu0
    %3081 = vdwg.mxu0
    %v3082 = vsel %vm259, %v3074, -inf
    %3083 = vmax.xlane.f32.xlu0 %v3082
    %v3084 = vpop.xlane.xlu0 %3083
    %v3085 = vsel %vm259, %v3079, -inf
    %3086 = vmax.xlane.f32.xlu0 %v3085
    %v3087 = vpop.xlane.xlu0 %3086
    %v3088 = vsub.f32 %v3074, %v3084
    %v3089 = vsub.f32 %v3079, %v3087
    %v3090 = vmul.f32 %v3088, 1.442695
    %v3091 = vpow.pop %v3090
    %v3092 = vmul.f32 %v3089, 1.442695
    %v3093 = vpow.pop %v3092
    %v3094 = vsel %vm259, %v3091, 0.0
    %3095 = vadd.xlane.f32.xlu0 %v3094
    %v3096 = vpop.xlane.xlu0 %3095
    %v3097 = vsel %vm259, %v3093, 0.0
    %3098 = vadd.xlane.f32.xlu0 %v3097
    %v3099 = vpop.xlane.xlu0 %3098
    %v3100 = vrcp.pop %v3096
    %v3101 = vrcp.pop %v3099
    %v3102 = vmul.f32 %v3091, %v3100
    %v3103 = vmul.f32 %v3093, %v3101
    %3104 = vrot.lane.b32.xlu0 %v2577, 96
    %v3105 = vpop.permute.xlu0 %3104
    %3106 = vrot.lane.b32.xlu0 %v2583, 96
    %v3107 = vpop.permute.xlu0 %3106
    %v3111 = vsel %vm259, %v3102, 0
    %v3114 = vsel %vm259, %v3103, 0
    %3116 = vmatprep.subr.mxu0 0.0
    %3117 = vmatpush1.msra.mxu0 0.0
    %3118 = vmatprep.subr.mxu0 0.0
    %3119 = vmatpush1.msra.mxu0 0.0
    %3120 = vmatprep.subr.mxu0 0.0
    %3121 = vmatpush1.msra.mxu0 0.0
    %3122 = vmatprep.subr.mxu0 0.0
    %3123 = vmatpush1.msra.mxu0 0.0
    %3124 = vmatprep.subr.mxu0 0.0
    %3125 = vmatpush1.msra.mxu0 0.0
    %3126 = vmatprep.subr.mxu0 0.0
    %3127 = vmatpush1.msra.mxu0 0.0
    %3128 = vmatprep.subr.mxu0 0.0
    %3129 = vmatpush1.msra.mxu0 0.0
    %3130 = vmatprep.subr.mxu0 0.0
    %3131 = vmatpush1.msra.mxu0 0.0
    %3132 = vmatprep.subr.mxu0 0.0
    %3133 = vmatpush1.msra.mxu0 0.0
    %3134 = vmatprep.subr.mxu0 0.0
    %3135 = vmatpush1.msra.mxu0 0.0
    %3136 = vmatprep.subr.mxu0 0.0
    %3137 = vmatpush1.msra.mxu0 0.0
    %3138 = vmatprep.subr.mxu0 0.0
    %3139 = vmatpush1.msra.mxu0 0.0
    %3140 = vmatprep.subr.mxu0 0.0
    %3141 = vmatpush1.msra.mxu0 0.0
    %3142 = vmatprep.subr.mxu0 0.0
    %3143 = vmatpush1.msra.mxu0 0.0
    %3144 = vmatprep.subr.mxu0 0.0
    %3145 = vmatpush1.msra.mxu0 %v3107
    %3146 = vmatprep.subr.mxu0 0.0
    %3147 = vmatpush1.msra.mxu0 %v3105
    %3148 = vmatprep.subr.mxu0 0.0
    %3149 = vmatpush2.msra.mxu0 0.0
    %3150 = vmatprep.subr.mxu0 0.0
    %3151 = vmatpush2.msra.mxu0 0.0
    %3152 = vmatprep.subr.mxu0 0.0
    %3153 = vmatpush2.msra.mxu0 0.0
    %3154 = vmatprep.subr.mxu0 0.0
    %3155 = vmatpush2.msra.mxu0 0.0
    %3156 = vmatprep.subr.mxu0 0.0
    %3157 = vmatpush2.msra.mxu0 0.0
    %3158 = vmatprep.subr.mxu0 0.0
    %3159 = vmatpush2.msra.mxu0 0.0
    %3160 = vmatprep.subr.mxu0 0.0
    %3161 = vmatpush2.msra.mxu0 0.0
    %3162 = vmatprep.subr.mxu0 0.0
    %3163 = vmatpush2.msra.mxu0 0.0
    %3164 = vmatprep.subr.mxu0 0.0
    %3165 = vmatpush2.msra.mxu0 0.0
    %3166 = vmatprep.subr.mxu0 0.0
    %3167 = vmatpush2.msra.mxu0 0.0
    %3168 = vmatprep.subr.mxu0 0.0
    %3169 = vmatpush2.msra.mxu0 0.0
    %3170 = vmatprep.subr.mxu0 0.0
    %3171 = vmatpush2.msra.mxu0 0.0
    %3172 = vmatprep.subr.mxu0 0.0
    %3173 = vmatpush2.msra.mxu0 0.0
    %3174 = vmatprep.subr.mxu0 0.0
    %3175 = vmatpush2.msra.mxu0 0.0
    %3176 = vmatprep.subr.mxu0 0.0
    %3177 = vmatpush2.msra.mxu0 0.0
    %3178 = vmatprep.subr.mxu0 0.0
    %3179 = vmatpush2.msra.mxu0 0.0
    %3180 = vmatprep.mubr.f32.mxu0 0.0
    %3181 = vmatmul.mubr.f32.gmra.mxu0 %v3111
    %v3182 = vpop.f32.mrf.mxu0
    %v3183 = vadd.f32 0.0, %v3182
    %v3184 = vpop.f32.mrf.mxu0
    %3185 = vmatprep.mubr.f32.mxu0 0.0
    %3186 = vmatmul.mubr.f32.gmra.mxu0 %v3114
    %v3187 = vpop.f32.mrf.mxu0
    %v3188 = vadd.f32 0.0, %v3187
    %v3189 = vpop.f32.mrf.mxu0
    %3190 = vdwg.mxu0
    %3191 = vrot.lane.b32.xlu0 %v2575, 80
    %v3192 = vpop.permute.xlu0 %3191
    %3193 = vrot.lane.b32.xlu0 %v2581, 80
    %v3194 = vpop.permute.xlu0 %3193
    %3195 = vrot.lane.b32.xlu0 %v2575, 16
    %v3196 = vpop.permute.xlu0 %3195
    %3197 = vrot.lane.b32.xlu0 %v2581, 16
    %v3198 = vpop.permute.xlu0 %3197
    %v3199 = vsel %vm259, %v3192, 0
    %v3201 = vsel %vm259, %v3194, 0
    %v3203 = vsel %vm259, %v3196, 0
    %v3205 = vsel %vm259, %v3198, 0
    %3207 = vmatprep.subr.mxu0 0.0
    %3208 = vmatpush1.xpose.msra.mxu0 0.0
    %3209 = vmatprep.subr.mxu0 0.0
    %3210 = vmatpush1.xpose.msra.mxu0 0.0
    %3211 = vmatprep.subr.mxu0 0.0
    %3212 = vmatpush1.xpose.msra.mxu0 0.0
    %3213 = vmatprep.subr.mxu0 0.0
    %3214 = vmatpush1.xpose.msra.mxu0 0.0
    %3215 = vmatprep.subr.mxu0 0.0
    %3216 = vmatpush1.xpose.msra.mxu0 0.0
    %3217 = vmatprep.subr.mxu0 0.0
    %3218 = vmatpush1.xpose.msra.mxu0 0.0
    %3219 = vmatprep.subr.mxu0 0.0
    %3220 = vmatpush1.xpose.msra.mxu0 0.0
    %3221 = vmatprep.subr.mxu0 0.0
    %3222 = vmatpush1.xpose.msra.mxu0 0.0
    %3223 = vmatprep.subr.mxu0 0.0
    %3224 = vmatpush1.xpose.msra.mxu0 0.0
    %3225 = vmatprep.subr.mxu0 0.0
    %3226 = vmatpush1.xpose.msra.mxu0 0.0
    %3227 = vmatprep.subr.mxu0 0.0
    %3228 = vmatpush1.xpose.msra.mxu0 0.0
    %3229 = vmatprep.subr.mxu0 0.0
    %3230 = vmatpush1.xpose.msra.mxu0 0.0
    %3231 = vmatprep.subr.mxu0 0.0
    %3232 = vmatpush1.xpose.msra.mxu0 0.0
    %3233 = vmatprep.subr.mxu0 0.0
    %3234 = vmatpush1.xpose.msra.mxu0 0.0
    %3235 = vmatprep.subr.mxu0 0.0
    %3236 = vmatpush1.xpose.msra.mxu0 %v3205
    %3237 = vmatprep.subr.mxu0 0.0
    %3238 = vmatpush1.xpose.msra.mxu0 %v3203
    %3239 = vmatprep.subr.mxu0 0.0
    %3240 = vmatpush2.xpose.msra.mxu0 0.0
    %3241 = vmatprep.subr.mxu0 0.0
    %3242 = vmatpush2.xpose.msra.mxu0 0.0
    %3243 = vmatprep.subr.mxu0 0.0
    %3244 = vmatpush2.xpose.msra.mxu0 0.0
    %3245 = vmatprep.subr.mxu0 0.0
    %3246 = vmatpush2.xpose.msra.mxu0 0.0
    %3247 = vmatprep.subr.mxu0 0.0
    %3248 = vmatpush2.xpose.msra.mxu0 0.0
    %3249 = vmatprep.subr.mxu0 0.0
    %3250 = vmatpush2.xpose.msra.mxu0 0.0
    %3251 = vmatprep.subr.mxu0 0.0
    %3252 = vmatpush2.xpose.msra.mxu0 0.0
    %3253 = vmatprep.subr.mxu0 0.0
    %3254 = vmatpush2.xpose.msra.mxu0 0.0
    %3255 = vmatprep.subr.mxu0 0.0
    %3256 = vmatpush2.xpose.msra.mxu0 0.0
    %3257 = vmatprep.subr.mxu0 0.0
    %3258 = vmatpush2.xpose.msra.mxu0 0.0
    %3259 = vmatprep.subr.mxu0 0.0
    %3260 = vmatpush2.xpose.msra.mxu0 0.0
    %3261 = vmatprep.subr.mxu0 0.0
    %3262 = vmatpush2.xpose.msra.mxu0 0.0
    %3263 = vmatprep.subr.mxu0 0.0
    %3264 = vmatpush2.xpose.msra.mxu0 0.0
    %3265 = vmatprep.subr.mxu0 0.0
    %3266 = vmatpush2.xpose.msra.mxu0 0.0
    %3267 = vmatprep.subr.mxu0 0.0
    %3268 = vmatpush2.xpose.msra.mxu0 0.0
    %3269 = vmatprep.subr.mxu0 0.0
    %3270 = vmatpush2.xpose.msra.mxu0 0.0
    %3271 = vmatprep.mubr.f32.mxu0 0.0
    %3272 = vmatmul.mubr.f32.gmra.mxu0 %v3199
    %v3273 = vpop.f32.mrf.mxu0
    %v3274 = vadd.f32 0.0, %v3273
    %v3275 = vpop.f32.mrf.mxu0
    %3276 = vmatprep.mubr.f32.mxu0 0.0
    %3277 = vmatmul.mubr.f32.gmra.mxu0 %v3201
    %v3278 = vpop.f32.mrf.mxu0
    %v3279 = vadd.f32 0.0, %v3278
    %v3280 = vpop.f32.mrf.mxu0
    %3281 = vdwg.mxu0
    %v3282 = vsel %vm259, %v3274, -inf
    %3283 = vmax.xlane.f32.xlu0 %v3282
    %v3284 = vpop.xlane.xlu0 %3283
    %v3285 = vsel %vm259, %v3279, -inf
    %3286 = vmax.xlane.f32.xlu0 %v3285
    %v3287 = vpop.xlane.xlu0 %3286
    %v3288 = vsub.f32 %v3274, %v3284
    %v3289 = vsub.f32 %v3279, %v3287
    %v3290 = vmul.f32 %v3288, 1.442695
    %v3291 = vpow.pop %v3290
    %v3292 = vmul.f32 %v3289, 1.442695
    %v3293 = vpow.pop %v3292
    %v3294 = vsel %vm259, %v3291, 0.0
    %3295 = vadd.xlane.f32.xlu0 %v3294
    %v3296 = vpop.xlane.xlu0 %3295
    %v3297 = vsel %vm259, %v3293, 0.0
    %3298 = vadd.xlane.f32.xlu0 %v3297
    %v3299 = vpop.xlane.xlu0 %3298
    %v3300 = vrcp.pop %v3296
    %v3301 = vrcp.pop %v3299
    %v3302 = vmul.f32 %v3291, %v3300
    %v3303 = vmul.f32 %v3293, %v3301
    %3304 = vrot.lane.b32.xlu0 %v2577, 80
    %v3305 = vpop.permute.xlu0 %3304
    %3306 = vrot.lane.b32.xlu0 %v2583, 80
    %v3307 = vpop.permute.xlu0 %3306
    %v3311 = vsel %vm259, %v3302, 0
    %v3314 = vsel %vm259, %v3303, 0
    %3316 = vmatprep.subr.mxu0 0.0
    %3317 = vmatpush1.msra.mxu0 0.0
    %3318 = vmatprep.subr.mxu0 0.0
    %3319 = vmatpush1.msra.mxu0 0.0
    %3320 = vmatprep.subr.mxu0 0.0
    %3321 = vmatpush1.msra.mxu0 0.0
    %3322 = vmatprep.subr.mxu0 0.0
    %3323 = vmatpush1.msra.mxu0 0.0
    %3324 = vmatprep.subr.mxu0 0.0
    %3325 = vmatpush1.msra.mxu0 0.0
    %3326 = vmatprep.subr.mxu0 0.0
    %3327 = vmatpush1.msra.mxu0 0.0
    %3328 = vmatprep.subr.mxu0 0.0
    %3329 = vmatpush1.msra.mxu0 0.0
    %3330 = vmatprep.subr.mxu0 0.0
    %3331 = vmatpush1.msra.mxu0 0.0
    %3332 = vmatprep.subr.mxu0 0.0
    %3333 = vmatpush1.msra.mxu0 0.0
    %3334 = vmatprep.subr.mxu0 0.0
    %3335 = vmatpush1.msra.mxu0 0.0
    %3336 = vmatprep.subr.mxu0 0.0
    %3337 = vmatpush1.msra.mxu0 0.0
    %3338 = vmatprep.subr.mxu0 0.0
    %3339 = vmatpush1.msra.mxu0 0.0
    %3340 = vmatprep.subr.mxu0 0.0
    %3341 = vmatpush1.msra.mxu0 0.0
    %3342 = vmatprep.subr.mxu0 0.0
    %3343 = vmatpush1.msra.mxu0 0.0
    %3344 = vmatprep.subr.mxu0 0.0
    %3345 = vmatpush1.msra.mxu0 %v3307
    %3346 = vmatprep.subr.mxu0 0.0
    %3347 = vmatpush1.msra.mxu0 %v3305
    %3348 = vmatprep.subr.mxu0 0.0
    %3349 = vmatpush2.msra.mxu0 0.0
    %3350 = vmatprep.subr.mxu0 0.0
    %3351 = vmatpush2.msra.mxu0 0.0
    %3352 = vmatprep.subr.mxu0 0.0
    %3353 = vmatpush2.msra.mxu0 0.0
    %3354 = vmatprep.subr.mxu0 0.0
    %3355 = vmatpush2.msra.mxu0 0.0
    %3356 = vmatprep.subr.mxu0 0.0
    %3357 = vmatpush2.msra.mxu0 0.0
    %3358 = vmatprep.subr.mxu0 0.0
    %3359 = vmatpush2.msra.mxu0 0.0
    %3360 = vmatprep.subr.mxu0 0.0
    %3361 = vmatpush2.msra.mxu0 0.0
    %3362 = vmatprep.subr.mxu0 0.0
    %3363 = vmatpush2.msra.mxu0 0.0
    %3364 = vmatprep.subr.mxu0 0.0
    %3365 = vmatpush2.msra.mxu0 0.0
    %3366 = vmatprep.subr.mxu0 0.0
    %3367 = vmatpush2.msra.mxu0 0.0
    %3368 = vmatprep.subr.mxu0 0.0
    %3369 = vmatpush2.msra.mxu0 0.0
    %3370 = vmatprep.subr.mxu0 0.0
    %3371 = vmatpush2.msra.mxu0 0.0
    %3372 = vmatprep.subr.mxu0 0.0
    %3373 = vmatpush2.msra.mxu0 0.0
    %3374 = vmatprep.subr.mxu0 0.0
    %3375 = vmatpush2.msra.mxu0 0.0
    %3376 = vmatprep.subr.mxu0 0.0
    %3377 = vmatpush2.msra.mxu0 0.0
    %3378 = vmatprep.subr.mxu0 0.0
    %3379 = vmatpush2.msra.mxu0 0.0
    %3380 = vmatprep.mubr.f32.mxu0 0.0
    %3381 = vmatmul.mubr.f32.gmra.mxu0 %v3311
    %v3382 = vpop.f32.mrf.mxu0
    %v3383 = vadd.f32 0.0, %v3382
    %v3384 = vpop.f32.mrf.mxu0
    %3385 = vmatprep.mubr.f32.mxu0 0.0
    %3386 = vmatmul.mubr.f32.gmra.mxu0 %v3314
    %v3387 = vpop.f32.mrf.mxu0
    %v3388 = vadd.f32 0.0, %v3387
    %v3389 = vpop.f32.mrf.mxu0
    %3390 = vdwg.mxu0
    %3393 = vrot.lane.b32.xlu0 %v2983, 16
    %v3394 = vpop.permute.xlu0 %3393
    %3395 = vrot.lane.b32.xlu0 %v2988, 16
    %v3396 = vpop.permute.xlu0 %3395
    %3401 = vrot.lane.b32.xlu0 %v3183, 32
    %v3402 = vpop.permute.xlu0 %3401
    %3403 = vrot.lane.b32.xlu0 %v3188, 32
    %v3404 = vpop.permute.xlu0 %3403
    %3409 = vrot.lane.b32.xlu0 %v3383, 48
    %v3410 = vpop.permute.xlu0 %3409
    %3411 = vrot.lane.b32.xlu0 %v3388, 48
    %v3412 = vpop.permute.xlu0 %3411
    %v3415 = vsel %vm259, %v2781, %v3394
    %v3416 = vsel %vm259, %v2786, %v3396
    %v3417 = vsel %vm1074, %v3415, %v3402
    %v3418 = vsel %vm1074, %v3416, %v3404
    %v3419 = vsel %vm1077, %v3417, %v3410
    %v3420 = vsel %vm1077, %v3418, %v3412
    %s3421 = scalar_lea.vmem [#allocation7], 64
    %v3422 = vld [vmem:[%s3421] sm:$0xff]
    %v3423 = vld [vmem:[%s3421 + $0x8] sm:$0xff]
    %v3424 = vld [vmem:[%s3421 + $0x10] sm:$0xff]
    %v3425 = vld [vmem:[%s3421 + $0x18] sm:$0xff]
    %v3426 = vld [vmem:[%s3421 + $0x20] sm:$0xff]
    %v3427 = vld [vmem:[%s3421 + $0x28] sm:$0xff]
    %v3428 = vld [vmem:[%s3421 + $0x30] sm:$0xff]
    %v3429 = vld [vmem:[%s3421 + $0x38] sm:$0xff]
    %v3431 = vsel %vm151, %v3419, 0
    %v3434 = vsel %vm151, %v3420, 0
    %3436 = vmatprep.subr.mxu0 0.0
    %3437 = vmatpush1.msra.mxu0 0.0
    %3438 = vmatprep.subr.mxu0 0.0
    %3439 = vmatpush1.msra.mxu0 0.0
    %3440 = vmatprep.subr.mxu0 0.0
    %3441 = vmatpush1.msra.mxu0 0.0
    %3442 = vmatprep.subr.mxu0 0.0
    %3443 = vmatpush1.msra.mxu0 0.0
    %3444 = vmatprep.subr.mxu0 0.0
    %3445 = vmatpush1.msra.mxu0 0.0
    %3446 = vmatprep.subr.mxu0 0.0
    %3447 = vmatpush1.msra.mxu0 0.0
    %3448 = vmatprep.subr.mxu0 0.0
    %3449 = vmatpush1.msra.mxu0 0.0
    %3450 = vmatprep.subr.mxu0 0.0
    %3451 = vmatpush1.msra.mxu0 0.0
    %3452 = vmatprep.subr.mxu0 0.0
    %3453 = vmatpush1.msra.mxu0 %v3429
    %3454 = vmatprep.subr.mxu0 0.0
    %3455 = vmatpush1.msra.mxu0 %v3428
    %3456 = vmatprep.subr.mxu0 0.0
    %3457 = vmatpush1.msra.mxu0 %v3427
    %3458 = vmatprep.subr.mxu0 0.0
    %3459 = vmatpush1.msra.mxu0 %v3426
    %3460 = vmatprep.subr.mxu0 0.0
    %3461 = vmatpush1.msra.mxu0 %v3425
    %3462 = vmatprep.subr.mxu0 0.0
    %3463 = vmatpush1.msra.mxu0 %v3424
    %3464 = vmatprep.subr.mxu0 0.0
    %3465 = vmatpush1.msra.mxu0 %v3423
    %3466 = vmatprep.subr.mxu0 0.0
    %3467 = vmatpush1.msra.mxu0 %v3422
    %3468 = vmatprep.subr.mxu0 0.0
    %3469 = vmatpush2.msra.mxu0 0.0
    %3470 = vmatprep.subr.mxu0 0.0
    %3471 = vmatpush2.msra.mxu0 0.0
    %3472 = vmatprep.subr.mxu0 0.0
    %3473 = vmatpush2.msra.mxu0 0.0
    %3474 = vmatprep.subr.mxu0 0.0
    %3475 = vmatpush2.msra.mxu0 0.0
    %3476 = vmatprep.subr.mxu0 0.0
    %3477 = vmatpush2.msra.mxu0 0.0
    %3478 = vmatprep.subr.mxu0 0.0
    %3479 = vmatpush2.msra.mxu0 0.0
    %3480 = vmatprep.subr.mxu0 0.0
    %3481 = vmatpush2.msra.mxu0 0.0
    %3482 = vmatprep.subr.mxu0 0.0
    %3483 = vmatpush2.msra.mxu0 0.0
    %3484 = vmatprep.subr.mxu0 0.0
    %3485 = vmatpush2.msra.mxu0 0.0
    %3486 = vmatprep.subr.mxu0 0.0
    %3487 = vmatpush2.msra.mxu0 0.0
    %3488 = vmatprep.subr.mxu0 0.0
    %3489 = vmatpush2.msra.mxu0 0.0
    %3490 = vmatprep.subr.mxu0 0.0
    %3491 = vmatpush2.msra.mxu0 0.0
    %3492 = vmatprep.subr.mxu0 0.0
    %3493 = vmatpush2.msra.mxu0 0.0
    %3494 = vmatprep.subr.mxu0 0.0
    %3495 = vmatpush2.msra.mxu0 0.0
    %3496 = vmatprep.subr.mxu0 0.0
    %3497 = vmatpush2.msra.mxu0 0.0
    %3498 = vmatprep.subr.mxu0 0.0
    %3499 = vmatpush2.msra.mxu0 0.0
    %3500 = vmatprep.mubr.f32.mxu0 0.0
    %3501 = vmatmul.mubr.f32.gmra.mxu0 %v3431
    %v3502 = vpop.f32.mrf.mxu0
    %v3503 = vadd.f32 0.0, %v3502
    %v3504 = vpop.f32.mrf.mxu0
    %3505 = vmatprep.mubr.f32.mxu0 0.0
    %3506 = vmatmul.mubr.f32.gmra.mxu0 %v3434
    %v3507 = vpop.f32.mrf.mxu0
    %v3508 = vadd.f32 0.0, %v3507
    %v3509 = vpop.f32.mrf.mxu0
    %3510 = vdwg.mxu0
    %3513 = vrot.lane.b32.xlu0 %v2587, 64
    %v3514 = vpop.permute.xlu0 %3513
    %3515 = vrot.lane.b32.xlu0 %v2593, 64
    %v3516 = vpop.permute.xlu0 %3515
    %v3517 = vsel %vm259, %v2587, 0
    %v3519 = vsel %vm259, %v2593, 0
    %v3521 = vsel %vm259, %v3514, 0
    %v3523 = vsel %vm259, %v3516, 0
    %3525 = vmatprep.subr.mxu0 0.0
    %3526 = vmatpush1.xpose.msra.mxu0 0.0
    %3527 = vmatprep.subr.mxu0 0.0
    %3528 = vmatpush1.xpose.msra.mxu0 0.0
    %3529 = vmatprep.subr.mxu0 0.0
    %3530 = vmatpush1.xpose.msra.mxu0 0.0
    %3531 = vmatprep.subr.mxu0 0.0
    %3532 = vmatpush1.xpose.msra.mxu0 0.0
    %3533 = vmatprep.subr.mxu0 0.0
    %3534 = vmatpush1.xpose.msra.mxu0 0.0
    %3535 = vmatprep.subr.mxu0 0.0
    %3536 = vmatpush1.xpose.msra.mxu0 0.0
    %3537 = vmatprep.subr.mxu0 0.0
    %3538 = vmatpush1.xpose.msra.mxu0 0.0
    %3539 = vmatprep.subr.mxu0 0.0
    %3540 = vmatpush1.xpose.msra.mxu0 0.0
    %3541 = vmatprep.subr.mxu0 0.0
    %3542 = vmatpush1.xpose.msra.mxu0 0.0
    %3543 = vmatprep.subr.mxu0 0.0
    %3544 = vmatpush1.xpose.msra.mxu0 0.0
    %3545 = vmatprep.subr.mxu0 0.0
    %3546 = vmatpush1.xpose.msra.mxu0 0.0
    %3547 = vmatprep.subr.mxu0 0.0
    %3548 = vmatpush1.xpose.msra.mxu0 0.0
    %3549 = vmatprep.subr.mxu0 0.0
    %3550 = vmatpush1.xpose.msra.mxu0 0.0
    %3551 = vmatprep.subr.mxu0 0.0
    %3552 = vmatpush1.xpose.msra.mxu0 0.0
    %3553 = vmatprep.subr.mxu0 0.0
    %3554 = vmatpush1.xpose.msra.mxu0 %v3523
    %3555 = vmatprep.subr.mxu0 0.0
    %3556 = vmatpush1.xpose.msra.mxu0 %v3521
    %3557 = vmatprep.subr.mxu0 0.0
    %3558 = vmatpush2.xpose.msra.mxu0 0.0
    %3559 = vmatprep.subr.mxu0 0.0
    %3560 = vmatpush2.xpose.msra.mxu0 0.0
    %3561 = vmatprep.subr.mxu0 0.0
    %3562 = vmatpush2.xpose.msra.mxu0 0.0
    %3563 = vmatprep.subr.mxu0 0.0
    %3564 = vmatpush2.xpose.msra.mxu0 0.0
    %3565 = vmatprep.subr.mxu0 0.0
    %3566 = vmatpush2.xpose.msra.mxu0 0.0
    %3567 = vmatprep.subr.mxu0 0.0
    %3568 = vmatpush2.xpose.msra.mxu0 0.0
    %3569 = vmatprep.subr.mxu0 0.0
    %3570 = vmatpush2.xpose.msra.mxu0 0.0
    %3571 = vmatprep.subr.mxu0 0.0
    %3572 = vmatpush2.xpose.msra.mxu0 0.0
    %3573 = vmatprep.subr.mxu0 0.0
    %3574 = vmatpush2.xpose.msra.mxu0 0.0
    %3575 = vmatprep.subr.mxu0 0.0
    %3576 = vmatpush2.xpose.msra.mxu0 0.0
    %3577 = vmatprep.subr.mxu0 0.0
    %3578 = vmatpush2.xpose.msra.mxu0 0.0
    %3579 = vmatprep.subr.mxu0 0.0
    %3580 = vmatpush2.xpose.msra.mxu0 0.0
    %3581 = vmatprep.subr.mxu0 0.0
    %3582 = vmatpush2.xpose.msra.mxu0 0.0
    %3583 = vmatprep.subr.mxu0 0.0
    %3584 = vmatpush2.xpose.msra.mxu0 0.0
    %3585 = vmatprep.subr.mxu0 0.0
    %3586 = vmatpush2.xpose.msra.mxu0 0.0
    %3587 = vmatprep.subr.mxu0 0.0
    %3588 = vmatpush2.xpose.msra.mxu0 0.0
    %3589 = vmatprep.mubr.f32.mxu0 0.0
    %3590 = vmatmul.mubr.f32.gmra.mxu0 %v3517
    %v3591 = vpop.f32.mrf.mxu0
    %v3592 = vadd.f32 0.0, %v3591
    %v3593 = vpop.f32.mrf.mxu0
    %3594 = vmatprep.mubr.f32.mxu0 0.0
    %3595 = vmatmul.mubr.f32.gmra.mxu0 %v3519
    %v3596 = vpop.f32.mrf.mxu0
    %v3597 = vadd.f32 0.0, %v3596
    %v3598 = vpop.f32.mrf.mxu0
    %3599 = vdwg.mxu0
    %v3600 = vsel %vm259, %v3592, -inf
    %3601 = vmax.xlane.f32.xlu0 %v3600
    %v3602 = vpop.xlane.xlu0 %3601
    %v3603 = vsel %vm259, %v3597, -inf
    %3604 = vmax.xlane.f32.xlu0 %v3603
    %v3605 = vpop.xlane.xlu0 %3604
    %v3606 = vsub.f32 %v3592, %v3602
    %v3607 = vsub.f32 %v3597, %v3605
    %v3608 = vmul.f32 %v3606, 1.442695
    %v3609 = vpow.pop %v3608
    %v3610 = vmul.f32 %v3607, 1.442695
    %v3611 = vpow.pop %v3610
    %v3612 = vsel %vm259, %v3609, 0.0
    %3613 = vadd.xlane.f32.xlu0 %v3612
    %v3614 = vpop.xlane.xlu0 %3613
    %v3615 = vsel %vm259, %v3611, 0.0
    %3616 = vadd.xlane.f32.xlu0 %v3615
    %v3617 = vpop.xlane.xlu0 %3616
    %v3618 = vrcp.pop %v3614
    %v3619 = vrcp.pop %v3617
    %v3620 = vmul.f32 %v3609, %v3618
    %v3621 = vmul.f32 %v3611, %v3619
    %v3623 = vsel %vm259, %v3620, 0
    %v3626 = vsel %vm259, %v3621, 0
    %3628 = vmatprep.subr.mxu0 0.0
    %3629 = vmatpush1.msra.mxu0 0.0
    %3630 = vmatprep.subr.mxu0 0.0
    %3631 = vmatpush1.msra.mxu0 0.0
    %3632 = vmatprep.subr.mxu0 0.0
    %3633 = vmatpush1.msra.mxu0 0.0
    %3634 = vmatprep.subr.mxu0 0.0
    %3635 = vmatpush1.msra.mxu0 0.0
    %3636 = vmatprep.subr.mxu0 0.0
    %3637 = vmatpush1.msra.mxu0 0.0
    %3638 = vmatprep.subr.mxu0 0.0
    %3639 = vmatpush1.msra.mxu0 0.0
    %3640 = vmatprep.subr.mxu0 0.0
    %3641 = vmatpush1.msra.mxu0 0.0
    %3642 = vmatprep.subr.mxu0 0.0
    %3643 = vmatpush1.msra.mxu0 0.0
    %3644 = vmatprep.subr.mxu0 0.0
    %3645 = vmatpush1.msra.mxu0 0.0
    %3646 = vmatprep.subr.mxu0 0.0
    %3647 = vmatpush1.msra.mxu0 0.0
    %3648 = vmatprep.subr.mxu0 0.0
    %3649 = vmatpush1.msra.mxu0 0.0
    %3650 = vmatprep.subr.mxu0 0.0
    %3651 = vmatpush1.msra.mxu0 0.0
    %3652 = vmatprep.subr.mxu0 0.0
    %3653 = vmatpush1.msra.mxu0 0.0
    %3654 = vmatprep.subr.mxu0 0.0
    %3655 = vmatpush1.msra.mxu0 0.0
    %3656 = vmatprep.subr.mxu0 0.0
    %3657 = vmatpush1.msra.mxu0 %v2595
    %3658 = vmatprep.subr.mxu0 0.0
    %3659 = vmatpush1.msra.mxu0 %v2589
    %3660 = vmatprep.subr.mxu0 0.0
    %3661 = vmatpush2.msra.mxu0 0.0
    %3662 = vmatprep.subr.mxu0 0.0
    %3663 = vmatpush2.msra.mxu0 0.0
    %3664 = vmatprep.subr.mxu0 0.0
    %3665 = vmatpush2.msra.mxu0 0.0
    %3666 = vmatprep.subr.mxu0 0.0
    %3667 = vmatpush2.msra.mxu0 0.0
    %3668 = vmatprep.subr.mxu0 0.0
    %3669 = vmatpush2.msra.mxu0 0.0
    %3670 = vmatprep.subr.mxu0 0.0
    %3671 = vmatpush2.msra.mxu0 0.0
    %3672 = vmatprep.subr.mxu0 0.0
    %3673 = vmatpush2.msra.mxu0 0.0
    %3674 = vmatprep.subr.mxu0 0.0
    %3675 = vmatpush2.msra.mxu0 0.0
    %3676 = vmatprep.subr.mxu0 0.0
    %3677 = vmatpush2.msra.mxu0 0.0
    %3678 = vmatprep.subr.mxu0 0.0
    %3679 = vmatpush2.msra.mxu0 0.0
    %3680 = vmatprep.subr.mxu0 0.0
    %3681 = vmatpush2.msra.mxu0 0.0
    %3682 = vmatprep.subr.mxu0 0.0
    %3683 = vmatpush2.msra.mxu0 0.0
    %3684 = vmatprep.subr.mxu0 0.0
    %3685 = vmatpush2.msra.mxu0 0.0
    %3686 = vmatprep.subr.mxu0 0.0
    %3687 = vmatpush2.msra.mxu0 0.0
    %3688 = vmatprep.subr.mxu0 0.0
    %3689 = vmatpush2.msra.mxu0 0.0
    %3690 = vmatprep.subr.mxu0 0.0
    %3691 = vmatpush2.msra.mxu0 0.0
    %3692 = vmatprep.mubr.f32.mxu0 0.0
    %3693 = vmatmul.mubr.f32.gmra.mxu0 %v3623
    %v3694 = vpop.f32.mrf.mxu0
    %v3695 = vadd.f32 0.0, %v3694
    %v3696 = vpop.f32.mrf.mxu0
    %3697 = vmatprep.mubr.f32.mxu0 0.0
    %3698 = vmatmul.mubr.f32.gmra.mxu0 %v3626
    %v3699 = vpop.f32.mrf.mxu0
    %v3700 = vadd.f32 0.0, %v3699
    %v3701 = vpop.f32.mrf.mxu0
    %3702 = vdwg.mxu0
    %3703 = vrot.lane.b32.xlu0 %v2587, 112
    %v3704 = vpop.permute.xlu0 %3703
    %3705 = vrot.lane.b32.xlu0 %v2593, 112
    %v3706 = vpop.permute.xlu0 %3705
    %3707 = vrot.lane.b32.xlu0 %v2587, 48
    %v3708 = vpop.permute.xlu0 %3707
    %3709 = vrot.lane.b32.xlu0 %v2593, 48
    %v3710 = vpop.permute.xlu0 %3709
    %v3711 = vsel %vm259, %v3704, 0
    %v3713 = vsel %vm259, %v3706, 0
    %v3715 = vsel %vm259, %v3708, 0
    %v3717 = vsel %vm259, %v3710, 0
    %3719 = vmatprep.subr.mxu0 0.0
    %3720 = vmatpush1.xpose.msra.mxu0 0.0
    %3721 = vmatprep.subr.mxu0 0.0
    %3722 = vmatpush1.xpose.msra.mxu0 0.0
    %3723 = vmatprep.subr.mxu0 0.0
    %3724 = vmatpush1.xpose.msra.mxu0 0.0
    %3725 = vmatprep.subr.mxu0 0.0
    %3726 = vmatpush1.xpose.msra.mxu0 0.0
    %3727 = vmatprep.subr.mxu0 0.0
    %3728 = vmatpush1.xpose.msra.mxu0 0.0
    %3729 = vmatprep.subr.mxu0 0.0
    %3730 = vmatpush1.xpose.msra.mxu0 0.0
    %3731 = vmatprep.subr.mxu0 0.0
    %3732 = vmatpush1.xpose.msra.mxu0 0.0
    %3733 = vmatprep.subr.mxu0 0.0
    %3734 = vmatpush1.xpose.msra.mxu0 0.0
    %3735 = vmatprep.subr.mxu0 0.0
    %3736 = vmatpush1.xpose.msra.mxu0 0.0
    %3737 = vmatprep.subr.mxu0 0.0
    %3738 = vmatpush1.xpose.msra.mxu0 0.0
    %3739 = vmatprep.subr.mxu0 0.0
    %3740 = vmatpush1.xpose.msra.mxu0 0.0
    %3741 = vmatprep.subr.mxu0 0.0
    %3742 = vmatpush1.xpose.msra.mxu0 0.0
    %3743 = vmatprep.subr.mxu0 0.0
    %3744 = vmatpush1.xpose.msra.mxu0 0.0
    %3745 = vmatprep.subr.mxu0 0.0
    %3746 = vmatpush1.xpose.msra.mxu0 0.0
    %3747 = vmatprep.subr.mxu0 0.0
    %3748 = vmatpush1.xpose.msra.mxu0 %v3717
    %3749 = vmatprep.subr.mxu0 0.0
    %3750 = vmatpush1.xpose.msra.mxu0 %v3715
    %3751 = vmatprep.subr.mxu0 0.0
    %3752 = vmatpush2.xpose.msra.mxu0 0.0
    %3753 = vmatprep.subr.mxu0 0.0
    %3754 = vmatpush2.xpose.msra.mxu0 0.0
    %3755 = vmatprep.subr.mxu0 0.0
    %3756 = vmatpush2.xpose.msra.mxu0 0.0
    %3757 = vmatprep.subr.mxu0 0.0
    %3758 = vmatpush2.xpose.msra.mxu0 0.0
    %3759 = vmatprep.subr.mxu0 0.0
    %3760 = vmatpush2.xpose.msra.mxu0 0.0
    %3761 = vmatprep.subr.mxu0 0.0
    %3762 = vmatpush2.xpose.msra.mxu0 0.0
    %3763 = vmatprep.subr.mxu0 0.0
    %3764 = vmatpush2.xpose.msra.mxu0 0.0
    %3765 = vmatprep.subr.mxu0 0.0
    %3766 = vmatpush2.xpose.msra.mxu0 0.0
    %3767 = vmatprep.subr.mxu0 0.0
    %3768 = vmatpush2.xpose.msra.mxu0 0.0
    %3769 = vmatprep.subr.mxu0 0.0
    %3770 = vmatpush2.xpose.msra.mxu0 0.0
    %3771 = vmatprep.subr.mxu0 0.0
    %3772 = vmatpush2.xpose.msra.mxu0 0.0
    %3773 = vmatprep.subr.mxu0 0.0
    %3774 = vmatpush2.xpose.msra.mxu0 0.0
    %3775 = vmatprep.subr.mxu0 0.0
    %3776 = vmatpush2.xpose.msra.mxu0 0.0
    %3777 = vmatprep.subr.mxu0 0.0
    %3778 = vmatpush2.xpose.msra.mxu0 0.0
    %3779 = vmatprep.subr.mxu0 0.0
    %3780 = vmatpush2.xpose.msra.mxu0 0.0
    %3781 = vmatprep.subr.mxu0 0.0
    %3782 = vmatpush2.xpose.msra.mxu0 0.0
    %3783 = vmatprep.mubr.f32.mxu0 0.0
    %3784 = vmatmul.mubr.f32.gmra.mxu0 %v3711
    %v3785 = vpop.f32.mrf.mxu0
    %v3786 = vadd.f32 0.0, %v3785
    %v3787 = vpop.f32.mrf.mxu0
    %3788 = vmatprep.mubr.f32.mxu0 0.0
    %3789 = vmatmul.mubr.f32.gmra.mxu0 %v3713
    %v3790 = vpop.f32.mrf.mxu0
    %v3791 = vadd.f32 0.0, %v3790
    %v3792 = vpop.f32.mrf.mxu0
    %3793 = vdwg.mxu0
    %v3794 = vsel %vm259, %v3786, -inf
    %3795 = vmax.xlane.f32.xlu0 %v3794
    %v3796 = vpop.xlane.xlu0 %3795
    %v3797 = vsel %vm259, %v3791, -inf
    %3798 = vmax.xlane.f32.xlu0 %v3797
    %v3799 = vpop.xlane.xlu0 %3798
    %v3800 = vsub.f32 %v3786, %v3796
    %v3801 = vsub.f32 %v3791, %v3799
    %v3802 = vmul.f32 %v3800, 1.442695
    %v3803 = vpow.pop %v3802
    %v3804 = vmul.f32 %v3801, 1.442695
    %v3805 = vpow.pop %v3804
    %v3806 = vsel %vm259, %v3803, 0.0
    %3807 = vadd.xlane.f32.xlu0 %v3806
    %v3808 = vpop.xlane.xlu0 %3807
    %v3809 = vsel %vm259, %v3805, 0.0
    %3810 = vadd.xlane.f32.xlu0 %v3809
    %v3811 = vpop.xlane.xlu0 %3810
    %v3812 = vrcp.pop %v3808
    %v3813 = vrcp.pop %v3811
    %v3814 = vmul.f32 %v3803, %v3812
    %v3815 = vmul.f32 %v3805, %v3813
    %3818 = vrot.lane.b32.xlu0 %v2589, 112
    %v3819 = vpop.permute.xlu0 %3818
    %3820 = vrot.lane.b32.xlu0 %v2595, 112
    %v3821 = vpop.permute.xlu0 %3820
    %v3825 = vsel %vm259, %v3814, 0
    %v3828 = vsel %vm259, %v3815, 0
    %3830 = vmatprep.subr.mxu0 0.0
    %3831 = vmatpush1.msra.mxu0 0.0
    %3832 = vmatprep.subr.mxu0 0.0
    %3833 = vmatpush1.msra.mxu0 0.0
    %3834 = vmatprep.subr.mxu0 0.0
    %3835 = vmatpush1.msra.mxu0 0.0
    %3836 = vmatprep.subr.mxu0 0.0
    %3837 = vmatpush1.msra.mxu0 0.0
    %3838 = vmatprep.subr.mxu0 0.0
    %3839 = vmatpush1.msra.mxu0 0.0
    %3840 = vmatprep.subr.mxu0 0.0
    %3841 = vmatpush1.msra.mxu0 0.0
    %3842 = vmatprep.subr.mxu0 0.0
    %3843 = vmatpush1.msra.mxu0 0.0
    %3844 = vmatprep.subr.mxu0 0.0
    %3845 = vmatpush1.msra.mxu0 0.0
    %3846 = vmatprep.subr.mxu0 0.0
    %3847 = vmatpush1.msra.mxu0 0.0
    %3848 = vmatprep.subr.mxu0 0.0
    %3849 = vmatpush1.msra.mxu0 0.0
    %3850 = vmatprep.subr.mxu0 0.0
    %3851 = vmatpush1.msra.mxu0 0.0
    %3852 = vmatprep.subr.mxu0 0.0
    %3853 = vmatpush1.msra.mxu0 0.0
    %3854 = vmatprep.subr.mxu0 0.0
    %3855 = vmatpush1.msra.mxu0 0.0
    %3856 = vmatprep.subr.mxu0 0.0
    %3857 = vmatpush1.msra.mxu0 0.0
    %3858 = vmatprep.subr.mxu0 0.0
    %3859 = vmatpush1.msra.mxu0 %v3821
    %3860 = vmatprep.subr.mxu0 0.0
    %3861 = vmatpush1.msra.mxu0 %v3819
    %3862 = vmatprep.subr.mxu0 0.0
    %3863 = vmatpush2.msra.mxu0 0.0
    %3864 = vmatprep.subr.mxu0 0.0
    %3865 = vmatpush2.msra.mxu0 0.0
    %3866 = vmatprep.subr.mxu0 0.0
    %3867 = vmatpush2.msra.mxu0 0.0
    %3868 = vmatprep.subr.mxu0 0.0
    %3869 = vmatpush2.msra.mxu0 0.0
    %3870 = vmatprep.subr.mxu0 0.0
    %3871 = vmatpush2.msra.mxu0 0.0
    %3872 = vmatprep.subr.mxu0 0.0
    %3873 = vmatpush2.msra.mxu0 0.0
    %3874 = vmatprep.subr.mxu0 0.0
    %3875 = vmatpush2.msra.mxu0 0.0
    %3876 = vmatprep.subr.mxu0 0.0
    %3877 = vmatpush2.msra.mxu0 0.0
    %3878 = vmatprep.subr.mxu0 0.0
    %3879 = vmatpush2.msra.mxu0 0.0
    %3880 = vmatprep.subr.mxu0 0.0
    %3881 = vmatpush2.msra.mxu0 0.0
    %3882 = vmatprep.subr.mxu0 0.0
    %3883 = vmatpush2.msra.mxu0 0.0
    %3884 = vmatprep.subr.mxu0 0.0
    %3885 = vmatpush2.msra.mxu0 0.0
    %3886 = vmatprep.subr.mxu0 0.0
    %3887 = vmatpush2.msra.mxu0 0.0
    %3888 = vmatprep.subr.mxu0 0.0
    %3889 = vmatpush2.msra.mxu0 0.0
    %3890 = vmatprep.subr.mxu0 0.0
    %3891 = vmatpush2.msra.mxu0 0.0
    %3892 = vmatprep.subr.mxu0 0.0
    %3893 = vmatpush2.msra.mxu0 0.0
    %3894 = vmatprep.mubr.f32.mxu0 0.0
    %3895 = vmatmul.mubr.f32.gmra.mxu0 %v3825
    %v3896 = vpop.f32.mrf.mxu0
    %v3897 = vadd.f32 0.0, %v3896
    %v3898 = vpop.f32.mrf.mxu0
    %3899 = vmatprep.mubr.f32.mxu0 0.0
    %3900 = vmatmul.mubr.f32.gmra.mxu0 %v3828
    %v3901 = vpop.f32.mrf.mxu0
    %v3902 = vadd.f32 0.0, %v3901
    %v3903 = vpop.f32.mrf.mxu0
    %3904 = vdwg.mxu0
    %3905 = vrot.lane.b32.xlu0 %v2587, 96
    %v3906 = vpop.permute.xlu0 %3905
    %3907 = vrot.lane.b32.xlu0 %v2593, 96
    %v3908 = vpop.permute.xlu0 %3907
    %3909 = vrot.lane.b32.xlu0 %v2587, 32
    %v3910 = vpop.permute.xlu0 %3909
    %3911 = vrot.lane.b32.xlu0 %v2593, 32
    %v3912 = vpop.permute.xlu0 %3911
    %v3913 = vsel %vm259, %v3906, 0
    %v3915 = vsel %vm259, %v3908, 0
    %v3917 = vsel %vm259, %v3910, 0
    %v3919 = vsel %vm259, %v3912, 0
    %3921 = vmatprep.subr.mxu0 0.0
    %3922 = vmatpush1.xpose.msra.mxu0 0.0
    %3923 = vmatprep.subr.mxu0 0.0
    %3924 = vmatpush1.xpose.msra.mxu0 0.0
    %3925 = vmatprep.subr.mxu0 0.0
    %3926 = vmatpush1.xpose.msra.mxu0 0.0
    %3927 = vmatprep.subr.mxu0 0.0
    %3928 = vmatpush1.xpose.msra.mxu0 0.0
    %3929 = vmatprep.subr.mxu0 0.0
    %3930 = vmatpush1.xpose.msra.mxu0 0.0
    %3931 = vmatprep.subr.mxu0 0.0
    %3932 = vmatpush1.xpose.msra.mxu0 0.0
    %3933 = vmatprep.subr.mxu0 0.0
    %3934 = vmatpush1.xpose.msra.mxu0 0.0
    %3935 = vmatprep.subr.mxu0 0.0
    %3936 = vmatpush1.xpose.msra.mxu0 0.0
    %3937 = vmatprep.subr.mxu0 0.0
    %3938 = vmatpush1.xpose.msra.mxu0 0.0
    %3939 = vmatprep.subr.mxu0 0.0
    %3940 = vmatpush1.xpose.msra.mxu0 0.0
    %3941 = vmatprep.subr.mxu0 0.0
    %3942 = vmatpush1.xpose.msra.mxu0 0.0
    %3943 = vmatprep.subr.mxu0 0.0
    %3944 = vmatpush1.xpose.msra.mxu0 0.0
    %3945 = vmatprep.subr.mxu0 0.0
    %3946 = vmatpush1.xpose.msra.mxu0 0.0
    %3947 = vmatprep.subr.mxu0 0.0
    %3948 = vmatpush1.xpose.msra.mxu0 0.0
    %3949 = vmatprep.subr.mxu0 0.0
    %3950 = vmatpush1.xpose.msra.mxu0 %v3919
    %3951 = vmatprep.subr.mxu0 0.0
    %3952 = vmatpush1.xpose.msra.mxu0 %v3917
    %3953 = vmatprep.subr.mxu0 0.0
    %3954 = vmatpush2.xpose.msra.mxu0 0.0
    %3955 = vmatprep.subr.mxu0 0.0
    %3956 = vmatpush2.xpose.msra.mxu0 0.0
    %3957 = vmatprep.subr.mxu0 0.0
    %3958 = vmatpush2.xpose.msra.mxu0 0.0
    %3959 = vmatprep.subr.mxu0 0.0
    %3960 = vmatpush2.xpose.msra.mxu0 0.0
    %3961 = vmatprep.subr.mxu0 0.0
    %3962 = vmatpush2.xpose.msra.mxu0 0.0
    %3963 = vmatprep.subr.mxu0 0.0
    %3964 = vmatpush2.xpose.msra.mxu0 0.0
    %3965 = vmatprep.subr.mxu0 0.0
    %3966 = vmatpush2.xpose.msra.mxu0 0.0
    %3967 = vmatprep.subr.mxu0 0.0
    %3968 = vmatpush2.xpose.msra.mxu0 0.0
    %3969 = vmatprep.subr.mxu0 0.0
    %3970 = vmatpush2.xpose.msra.mxu0 0.0
    %3971 = vmatprep.subr.mxu0 0.0
    %3972 = vmatpush2.xpose.msra.mxu0 0.0
    %3973 = vmatprep.subr.mxu0 0.0
    %3974 = vmatpush2.xpose.msra.mxu0 0.0
    %3975 = vmatprep.subr.mxu0 0.0
    %3976 = vmatpush2.xpose.msra.mxu0 0.0
    %3977 = vmatprep.subr.mxu0 0.0
    %3978 = vmatpush2.xpose.msra.mxu0 0.0
    %3979 = vmatprep.subr.mxu0 0.0
    %3980 = vmatpush2.xpose.msra.mxu0 0.0
    %3981 = vmatprep.subr.mxu0 0.0
    %3982 = vmatpush2.xpose.msra.mxu0 0.0
    %3983 = vmatprep.subr.mxu0 0.0
    %3984 = vmatpush2.xpose.msra.mxu0 0.0
    %3985 = vmatprep.mubr.f32.mxu0 0.0
    %3986 = vmatmul.mubr.f32.gmra.mxu0 %v3913
    %v3987 = vpop.f32.mrf.mxu0
    %v3988 = vadd.f32 0.0, %v3987
    %v3989 = vpop.f32.mrf.mxu0
    %3990 = vmatprep.mubr.f32.mxu0 0.0
    %3991 = vmatmul.mubr.f32.gmra.mxu0 %v3915
    %v3992 = vpop.f32.mrf.mxu0
    %v3993 = vadd.f32 0.0, %v3992
    %v3994 = vpop.f32.mrf.mxu0
    %3995 = vdwg.mxu0
    %v3996 = vsel %vm259, %v3988, -inf
    %3997 = vmax.xlane.f32.xlu0 %v3996
    %v3998 = vpop.xlane.xlu0 %3997
    %v3999 = vsel %vm259, %v3993, -inf
    %4000 = vmax.xlane.f32.xlu0 %v3999
    %v4001 = vpop.xlane.xlu0 %4000
    %v4002 = vsub.f32 %v3988, %v3998
    %v4003 = vsub.f32 %v3993, %v4001
    %v4004 = vmul.f32 %v4002, 1.442695
    %v4005 = vpow.pop %v4004
    %v4006 = vmul.f32 %v4003, 1.442695
    %v4007 = vpow.pop %v4006
    %v4008 = vsel %vm259, %v4005, 0.0
    %4009 = vadd.xlane.f32.xlu0 %v4008
    %v4010 = vpop.xlane.xlu0 %4009
    %v4011 = vsel %vm259, %v4007, 0.0
    %4012 = vadd.xlane.f32.xlu0 %v4011
    %v4013 = vpop.xlane.xlu0 %4012
    %v4014 = vrcp.pop %v4010
    %v4015 = vrcp.pop %v4013
    %v4016 = vmul.f32 %v4005, %v4014
    %v4017 = vmul.f32 %v4007, %v4015
    %4018 = vrot.lane.b32.xlu0 %v2589, 96
    %v4019 = vpop.permute.xlu0 %4018
    %4020 = vrot.lane.b32.xlu0 %v2595, 96
    %v4021 = vpop.permute.xlu0 %4020
    %v4025 = vsel %vm259, %v4016, 0
    %v4028 = vsel %vm259, %v4017, 0
    %4030 = vmatprep.subr.mxu0 0.0
    %4031 = vmatpush1.msra.mxu0 0.0
    %4032 = vmatprep.subr.mxu0 0.0
    %4033 = vmatpush1.msra.mxu0 0.0
    %4034 = vmatprep.subr.mxu0 0.0
    %4035 = vmatpush1.msra.mxu0 0.0
    %4036 = vmatprep.subr.mxu0 0.0
    %4037 = vmatpush1.msra.mxu0 0.0
    %4038 = vmatprep.subr.mxu0 0.0
    %4039 = vmatpush1.msra.mxu0 0.0
    %4040 = vmatprep.subr.mxu0 0.0
    %4041 = vmatpush1.msra.mxu0 0.0
    %4042 = vmatprep.subr.mxu0 0.0
    %4043 = vmatpush1.msra.mxu0 0.0
    %4044 = vmatprep.subr.mxu0 0.0
    %4045 = vmatpush1.msra.mxu0 0.0
    %4046 = vmatprep.subr.mxu0 0.0
    %4047 = vmatpush1.msra.mxu0 0.0
    %4048 = vmatprep.subr.mxu0 0.0
    %4049 = vmatpush1.msra.mxu0 0.0
    %4050 = vmatprep.subr.mxu0 0.0
    %4051 = vmatpush1.msra.mxu0 0.0
    %4052 = vmatprep.subr.mxu0 0.0
    %4053 = vmatpush1.msra.mxu0 0.0
    %4054 = vmatprep.subr.mxu0 0.0
    %4055 = vmatpush1.msra.mxu0 0.0
    %4056 = vmatprep.subr.mxu0 0.0
    %4057 = vmatpush1.msra.mxu0 0.0
    %4058 = vmatprep.subr.mxu0 0.0
    %4059 = vmatpush1.msra.mxu0 %v4021
    %4060 = vmatprep.subr.mxu0 0.0
    %4061 = vmatpush1.msra.mxu0 %v4019
    %4062 = vmatprep.subr.mxu0 0.0
    %4063 = vmatpush2.msra.mxu0 0.0
    %4064 = vmatprep.subr.mxu0 0.0
    %4065 = vmatpush2.msra.mxu0 0.0
    %4066 = vmatprep.subr.mxu0 0.0
    %4067 = vmatpush2.msra.mxu0 0.0
    %4068 = vmatprep.subr.mxu0 0.0
    %4069 = vmatpush2.msra.mxu0 0.0
    %4070 = vmatprep.subr.mxu0 0.0
    %4071 = vmatpush2.msra.mxu0 0.0
    %4072 = vmatprep.subr.mxu0 0.0
    %4073 = vmatpush2.msra.mxu0 0.0
    %4074 = vmatprep.subr.mxu0 0.0
    %4075 = vmatpush2.msra.mxu0 0.0
    %4076 = vmatprep.subr.mxu0 0.0
    %4077 = vmatpush2.msra.mxu0 0.0
    %4078 = vmatprep.subr.mxu0 0.0
    %4079 = vmatpush2.msra.mxu0 0.0
    %4080 = vmatprep.subr.mxu0 0.0
    %4081 = vmatpush2.msra.mxu0 0.0
    %4082 = vmatprep.subr.mxu0 0.0
    %4083 = vmatpush2.msra.mxu0 0.0
    %4084 = vmatprep.subr.mxu0 0.0
    %4085 = vmatpush2.msra.mxu0 0.0
    %4086 = vmatprep.subr.mxu0 0.0
    %4087 = vmatpush2.msra.mxu0 0.0
    %4088 = vmatprep.subr.mxu0 0.0
    %4089 = vmatpush2.msra.mxu0 0.0
    %4090 = vmatprep.subr.mxu0 0.0
    %4091 = vmatpush2.msra.mxu0 0.0
    %4092 = vmatprep.subr.mxu0 0.0
    %4093 = vmatpush2.msra.mxu0 0.0
    %4094 = vmatprep.mubr.f32.mxu0 0.0
    %4095 = vmatmul.mubr.f32.gmra.mxu0 %v4025
    %v4096 = vpop.f32.mrf.mxu0
    %v4097 = vadd.f32 0.0, %v4096
    %v4098 = vpop.f32.mrf.mxu0
    %4099 = vmatprep.mubr.f32.mxu0 0.0
    %4100 = vmatmul.mubr.f32.gmra.mxu0 %v4028
    %v4101 = vpop.f32.mrf.mxu0
    %v4102 = vadd.f32 0.0, %v4101
    %v4103 = vpop.f32.mrf.mxu0
    %4104 = vdwg.mxu0
    %4105 = vrot.lane.b32.xlu0 %v2587, 80
    %v4106 = vpop.permute.xlu0 %4105
    %4107 = vrot.lane.b32.xlu0 %v2593, 80
    %v4108 = vpop.permute.xlu0 %4107
    %4109 = vrot.lane.b32.xlu0 %v2587, 16
    %v4110 = vpop.permute.xlu0 %4109
    %4111 = vrot.lane.b32.xlu0 %v2593, 16
    %v4112 = vpop.permute.xlu0 %4111
    %v4113 = vsel %vm259, %v4106, 0
    %v4115 = vsel %vm259, %v4108, 0
    %v4117 = vsel %vm259, %v4110, 0
    %v4119 = vsel %vm259, %v4112, 0
    %4121 = vmatprep.subr.mxu0 0.0
    %4122 = vmatpush1.xpose.msra.mxu0 0.0
    %4123 = vmatprep.subr.mxu0 0.0
    %4124 = vmatpush1.xpose.msra.mxu0 0.0
    %4125 = vmatprep.subr.mxu0 0.0
    %4126 = vmatpush1.xpose.msra.mxu0 0.0
    %4127 = vmatprep.subr.mxu0 0.0
    %4128 = vmatpush1.xpose.msra.mxu0 0.0
    %4129 = vmatprep.subr.mxu0 0.0
    %4130 = vmatpush1.xpose.msra.mxu0 0.0
    %4131 = vmatprep.subr.mxu0 0.0
    %4132 = vmatpush1.xpose.msra.mxu0 0.0
    %4133 = vmatprep.subr.mxu0 0.0
    %4134 = vmatpush1.xpose.msra.mxu0 0.0
    %4135 = vmatprep.subr.mxu0 0.0
    %4136 = vmatpush1.xpose.msra.mxu0 0.0
    %4137 = vmatprep.subr.mxu0 0.0
    %4138 = vmatpush1.xpose.msra.mxu0 0.0
    %4139 = vmatprep.subr.mxu0 0.0
    %4140 = vmatpush1.xpose.msra.mxu0 0.0
    %4141 = vmatprep.subr.mxu0 0.0
    %4142 = vmatpush1.xpose.msra.mxu0 0.0
    %4143 = vmatprep.subr.mxu0 0.0
    %4144 = vmatpush1.xpose.msra.mxu0 0.0
    %4145 = vmatprep.subr.mxu0 0.0
    %4146 = vmatpush1.xpose.msra.mxu0 0.0
    %4147 = vmatprep.subr.mxu0 0.0
    %4148 = vmatpush1.xpose.msra.mxu0 0.0
    %4149 = vmatprep.subr.mxu0 0.0
    %4150 = vmatpush1.xpose.msra.mxu0 %v4119
    %4151 = vmatprep.subr.mxu0 0.0
    %4152 = vmatpush1.xpose.msra.mxu0 %v4117
    %4153 = vmatprep.subr.mxu0 0.0
    %4154 = vmatpush2.xpose.msra.mxu0 0.0
    %4155 = vmatprep.subr.mxu0 0.0
    %4156 = vmatpush2.xpose.msra.mxu0 0.0
    %4157 = vmatprep.subr.mxu0 0.0
    %4158 = vmatpush2.xpose.msra.mxu0 0.0
    %4159 = vmatprep.subr.mxu0 0.0
    %4160 = vmatpush2.xpose.msra.mxu0 0.0
    %4161 = vmatprep.subr.mxu0 0.0
    %4162 = vmatpush2.xpose.msra.mxu0 0.0
    %4163 = vmatprep.subr.mxu0 0.0
    %4164 = vmatpush2.xpose.msra.mxu0 0.0
    %4165 = vmatprep.subr.mxu0 0.0
    %4166 = vmatpush2.xpose.msra.mxu0 0.0
    %4167 = vmatprep.subr.mxu0 0.0
    %4168 = vmatpush2.xpose.msra.mxu0 0.0
    %4169 = vmatprep.subr.mxu0 0.0
    %4170 = vmatpush2.xpose.msra.mxu0 0.0
    %4171 = vmatprep.subr.mxu0 0.0
    %4172 = vmatpush2.xpose.msra.mxu0 0.0
    %4173 = vmatprep.subr.mxu0 0.0
    %4174 = vmatpush2.xpose.msra.mxu0 0.0
    %4175 = vmatprep.subr.mxu0 0.0
    %4176 = vmatpush2.xpose.msra.mxu0 0.0
    %4177 = vmatprep.subr.mxu0 0.0
    %4178 = vmatpush2.xpose.msra.mxu0 0.0
    %4179 = vmatprep.subr.mxu0 0.0
    %4180 = vmatpush2.xpose.msra.mxu0 0.0
    %4181 = vmatprep.subr.mxu0 0.0
    %4182 = vmatpush2.xpose.msra.mxu0 0.0
    %4183 = vmatprep.subr.mxu0 0.0
    %4184 = vmatpush2.xpose.msra.mxu0 0.0
    %4185 = vmatprep.mubr.f32.mxu0 0.0
    %4186 = vmatmul.mubr.f32.gmra.mxu0 %v4113
    %v4187 = vpop.f32.mrf.mxu0
    %v4188 = vadd.f32 0.0, %v4187
    %v4189 = vpop.f32.mrf.mxu0
    %4190 = vmatprep.mubr.f32.mxu0 0.0
    %4191 = vmatmul.mubr.f32.gmra.mxu0 %v4115
    %v4192 = vpop.f32.mrf.mxu0
    %v4193 = vadd.f32 0.0, %v4192
    %v4194 = vpop.f32.mrf.mxu0
    %4195 = vdwg.mxu0
    %v4196 = vsel %vm259, %v4188, -inf
    %4197 = vmax.xlane.f32.xlu0 %v4196
    %v4198 = vpop.xlane.xlu0 %4197
    %v4199 = vsel %vm259, %v4193, -inf
    %4200 = vmax.xlane.f32.xlu0 %v4199
    %v4201 = vpop.xlane.xlu0 %4200
    %v4202 = vsub.f32 %v4188, %v4198
    %v4203 = vsub.f32 %v4193, %v4201
    %v4204 = vmul.f32 %v4202, 1.442695
    %v4205 = vpow.pop %v4204
    %v4206 = vmul.f32 %v4203, 1.442695
    %v4207 = vpow.pop %v4206
    %v4208 = vsel %vm259, %v4205, 0.0
    %4209 = vadd.xlane.f32.xlu0 %v4208
    %v4210 = vpop.xlane.xlu0 %4209
    %v4211 = vsel %vm259, %v4207, 0.0
    %4212 = vadd.xlane.f32.xlu0 %v4211
    %v4213 = vpop.xlane.xlu0 %4212
    %v4214 = vrcp.pop %v4210
    %v4215 = vrcp.pop %v4213
    %v4216 = vmul.f32 %v4205, %v4214
    %v4217 = vmul.f32 %v4207, %v4215
    %4218 = vrot.lane.b32.xlu0 %v2589, 80
    %v4219 = vpop.permute.xlu0 %4218
    %4220 = vrot.lane.b32.xlu0 %v2595, 80
    %v4221 = vpop.permute.xlu0 %4220
    %v4225 = vsel %vm259, %v4216, 0
    %v4228 = vsel %vm259, %v4217, 0
    %4230 = vmatprep.subr.mxu0 0.0
    %4231 = vmatpush1.msra.mxu0 0.0
    %4232 = vmatprep.subr.mxu0 0.0
    %4233 = vmatpush1.msra.mxu0 0.0
    %4234 = vmatprep.subr.mxu0 0.0
    %4235 = vmatpush1.msra.mxu0 0.0
    %4236 = vmatprep.subr.mxu0 0.0
    %4237 = vmatpush1.msra.mxu0 0.0
    %4238 = vmatprep.subr.mxu0 0.0
    %4239 = vmatpush1.msra.mxu0 0.0
    %4240 = vmatprep.subr.mxu0 0.0
    %4241 = vmatpush1.msra.mxu0 0.0
    %4242 = vmatprep.subr.mxu0 0.0
    %4243 = vmatpush1.msra.mxu0 0.0
    %4244 = vmatprep.subr.mxu0 0.0
    %4245 = vmatpush1.msra.mxu0 0.0
    %4246 = vmatprep.subr.mxu0 0.0
    %4247 = vmatpush1.msra.mxu0 0.0
    %4248 = vmatprep.subr.mxu0 0.0
    %4249 = vmatpush1.msra.mxu0 0.0
    %4250 = vmatprep.subr.mxu0 0.0
    %4251 = vmatpush1.msra.mxu0 0.0
    %4252 = vmatprep.subr.mxu0 0.0
    %4253 = vmatpush1.msra.mxu0 0.0
    %4254 = vmatprep.subr.mxu0 0.0
    %4255 = vmatpush1.msra.mxu0 0.0
    %4256 = vmatprep.subr.mxu0 0.0
    %4257 = vmatpush1.msra.mxu0 0.0
    %4258 = vmatprep.subr.mxu0 0.0
    %4259 = vmatpush1.msra.mxu0 %v4221
    %4260 = vmatprep.subr.mxu0 0.0
    %4261 = vmatpush1.msra.mxu0 %v4219
    %4262 = vmatprep.subr.mxu0 0.0
    %4263 = vmatpush2.msra.mxu0 0.0
    %4264 = vmatprep.subr.mxu0 0.0
    %4265 = vmatpush2.msra.mxu0 0.0
    %4266 = vmatprep.subr.mxu0 0.0
    %4267 = vmatpush2.msra.mxu0 0.0
    %4268 = vmatprep.subr.mxu0 0.0
    %4269 = vmatpush2.msra.mxu0 0.0
    %4270 = vmatprep.subr.mxu0 0.0
    %4271 = vmatpush2.msra.mxu0 0.0
    %4272 = vmatprep.subr.mxu0 0.0
    %4273 = vmatpush2.msra.mxu0 0.0
    %4274 = vmatprep.subr.mxu0 0.0
    %4275 = vmatpush2.msra.mxu0 0.0
    %4276 = vmatprep.subr.mxu0 0.0
    %4277 = vmatpush2.msra.mxu0 0.0
    %4278 = vmatprep.subr.mxu0 0.0
    %4279 = vmatpush2.msra.mxu0 0.0
    %4280 = vmatprep.subr.mxu0 0.0
    %4281 = vmatpush2.msra.mxu0 0.0
    %4282 = vmatprep.subr.mxu0 0.0
    %4283 = vmatpush2.msra.mxu0 0.0
    %4284 = vmatprep.subr.mxu0 0.0
    %4285 = vmatpush2.msra.mxu0 0.0
    %4286 = vmatprep.subr.mxu0 0.0
    %4287 = vmatpush2.msra.mxu0 0.0
    %4288 = vmatprep.subr.mxu0 0.0
    %4289 = vmatpush2.msra.mxu0 0.0
    %4290 = vmatprep.subr.mxu0 0.0
    %4291 = vmatpush2.msra.mxu0 0.0
    %4292 = vmatprep.subr.mxu0 0.0
    %4293 = vmatpush2.msra.mxu0 0.0
    %4294 = vmatprep.mubr.f32.mxu0 0.0
    %4295 = vmatmul.mubr.f32.gmra.mxu0 %v4225
    %v4296 = vpop.f32.mrf.mxu0
    %v4297 = vadd.f32 0.0, %v4296
    %v4298 = vpop.f32.mrf.mxu0
    %4299 = vmatprep.mubr.f32.mxu0 0.0
    %4300 = vmatmul.mubr.f32.gmra.mxu0 %v4228
    %v4301 = vpop.f32.mrf.mxu0
    %v4302 = vadd.f32 0.0, %v4301
    %v4303 = vpop.f32.mrf.mxu0
    %4304 = vdwg.mxu0
    %4307 = vrot.lane.b32.xlu0 %v3897, 16
    %v4308 = vpop.permute.xlu0 %4307
    %4309 = vrot.lane.b32.xlu0 %v3902, 16
    %v4310 = vpop.permute.xlu0 %4309
    %4315 = vrot.lane.b32.xlu0 %v4097, 32
    %v4316 = vpop.permute.xlu0 %4315
    %4317 = vrot.lane.b32.xlu0 %v4102, 32
    %v4318 = vpop.permute.xlu0 %4317
    %4323 = vrot.lane.b32.xlu0 %v4297, 48
    %v4324 = vpop.permute.xlu0 %4323
    %4325 = vrot.lane.b32.xlu0 %v4302, 48
    %v4326 = vpop.permute.xlu0 %4325
    %v4329 = vsel %vm259, %v3695, %v4308
    %v4330 = vsel %vm259, %v3700, %v4310
    %v4331 = vsel %vm1074, %v4329, %v4316
    %v4332 = vsel %vm1074, %v4330, %v4318
    %v4333 = vsel %vm1077, %v4331, %v4324
    %v4334 = vsel %vm1077, %v4332, %v4326
    %v4336 = vsel %vm151, %v4333, 0
    %v4339 = vsel %vm151, %v4334, 0
    %4341 = vmatprep.subr.mxu0 0.0
    %4342 = vmatpush1.msra.mxu0 0.0
    %4343 = vmatprep.subr.mxu0 0.0
    %4344 = vmatpush1.msra.mxu0 0.0
    %4345 = vmatprep.subr.mxu0 0.0
    %4346 = vmatpush1.msra.mxu0 0.0
    %4347 = vmatprep.subr.mxu0 0.0
    %4348 = vmatpush1.msra.mxu0 0.0
    %4349 = vmatprep.subr.mxu0 0.0
    %4350 = vmatpush1.msra.mxu0 0.0
    %4351 = vmatprep.subr.mxu0 0.0
    %4352 = vmatpush1.msra.mxu0 0.0
    %4353 = vmatprep.subr.mxu0 0.0
    %4354 = vmatpush1.msra.mxu0 0.0
    %4355 = vmatprep.subr.mxu0 0.0
    %4356 = vmatpush1.msra.mxu0 0.0
    %4357 = vmatprep.subr.mxu0 0.0
    %4358 = vmatpush1.msra.mxu0 %v3429
    %4359 = vmatprep.subr.mxu0 0.0
    %4360 = vmatpush1.msra.mxu0 %v3428
    %4361 = vmatprep.subr.mxu0 0.0
    %4362 = vmatpush1.msra.mxu0 %v3427
    %4363 = vmatprep.subr.mxu0 0.0
    %4364 = vmatpush1.msra.mxu0 %v3426
    %4365 = vmatprep.subr.mxu0 0.0
    %4366 = vmatpush1.msra.mxu0 %v3425
    %4367 = vmatprep.subr.mxu0 0.0
    %4368 = vmatpush1.msra.mxu0 %v3424
    %4369 = vmatprep.subr.mxu0 0.0
    %4370 = vmatpush1.msra.mxu0 %v3423
    %4371 = vmatprep.subr.mxu0 0.0
    %4372 = vmatpush1.msra.mxu0 %v3422
    %4373 = vmatprep.subr.mxu0 0.0
    %4374 = vmatpush2.msra.mxu0 0.0
    %4375 = vmatprep.subr.mxu0 0.0
    %4376 = vmatpush2.msra.mxu0 0.0
    %4377 = vmatprep.subr.mxu0 0.0
    %4378 = vmatpush2.msra.mxu0 0.0
    %4379 = vmatprep.subr.mxu0 0.0
    %4380 = vmatpush2.msra.mxu0 0.0
    %4381 = vmatprep.subr.mxu0 0.0
    %4382 = vmatpush2.msra.mxu0 0.0
    %4383 = vmatprep.subr.mxu0 0.0
    %4384 = vmatpush2.msra.mxu0 0.0
    %4385 = vmatprep.subr.mxu0 0.0
    %4386 = vmatpush2.msra.mxu0 0.0
    %4387 = vmatprep.subr.mxu0 0.0
    %4388 = vmatpush2.msra.mxu0 0.0
    %4389 = vmatprep.subr.mxu0 0.0
    %4390 = vmatpush2.msra.mxu0 0.0
    %4391 = vmatprep.subr.mxu0 0.0
    %4392 = vmatpush2.msra.mxu0 0.0
    %4393 = vmatprep.subr.mxu0 0.0
    %4394 = vmatpush2.msra.mxu0 0.0
    %4395 = vmatprep.subr.mxu0 0.0
    %4396 = vmatpush2.msra.mxu0 0.0
    %4397 = vmatprep.subr.mxu0 0.0
    %4398 = vmatpush2.msra.mxu0 0.0
    %4399 = vmatprep.subr.mxu0 0.0
    %4400 = vmatpush2.msra.mxu0 0.0
    %4401 = vmatprep.subr.mxu0 0.0
    %4402 = vmatpush2.msra.mxu0 0.0
    %4403 = vmatprep.subr.mxu0 0.0
    %4404 = vmatpush2.msra.mxu0 0.0
    %4405 = vmatprep.mubr.f32.mxu0 0.0
    %4406 = vmatmul.mubr.f32.gmra.mxu0 %v4336
    %v4407 = vpop.f32.mrf.mxu0
    %v4408 = vadd.f32 0.0, %v4407
    %v4409 = vpop.f32.mrf.mxu0
    %4410 = vmatprep.mubr.f32.mxu0 0.0
    %4411 = vmatmul.mubr.f32.gmra.mxu0 %v4339
    %v4412 = vpop.f32.mrf.mxu0
    %v4413 = vadd.f32 0.0, %v4412
    %v4414 = vpop.f32.mrf.mxu0
    %4415 = vdwg.mxu0
    %s4416 = scalar_lea.vmem %s4, 1
    %v4417 = vld [vmem:[%s4416] sm:$0x1]
    %v4419 = vlaneseq
    %v4420 = vshrl.u32 %v4419, 7
    %v4421 = vsub.s32 0, %v4420
    %v4422 = vrot.slane %v4417, %v4421
    %v4424 = vadd.f32 %v3503, %v4422
    %v4425 = vadd.f32 %v3508, %v4422
    %v4426 = vadd.f32 %v4408, %v4422
    %v4427 = vadd.f32 %v4413, %v4422
    %v4428 = vadd.f32 %v2462, %v4424
    %v4429 = vadd.f32 %v2463, %v4425
    %v4430 = vadd.f32 %v2464, %v4426
    %v4431 = vadd.f32 %v2465, %v4427
    %s4432 = scalar_lea.vmem %s5, 1
    %v4433 = vld [vmem:[%s4432] sm:$0x1]
    %s4434 = scalar_lea.vmem %s6, 1
    %v4435 = vld [vmem:[%s4434] sm:$0x1]
    %v4436 = vsel %vm151, %v4428, 0.0
    %4437 = vadd.xlane.f32.xlu0 %v4436
    %v4438 = vpop.xlane.xlu0 %4437
    %v4439 = vsel %vm151, %v4429, 0.0
    %4440 = vadd.xlane.f32.xlu0 %v4439
    %v4441 = vpop.xlane.xlu0 %4440
    %v4442 = vsel %vm151, %v4430, 0.0
    %4443 = vadd.xlane.f32.xlu0 %v4442
    %v4444 = vpop.xlane.xlu0 %4443
    %v4445 = vsel %vm151, %v4431, 0.0
    %4446 = vadd.xlane.f32.xlu0 %v4445
    %v4447 = vpop.xlane.xlu0 %4446
    %v4448 = vmul.f32 %v4438, %v2103
    %v4449 = vmul.f32 %v4441, %v2103
    %v4450 = vmul.f32 %v4444, %v2103
    %v4451 = vmul.f32 %v4447, %v2103
    %v4452 = vsub.f32 %v4428, %v4448
    %v4453 = vsub.f32 %v4429, %v4449
    %v4454 = vsub.f32 %v4430, %v4450
    %v4455 = vsub.f32 %v4431, %v4451
    %v4456 = vmul.f32 %v4452, %v4452
    %v4457 = vmul.f32 %v4453, %v4453
    %v4458 = vmul.f32 %v4454, %v4454
    %v4459 = vmul.f32 %v4455, %v4455
    %v4460 = vsel %vm151, %v4456, 0.0
    %4461 = vadd.xlane.f32.xlu0 %v4460
    %v4462 = vpop.xlane.xlu0 %4461
    %v4463 = vsel %vm151, %v4457, 0.0
    %4464 = vadd.xlane.f32.xlu0 %v4463
    %v4465 = vpop.xlane.xlu0 %4464
    %v4466 = vsel %vm151, %v4458, 0.0
    %4467 = vadd.xlane.f32.xlu0 %v4466
    %v4468 = vpop.xlane.xlu0 %4467
    %v4469 = vsel %vm151, %v4459, 0.0
    %4470 = vadd.xlane.f32.xlu0 %v4469
    %v4471 = vpop.xlane.xlu0 %4470
    %v4472 = vmul.f32 %v4462, %v2103
    %v4473 = vmul.f32 %v4465, %v2103
    %v4474 = vmul.f32 %v4468, %v2103
    %v4475 = vmul.f32 %v4471, %v2103
    %v4476 = vadd.f32 %v4472, 1e-05
    %v4477 = vadd.f32 %v4473, 1e-05
    %v4478 = vadd.f32 %v4474, 1e-05
    %v4479 = vadd.f32 %v4475, 1e-05
    %v4480 = vrsqrt.pop %v4476
    %v4481 = vrsqrt.pop %v4477
    %v4482 = vrsqrt.pop %v4478
    %v4483 = vrsqrt.pop %v4479
    %v4484 = vmul.f32 %v4452, %v4480
    %v4485 = vmul.f32 %v4453, %v4481
    %v4486 = vmul.f32 %v4454, %v4482
    %v4487 = vmul.f32 %v4455, %v4483
    %v4489 = vlaneseq
    %v4490 = vshrl.u32 %v4489, 7
    %v4491 = vsub.s32 0, %v4490
    %v4492 = vrot.slane %v4433, %v4491
    %v4494 = vmul.f32 %v4484, %v4492
    %v4495 = vmul.f32 %v4485, %v4492
    %v4496 = vmul.f32 %v4486, %v4492
    %v4497 = vmul.f32 %v4487, %v4492
    %v4499 = vlaneseq
    %v4500 = vshrl.u32 %v4499, 7
    %v4501 = vsub.s32 0, %v4500
    %v4502 = vrot.slane %v4435, %v4501
    %v4504 = vadd.f32 %v4494, %v4502
    %v4505 = vadd.f32 %v4495, %v4502
    %v4506 = vadd.f32 %v4496, %v4502
    %v4507 = vadd.f32 %v4497, %v4502
    %s4508 = scalar_lea.vmem [#allocation8], 64
    %v4509 = vld [vmem:[%s4508] sm:$0xff]
    %v4510 = vld [vmem:[%s4508 + $0x8] sm:$0xff]
    %v4511 = vld [vmem:[%s4508 + $0x10] sm:$0xff]
    %v4512 = vld [vmem:[%s4508 + $0x18] sm:$0xff]
    %v4513 = vld [vmem:[%s4508 + $0x20] sm:$0xff]
    %v4514 = vld [vmem:[%s4508 + $0x28] sm:$0xff]
    %v4515 = vld [vmem:[%s4508 + $0x30] sm:$0xff]
    %v4516 = vld [vmem:[%s4508 + $0x38] sm:$0xff]
    %s4517 = scalar_lea.vmem %s8, 1
    %v4518 = vld [vmem:[%s4517] sm:$0x1]
    %v4520 = vlaneseq
    %v4521 = vshrl.u32 %v4520, 7
    %v4522 = vsub.s32 0, %v4521
    %v4523 = vrot.slane %v4518, %v4522
    %v4526 = vsel %vm151, %v4504, 0
    %v4529 = vsel %vm151, %v4505, 0
    %v4532 = vsel %vm151, %v4506, 0
    %v4535 = vsel %vm151, %v4507, 0
    %4537 = vmatprep.subr.mxu0 0.0
    %4538 = vmatpush1.msra.mxu0 0.0
    %4539 = vmatprep.subr.mxu0 0.0
    %4540 = vmatpush1.msra.mxu0 0.0
    %4541 = vmatprep.subr.mxu0 0.0
    %4542 = vmatpush1.msra.mxu0 0.0
    %4543 = vmatprep.subr.mxu0 0.0
    %4544 = vmatpush1.msra.mxu0 0.0
    %4545 = vmatprep.subr.mxu0 0.0
    %4546 = vmatpush1.msra.mxu0 0.0
    %4547 = vmatprep.subr.mxu0 0.0
    %4548 = vmatpush1.msra.mxu0 0.0
    %4549 = vmatprep.subr.mxu0 0.0
    %4550 = vmatpush1.msra.mxu0 0.0
    %4551 = vmatprep.subr.mxu0 0.0
    %4552 = vmatpush1.msra.mxu0 0.0
    %4553 = vmatprep.subr.mxu0 0.0
    %4554 = vmatpush1.msra.mxu0 %v4516
    %4555 = vmatprep.subr.mxu0 0.0
    %4556 = vmatpush1.msra.mxu0 %v4515
    %4557 = vmatprep.subr.mxu0 0.0
    %4558 = vmatpush1.msra.mxu0 %v4514
    %4559 = vmatprep.subr.mxu0 0.0
    %4560 = vmatpush1.msra.mxu0 %v4513
    %4561 = vmatprep.subr.mxu0 0.0
    %4562 = vmatpush1.msra.mxu0 %v4512
    %4563 = vmatprep.subr.mxu0 0.0
    %4564 = vmatpush1.msra.mxu0 %v4511
    %4565 = vmatprep.subr.mxu0 0.0
    %4566 = vmatpush1.msra.mxu0 %v4510
    %4567 = vmatprep.subr.mxu0 0.0
    %4568 = vmatpush1.msra.mxu0 %v4509
    %4569 = vmatprep.subr.mxu0 0.0
    %4570 = vmatpush2.msra.mxu0 0.0
    %4571 = vmatprep.subr.mxu0 0.0
    %4572 = vmatpush2.msra.mxu0 0.0
    %4573 = vmatprep.subr.mxu0 0.0
    %4574 = vmatpush2.msra.mxu0 0.0
    %4575 = vmatprep.subr.mxu0 0.0
    %4576 = vmatpush2.msra.mxu0 0.0
    %4577 = vmatprep.subr.mxu0 0.0
    %4578 = vmatpush2.msra.mxu0 0.0
    %4579 = vmatprep.subr.mxu0 0.0
    %4580 = vmatpush2.msra.mxu0 0.0
    %4581 = vmatprep.subr.mxu0 0.0
    %4582 = vmatpush2.msra.mxu0 0.0
    %4583 = vmatprep.subr.mxu0 0.0
    %4584 = vmatpush2.msra.mxu0 0.0
    %4585 = vmatprep.subr.mxu0 0.0
    %4586 = vmatpush2.msra.mxu0 0.0
    %4587 = vmatprep.subr.mxu0 0.0
    %4588 = vmatpush2.msra.mxu0 0.0
    %4589 = vmatprep.subr.mxu0 0.0
    %4590 = vmatpush2.msra.mxu0 0.0
    %4591 = vmatprep.subr.mxu0 0.0
    %4592 = vmatpush2.msra.mxu0 0.0
    %4593 = vmatprep.subr.mxu0 0.0
    %4594 = vmatpush2.msra.mxu0 0.0
    %4595 = vmatprep.subr.mxu0 0.0
    %4596 = vmatpush2.msra.mxu0 0.0
    %4597 = vmatprep.subr.mxu0 0.0
    %4598 = vmatpush2.msra.mxu0 0.0
    %4599 = vmatprep.subr.mxu0 0.0
    %4600 = vmatpush2.msra.mxu0 0.0
    %4601 = vmatprep.mubr.f32.mxu0 0.0
    %4602 = vmatmul.mubr.f32.gmra.mxu0 %v4526
    %v4603 = vpop.f32.mrf.mxu0
    %v4604 = vadd.f32 %v4523, %v4603
    %v4605 = vpop.f32.mrf.mxu0
    %4606 = vmatprep.mubr.f32.mxu0 0.0
    %4607 = vmatmul.mubr.f32.gmra.mxu0 %v4529
    %v4608 = vpop.f32.mrf.mxu0
    %v4609 = vadd.f32 %v4523, %v4608
    %v4610 = vpop.f32.mrf.mxu0
    %4611 = vmatprep.mubr.f32.mxu0 0.0
    %4612 = vmatmul.mubr.f32.gmra.mxu0 %v4532
    %v4613 = vpop.f32.mrf.mxu0
    %v4614 = vadd.f32 %v4523, %v4613
    %v4615 = vpop.f32.mrf.mxu0
    %4616 = vmatprep.mubr.f32.mxu0 0.0
    %4617 = vmatmul.mubr.f32.gmra.mxu0 %v4535
    %v4618 = vpop.f32.mrf.mxu0
    %v4619 = vadd.f32 %v4523, %v4618
    %v4620 = vpop.f32.mrf.mxu0
    %4621 = vdwg.mxu0
    %v4622 = vmax.f32 %v4604, 0.0
    %v4623 = vmax.f32 %v4609, 0.0
    %v4624 = vmax.f32 %v4614, 0.0
    %v4625 = vmax.f32 %v4619, 0.0
    %s4626 = scalar_lea.vmem %s9, 128
    %v4627 = vld [vmem:[%s4626] sm:$0xff]
    %v4628 = vld [vmem:[%s4626 + $0x8] sm:$0xff]
    %v4629 = vld [vmem:[%s4626 + $0x10] sm:$0xff]
    %v4630 = vld [vmem:[%s4626 + $0x18] sm:$0xff]
    %v4631 = vld [vmem:[%s4626 + $0x20] sm:$0xff]
    %v4632 = vld [vmem:[%s4626 + $0x28] sm:$0xff]
    %v4633 = vld [vmem:[%s4626 + $0x30] sm:$0xff]
    %v4634 = vld [vmem:[%s4626 + $0x38] sm:$0xff]
    %v4635 = vld [vmem:[%s4626 + $0x40] sm:$0xff]
    %v4636 = vld [vmem:[%s4626 + $0x48] sm:$0xff]
    %v4637 = vld [vmem:[%s4626 + $0x50] sm:$0xff]
    %v4638 = vld [vmem:[%s4626 + $0x58] sm:$0xff]
    %v4639 = vld [vmem:[%s4626 + $0x60] sm:$0xff]
    %v4640 = vld [vmem:[%s4626 + $0x68] sm:$0xff]
    %v4641 = vld [vmem:[%s4626 + $0x70] sm:$0xff]
    %v4642 = vld [vmem:[%s4626 + $0x78] sm:$0xff]
    %s4643 = scalar_lea.vmem %s10, 1
    %v4644 = vld [vmem:[%s4643] sm:$0x1]
    %v4646 = vlaneseq
    %v4647 = vshrl.u32 %v4646, 7
    %v4648 = vsub.s32 0, %v4647
    %v4649 = vrot.slane %v4644, %v4648
    %4651 = vmatprep.subr.mxu0 0.0
    %4652 = vmatpush1.msra.mxu0 %v4642
    %4653 = vmatprep.subr.mxu0 0.0
    %4654 = vmatpush1.msra.mxu0 %v4641
    %4655 = vmatprep.subr.mxu0 0.0
    %4656 = vmatpush1.msra.mxu0 %v4640
    %4657 = vmatprep.subr.mxu0 0.0
    %4658 = vmatpush1.msra.mxu0 %v4639
    %4659 = vmatprep.subr.mxu0 0.0
    %4660 = vmatpush1.msra.mxu0 %v4638
    %4661 = vmatprep.subr.mxu0 0.0
    %4662 = vmatpush1.msra.mxu0 %v4637
    %4663 = vmatprep.subr.mxu0 0.0
    %4664 = vmatpush1.msra.mxu0 %v4636
    %4665 = vmatprep.subr.mxu0 0.0
    %4666 = vmatpush1.msra.mxu0 %v4635
    %4667 = vmatprep.subr.mxu0 0.0
    %4668 = vmatpush1.msra.mxu0 %v4634
    %4669 = vmatprep.subr.mxu0 0.0
    %4670 = vmatpush1.msra.mxu0 %v4633
    %4671 = vmatprep.subr.mxu0 0.0
    %4672 = vmatpush1.msra.mxu0 %v4632
    %4673 = vmatprep.subr.mxu0 0.0
    %4674 = vmatpush1.msra.mxu0 %v4631
    %4675 = vmatprep.subr.mxu0 0.0
    %4676 = vmatpush1.msra.mxu0 %v4630
    %4677 = vmatprep.subr.mxu0 0.0
    %4678 = vmatpush1.msra.mxu0 %v4629
    %4679 = vmatprep.subr.mxu0 0.0
    %4680 = vmatpush1.msra.mxu0 %v4628
    %4681 = vmatprep.subr.mxu0 0.0
    %4682 = vmatpush1.msra.mxu0 %v4627
    %4683 = vmatprep.subr.mxu0 0.0
    %4684 = vmatpush2.msra.mxu0 0.0
    %4685 = vmatprep.subr.mxu0 0.0
    %4686 = vmatpush2.msra.mxu0 0.0
    %4687 = vmatprep.subr.mxu0 0.0
    %4688 = vmatpush2.msra.mxu0 0.0
    %4689 = vmatprep.subr.mxu0 0.0
    %4690 = vmatpush2.msra.mxu0 0.0
    %4691 = vmatprep.subr.mxu0 0.0
    %4692 = vmatpush2.msra.mxu0 0.0
    %4693 = vmatprep.subr.mxu0 0.0
    %4694 = vmatpush2.msra.mxu0 0.0
    %4695 = vmatprep.subr.mxu0 0.0
    %4696 = vmatpush2.msra.mxu0 0.0
    %4697 = vmatprep.subr.mxu0 0.0
    %4698 = vmatpush2.msra.mxu0 0.0
    %4699 = vmatprep.subr.mxu0 0.0
    %4700 = vmatpush2.msra.mxu0 0.0
    %4701 = vmatprep.subr.mxu0 0.0
    %4702 = vmatpush2.msra.mxu0 0.0
    %4703 = vmatprep.subr.mxu0 0.0
    %4704 = vmatpush2.msra.mxu0 0.0
    %4705 = vmatprep.subr.mxu0 0.0
    %4706 = vmatpush2.msra.mxu0 0.0
    %4707 = vmatprep.subr.mxu0 0.0
    %4708 = vmatpush2.msra.mxu0 0.0
    %4709 = vmatprep.subr.mxu0 0.0
    %4710 = vmatpush2.msra.mxu0 0.0
    %4711 = vmatprep.subr.mxu0 0.0
    %4712 = vmatpush2.msra.mxu0 0.0
    %4713 = vmatprep.subr.mxu0 0.0
    %4714 = vmatpush2.msra.mxu0 0.0
    %4715 = vmatprep.mubr.f32.mxu0 0.0
    %4716 = vmatmul.mubr.f32.gmra.mxu0 %v4622
    %v4717 = vpop.f32.mrf.mxu0
    %v4718 = vadd.f32 %v4649, %v4717
    %v4719 = vpop.f32.mrf.mxu0
    %4720 = vmatprep.mubr.f32.mxu0 0.0
    %4721 = vmatmul.mubr.f32.gmra.mxu0 %v4623
    %v4722 = vpop.f32.mrf.mxu0
    %v4723 = vadd.f32 %v4649, %v4722
    %v4724 = vpop.f32.mrf.mxu0
    %4725 = vmatprep.mubr.f32.mxu0 0.0
    %4726 = vmatmul.mubr.f32.gmra.mxu0 %v4624
    %v4727 = vpop.f32.mrf.mxu0
    %v4728 = vadd.f32 %v4649, %v4727
    %v4729 = vpop.f32.mrf.mxu0
    %4730 = vmatprep.mubr.f32.mxu0 0.0
    %4731 = vmatmul.mubr.f32.gmra.mxu0 %v4625
    %v4732 = vpop.f32.mrf.mxu0
    %v4733 = vadd.f32 %v4649, %v4732
    %v4734 = vpop.f32.mrf.mxu0
    %4735 = vdwg.mxu0
    %v4736 = vadd.f32 %v4504, %v4718
    %v4737 = vadd.f32 %v4505, %v4723
    %v4738 = vadd.f32 %v4506, %v4728
    %v4739 = vadd.f32 %v4507, %v4733
    %s4740 = scalar_lea.vmem %s11, 1
    %v4741 = vld [vmem:[%s4740] sm:$0x1]
    %s4742 = scalar_lea.vmem [#allocation10], 1
    %v4743 = vld [vmem:[%s4742] sm:$0x1]
    %v4744 = vsel %vm151, %v4736, 0.0
    %4745 = vadd.xlane.f32.xlu0 %v4744
    %v4746 = vpop.xlane.xlu0 %4745
    %v4747 = vsel %vm151, %v4737, 0.0
    %4748 = vadd.xlane.f32.xlu0 %v4747
    %v4749 = vpop.xlane.xlu0 %4748
    %v4750 = vsel %vm151, %v4738, 0.0
    %4751 = vadd.xlane.f32.xlu0 %v4750
    %v4752 = vpop.xlane.xlu0 %4751
    %v4753 = vsel %vm151, %v4739, 0.0
    %4754 = vadd.xlane.f32.xlu0 %v4753
    %v4755 = vpop.xlane.xlu0 %4754
    %v4756 = vmul.f32 %v4746, %v2103
    %v4757 = vmul.f32 %v4749, %v2103
    %v4758 = vmul.f32 %v4752, %v2103
    %v4759 = vmul.f32 %v4755, %v2103
    %v4760 = vsub.f32 %v4736, %v4756
    %v4761 = vsub.f32 %v4737, %v4757
    %v4762 = vsub.f32 %v4738, %v4758
    %v4763 = vsub.f32 %v4739, %v4759
    %v4764 = vmul.f32 %v4760, %v4760
    %v4765 = vmul.f32 %v4761, %v4761
    %v4766 = vmul.f32 %v4762, %v4762
    %v4767 = vmul.f32 %v4763, %v4763
    %v4768 = vsel %vm151, %v4764, 0.0
    %4769 = vadd.xlane.f32.xlu0 %v4768
    %v4770 = vpop.xlane.xlu0 %4769
    %v4771 = vsel %vm151, %v4765, 0.0
    %4772 = vadd.xlane.f32.xlu0 %v4771
    %v4773 = vpop.xlane.xlu0 %4772
    %v4774 = vsel %vm151, %v4766, 0.0
    %4775 = vadd.xlane.f32.xlu0 %v4774
    %v4776 = vpop.xlane.xlu0 %4775
    %v4777 = vsel %vm151, %v4767, 0.0
    %4778 = vadd.xlane.f32.xlu0 %v4777
    %v4779 = vpop.xlane.xlu0 %4778
    %v4780 = vmul.f32 %v4770, %v2103
    %v4781 = vmul.f32 %v4773, %v2103
    %v4782 = vmul.f32 %v4776, %v2103
    %v4783 = vmul.f32 %v4779, %v2103
    %v4784 = vadd.f32 %v4780, 1e-05
    %v4785 = vadd.f32 %v4781, 1e-05
    %v4786 = vadd.f32 %v4782, 1e-05
    %v4787 = vadd.f32 %v4783, 1e-05
    %v4788 = vrsqrt.pop %v4784
    %v4789 = vrsqrt.pop %v4785
    %v4790 = vrsqrt.pop %v4786
    %v4791 = vrsqrt.pop %v4787
    %v4792 = vmul.f32 %v4760, %v4788
    %v4793 = vmul.f32 %v4761, %v4789
    %v4794 = vmul.f32 %v4762, %v4790
    %v4795 = vmul.f32 %v4763, %v4791
    %v4797 = vlaneseq
    %v4798 = vshrl.u32 %v4797, 7
    %v4799 = vsub.s32 0, %v4798
    %v4800 = vrot.slane %v4741, %v4799
    %v4802 = vmul.f32 %v4792, %v4800
    %v4803 = vmul.f32 %v4793, %v4800
    %v4804 = vmul.f32 %v4794, %v4800
    %v4805 = vmul.f32 %v4795, %v4800
    %v4807 = vlaneseq
    %v4808 = vshrl.u32 %v4807, 7
    %v4809 = vsub.s32 0, %v4808
    %v4810 = vrot.slane %v4743, %v4809
    %v4812 = vadd.f32 %v4802, %v4810
    %v4813 = vadd.f32 %v4803, %v4810
    %v4814 = vadd.f32 %v4804, %v4810
    %v4815 = vadd.f32 %v4805, %v4810
    %v4816 = vsel %vm151, %v4812, 0.0
    %v4817 = vsel %vm151, %v4813, 0.0
    %v4818 = vadd.f32 %v4816, %v4817
    %v4819 = vrot.slane %v4818, 4
    %v4820 = vadd.f32 %v4818, %v4819
    %v4821 = vrot.slane %v4820, 2
    %v4822 = vadd.f32 %v4820, %v4821
    %v4823 = vrot.slane %v4822, 1
    %v4824 = vadd.f32 %v4822, %v4823
    %v4825 = vrcp.pop 16.0
    %v4826 = vmul.f32 %v4824, %v4825
    %v4827 = vsel %vm151, %v4814, 0.0
    %v4828 = vsel %vm151, %v4815, 0.0
    %v4829 = vadd.f32 %v4827, %v4828
    %v4830 = vrot.slane %v4829, 4
    %v4831 = vadd.f32 %v4829, %v4830
    %v4832 = vrot.slane %v4831, 2
    %v4833 = vadd.f32 %v4831, %v4832
    %v4834 = vrot.slane %v4833, 1
    %v4835 = vadd.f32 %v4833, %v4834
    %v4836 = vmul.f32 %v4835, %v4825
    %vm4837 = vcmask 1040384
    %v4838 = vsel %vm4837, %v4826, %v4836
    %v4839 = vld [vmem:[%s13] sm:$0xff]
    %v4840 = vld [vmem:[%s13 + $0x8] sm:$0xff]
    %v4841 = vld [vmem:[%s13 + $0x10] sm:$0xff]
    %v4842 = vld [vmem:[%s13 + $0x18] sm:$0xff]
    %v4843 = vld [vmem:[%s13 + $0x20] sm:$0xff]
    %v4844 = vld [vmem:[%s13 + $0x28] sm:$0xff]
    %v4845 = vld [vmem:[%s13 + $0x30] sm:$0xff]
    %v4846 = vld [vmem:[%s13 + $0x38] sm:$0xff]
    %v4847 = vld [vmem:[%s13 + $0x40] sm:$0xff]
    %v4848 = vld [vmem:[%s13 + $0x48] sm:$0xff]
    %v4849 = vld [vmem:[%s13 + $0x50] sm:$0xff]
    %v4850 = vld [vmem:[%s13 + $0x58] sm:$0xff]
    %v4851 = vld [vmem:[%s13 + $0x60] sm:$0xff]
    %v4852 = vld [vmem:[%s13 + $0x68] sm:$0xff]
    %v4853 = vld [vmem:[%s13 + $0x70] sm:$0xff]
    %v4854 = vld [vmem:[%s13 + $0x78] sm:$0xff]
    %v4855 = vld [vmem:[%s13 + $0x80] sm:$0xff]
    %v4856 = vld [vmem:[%s13 + $0x88] sm:$0xff]
    %v4857 = vld [vmem:[%s13 + $0x90] sm:$0xff]
    %v4858 = vld [vmem:[%s13 + $0x98] sm:$0xff]
    %v4859 = vld [vmem:[%s13 + $0xa0] sm:$0xff]
    %v4860 = vld [vmem:[%s13 + $0xa8] sm:$0xff]
    %v4861 = vld [vmem:[%s13 + $0xb0] sm:$0xff]
    %v4862 = vld [vmem:[%s13 + $0xb8] sm:$0xff]
    %v4863 = vld [vmem:[%s13 + $0xc0] sm:$0xff]
    %v4864 = vld [vmem:[%s13 + $0xc8] sm:$0xff]
    %v4865 = vld [vmem:[%s13 + $0xd0] sm:$0xff]
    %v4866 = vld [vmem:[%s13 + $0xd8] sm:$0xff]
    %v4867 = vld [vmem:[%s13 + $0xe0] sm:$0xff]
    %v4868 = vld [vmem:[%s13 + $0xe8] sm:$0xff]
    %v4869 = vld [vmem:[%s13 + $0xf0] sm:$0xff]
    %v4870 = vld [vmem:[%s13 + $0xf8] sm:$0xff]
    %v4871 = vld [vmem:[%s13 + $0x100] sm:$0xff]
    %v4872 = vld [vmem:[%s13 + $0x108] sm:$0xff]
    %v4873 = vld [vmem:[%s13 + $0x110] sm:$0xff]
    %v4874 = vld [vmem:[%s13 + $0x118] sm:$0xff]
    %v4875 = vld [vmem:[%s13 + $0x120] sm:$0xff]
    %v4876 = vld [vmem:[%s13 + $0x128] sm:$0xff]
    %v4877 = vld [vmem:[%s13 + $0x130] sm:$0xff]
    %v4878 = vld [vmem:[%s13 + $0x138] sm:$0xff]
    %v4879 = vld [vmem:[%s13 + $0x140] sm:$0xff]
    %v4880 = vld [vmem:[%s13 + $0x148] sm:$0xff]
    %v4881 = vld [vmem:[%s13 + $0x150] sm:$0xff]
    %v4882 = vld [vmem:[%s13 + $0x158] sm:$0xff]
    %v4883 = vld [vmem:[%s13 + $0x160] sm:$0xff]
    %v4884 = vld [vmem:[%s13 + $0x168] sm:$0xff]
    %v4885 = vld [vmem:[%s13 + $0x170] sm:$0xff]
    %v4886 = vld [vmem:[%s13 + $0x178] sm:$0xff]
    %v4887 = vld [vmem:[%s14] sm:$0x3f]
    %v4889 = vlaneseq
    %v4890 = vshrl.u32 %v4889, 7
    %v4891 = vsub.s32 0, %v4890
    %v4892 = vrot.slane %v4887, %v4891
    %v4893 = vlaneseq
    %v4894 = vshrl.u32 %v4893, 7
    %v4895 = vsub.s32 1, %v4894
    %v4896 = vrot.slane %v4887, %v4895
    %v4897 = vlaneseq
    %v4898 = vshrl.u32 %v4897, 7
    %v4899 = vsub.s32 2, %v4898
    %v4900 = vrot.slane %v4887, %v4899
    %v4901 = vlaneseq
    %v4902 = vshrl.u32 %v4901, 7
    %v4903 = vsub.s32 3, %v4902
    %v4904 = vrot.slane %v4887, %v4903
    %v4905 = vlaneseq
    %v4906 = vshrl.u32 %v4905, 7
    %v4907 = vsub.s32 4, %v4906
    %v4908 = vrot.slane %v4887, %v4907
    %v4909 = vlaneseq
    %v4910 = vshrl.u32 %v4909, 7
    %v4911 = vsub.s32 5, %v4910
    %v4912 = vrot.slane %v4887, %v4911
    %v4920 = vsel %vm151, %v4838, 0
    %4922 = vmatprep.subr.mxu0 0.0
    %4923 = vmatpush1.msra.mxu0 0.0
    %4924 = vmatprep.subr.mxu0 0.0
    %4925 = vmatpush1.msra.mxu0 0.0
    %4926 = vmatprep.subr.mxu0 0.0
    %4927 = vmatpush1.msra.mxu0 0.0
    %4928 = vmatprep.subr.mxu0 0.0
    %4929 = vmatpush1.msra.mxu0 0.0
    %4930 = vmatprep.subr.mxu0 0.0
    %4931 = vmatpush1.msra.mxu0 0.0
    %4932 = vmatprep.subr.mxu0 0.0
    %4933 = vmatpush1.msra.mxu0 0.0
    %4934 = vmatprep.subr.mxu0 0.0
    %4935 = vmatpush1.msra.mxu0 0.0
    %4936 = vmatprep.subr.mxu0 0.0
    %4937 = vmatpush1.msra.mxu0 0.0
    %4938 = vmatprep.subr.mxu0 %v4882
    %4939 = vmatpush1.msra.mxu0 %v4881
    %4940 = vmatprep.subr.mxu0 %v4876
    %4941 = vmatpush1.msra.mxu0 %v4875
    %4942 = vmatprep.subr.mxu0 %v4870
    %4943 = vmatpush1.msra.mxu0 %v4869
    %4944 = vmatprep.subr.mxu0 %v4864
    %4945 = vmatpush1.msra.mxu0 %v4863
    %4946 = vmatprep.subr.mxu0 %v4858
    %4947 = vmatpush1.msra.mxu0 %v4857
    %4948 = vmatprep.subr.mxu0 %v4852
    %4949 = vmatpush1.msra.mxu0 %v4851
    %4950 = vmatprep.subr.mxu0 %v4846
    %4951 = vmatpush1.msra.mxu0 %v4845
    %4952 = vmatprep.subr.mxu0 %v4840
    %4953 = vmatpush1.msra.mxu0 %v4839
    %4954 = vmatprep.subr.mxu0 0.0
    %4955 = vmatpush2.msra.mxu0 0.0
    %4956 = vmatprep.subr.mxu0 0.0
    %4957 = vmatpush2.msra.mxu0 0.0
    %4958 = vmatprep.subr.mxu0 0.0
    %4959 = vmatpush2.msra.mxu0 0.0
    %4960 = vmatprep.subr.mxu0 0.0
    %4961 = vmatpush2.msra.mxu0 0.0
    %4962 = vmatprep.subr.mxu0 0.0
    %4963 = vmatpush2.msra.mxu0 0.0
    %4964 = vmatprep.subr.mxu0 0.0
    %4965 = vmatpush2.msra.mxu0 0.0
    %4966 = vmatprep.subr.mxu0 0.0
    %4967 = vmatpush2.msra.mxu0 0.0
    %4968 = vmatprep.subr.mxu0 0.0
    %4969 = vmatpush2.msra.mxu0 0.0
    %4970 = vmatprep.subr.mxu0 0.0
    %4971 = vmatpush2.msra.mxu0 0.0
    %4972 = vmatprep.subr.mxu0 0.0
    %4973 = vmatpush2.msra.mxu0 0.0
    %4974 = vmatprep.subr.mxu0 0.0
    %4975 = vmatpush2.msra.mxu0 0.0
    %4976 = vmatprep.subr.mxu0 0.0
    %4977 = vmatpush2.msra.mxu0 0.0
    %4978 = vmatprep.subr.mxu0 0.0
    %4979 = vmatpush2.msra.mxu0 0.0
    %4980 = vmatprep.subr.mxu0 0.0
    %4981 = vmatpush2.msra.mxu0 0.0
    %4982 = vmatprep.subr.mxu0 0.0
    %4983 = vmatpush2.msra.mxu0 0.0
    %4984 = vmatprep.subr.mxu0 0.0
    %4985 = vmatpush2.msra.mxu0 0.0
    %4986 = vmatprep.mubr.f32.mxu0 0.0
    %4987 = vmatmul.mubr.f32.gmra.mxu0 %v4920
    %v4988 = vpop.f32.mrf.mxu0
    %v4989 = vadd.f32 %v4892, %v4988
    %v4990 = vpop.f32.mrf.mxu0
    %v4991 = vadd.f32 %v4896, %v4990
    %4992 = vdwg.mxu0
    %4993 = vmatprep.subr.mxu0 0.0
    %4994 = vmatpush1.msra.mxu0 0.0
    %4995 = vmatprep.subr.mxu0 0.0
    %4996 = vmatpush1.msra.mxu0 0.0
    %4997 = vmatprep.subr.mxu0 0.0
    %4998 = vmatpush1.msra.mxu0 0.0
    %4999 = vmatprep.subr.mxu0 0.0
    %5000 = vmatpush1.msra.mxu0 0.0
    %5001 = vmatprep.subr.mxu0 0.0
    %5002 = vmatpush1.msra.mxu0 0.0
    %5003 = vmatprep.subr.mxu0 0.0
    %5004 = vmatpush1.msra.mxu0 0.0
    %5005 = vmatprep.subr.mxu0 0.0
    %5006 = vmatpush1.msra.mxu0 0.0
    %5007 = vmatprep.subr.mxu0 0.0
    %5008 = vmatpush1.msra.mxu0 0.0
    %5009 = vmatprep.subr.mxu0 %v4884
    %5010 = vmatpush1.msra.mxu0 %v4883
    %5011 = vmatprep.subr.mxu0 %v4878
    %5012 = vmatpush1.msra.mxu0 %v4877
    %5013 = vmatprep.subr.mxu0 %v4872
    %5014 = vmatpush1.msra.mxu0 %v4871
    %5015 = vmatprep.subr.mxu0 %v4866
    %5016 = vmatpush1.msra.mxu0 %v4865
    %5017 = vmatprep.subr.mxu0 %v4860
    %5018 = vmatpush1.msra.mxu0 %v4859
    %5019 = vmatprep.subr.mxu0 %v4854
    %5020 = vmatpush1.msra.mxu0 %v4853
    %5021 = vmatprep.subr.mxu0 %v4848
    %5022 = vmatpush1.msra.mxu0 %v4847
    %5023 = vmatprep.subr.mxu0 %v4842
    %5024 = vmatpush1.msra.mxu0 %v4841
    %5025 = vmatprep.subr.mxu0 0.0
    %5026 = vmatpush2.msra.mxu0 0.0
    %5027 = vmatprep.subr.mxu0 0.0
    %5028 = vmatpush2.msra.mxu0 0.0
    %5029 = vmatprep.subr.mxu0 0.0
    %5030 = vmatpush2.msra.mxu0 0.0
    %5031 = vmatprep.subr.mxu0 0.0
    %5032 = vmatpush2.msra.mxu0 0.0
    %5033 = vmatprep.subr.mxu0 0.0
    %5034 = vmatpush2.msra.mxu0 0.0
    %5035 = vmatprep.subr.mxu0 0.0
    %5036 = vmatpush2.msra.mxu0 0.0
    %5037 = vmatprep.subr.mxu0 0.0
    %5038 = vmatpush2.msra.mxu0 0.0
    %5039 = vmatprep.subr.mxu0 0.0
    %5040 = vmatpush2.msra.mxu0 0.0
    %5041 = vmatprep.subr.mxu0 0.0
    %5042 = vmatpush2.msra.mxu0 0.0
    %5043 = vmatprep.subr.mxu0 0.0
    %5044 = vmatpush2.msra.mxu0 0.0
    %5045 = vmatprep.subr.mxu0 0.0
    %5046 = vmatpush2.msra.mxu0 0.0
    %5047 = vmatprep.subr.mxu0 0.0
    %5048 = vmatpush2.msra.mxu0 0.0
    %5049 = vmatprep.subr.mxu0 0.0
    %5050 = vmatpush2.msra.mxu0 0.0
    %5051 = vmatprep.subr.mxu0 0.0
    %5052 = vmatpush2.msra.mxu0 0.0
    %5053 = vmatprep.subr.mxu0 0.0
    %5054 = vmatpush2.msra.mxu0 0.0
    %5055 = vmatprep.subr.mxu0 0.0
    %5056 = vmatpush2.msra.mxu0 0.0
    %5057 = vmatprep.mubr.f32.mxu0 0.0
    %5058 = vmatmul.mubr.f32.gmra.mxu0 %v4920
    %v5059 = vpop.f32.mrf.mxu0
    %v5060 = vadd.f32 %v4900, %v5059
    %v5061 = vpop.f32.mrf.mxu0
    %v5062 = vadd.f32 %v4904, %v5061
    %5063 = vdwg.mxu0
    %5064 = vmatprep.subr.mxu0 0.0
    %5065 = vmatpush1.msra.mxu0 0.0
    %5066 = vmatprep.subr.mxu0 0.0
    %5067 = vmatpush1.msra.mxu0 0.0
    %5068 = vmatprep.subr.mxu0 0.0
    %5069 = vmatpush1.msra.mxu0 0.0
    %5070 = vmatprep.subr.mxu0 0.0
    %5071 = vmatpush1.msra.mxu0 0.0
    %5072 = vmatprep.subr.mxu0 0.0
    %5073 = vmatpush1.msra.mxu0 0.0
    %5074 = vmatprep.subr.mxu0 0.0
    %5075 = vmatpush1.msra.mxu0 0.0
    %5076 = vmatprep.subr.mxu0 0.0
    %5077 = vmatpush1.msra.mxu0 0.0
    %5078 = vmatprep.subr.mxu0 0.0
    %5079 = vmatpush1.msra.mxu0 0.0
    %5080 = vmatprep.subr.mxu0 %v4886
    %5081 = vmatpush1.msra.mxu0 %v4885
    %5082 = vmatprep.subr.mxu0 %v4880
    %5083 = vmatpush1.msra.mxu0 %v4879
    %5084 = vmatprep.subr.mxu0 %v4874
    %5085 = vmatpush1.msra.mxu0 %v4873
    %5086 = vmatprep.subr.mxu0 %v4868
    %5087 = vmatpush1.msra.mxu0 %v4867
    %5088 = vmatprep.subr.mxu0 %v4862
    %5089 = vmatpush1.msra.mxu0 %v4861
    %5090 = vmatprep.subr.mxu0 %v4856
    %5091 = vmatpush1.msra.mxu0 %v4855
    %5092 = vmatprep.subr.mxu0 %v4850
    %5093 = vmatpush1.msra.mxu0 %v4849
    %5094 = vmatprep.subr.mxu0 %v4844
    %5095 = vmatpush1.msra.mxu0 %v4843
    %5096 = vmatprep.subr.mxu0 0.0
    %5097 = vmatpush2.msra.mxu0 0.0
    %5098 = vmatprep.subr.mxu0 0.0
    %5099 = vmatpush2.msra.mxu0 0.0
    %5100 = vmatprep.subr.mxu0 0.0
    %5101 = vmatpush2.msra.mxu0 0.0
    %5102 = vmatprep.subr.mxu0 0.0
    %5103 = vmatpush2.msra.mxu0 0.0
    %5104 = vmatprep.subr.mxu0 0.0
    %5105 = vmatpush2.msra.mxu0 0.0
    %5106 = vmatprep.subr.mxu0 0.0
    %5107 = vmatpush2.msra.mxu0 0.0
    %5108 = vmatprep.subr.mxu0 0.0
    %5109 = vmatpush2.msra.mxu0 0.0
    %5110 = vmatprep.subr.mxu0 0.0
    %5111 = vmatpush2.msra.mxu0 0.0
    %5112 = vmatprep.subr.mxu0 0.0
    %5113 = vmatpush2.msra.mxu0 0.0
    %5114 = vmatprep.subr.mxu0 0.0
    %5115 = vmatpush2.msra.mxu0 0.0
    %5116 = vmatprep.subr.mxu0 0.0
    %5117 = vmatpush2.msra.mxu0 0.0
    %5118 = vmatprep.subr.mxu0 0.0
    %5119 = vmatpush2.msra.mxu0 0.0
    %5120 = vmatprep.subr.mxu0 0.0
    %5121 = vmatpush2.msra.mxu0 0.0
    %5122 = vmatprep.subr.mxu0 0.0
    %5123 = vmatpush2.msra.mxu0 0.0
    %5124 = vmatprep.subr.mxu0 0.0
    %5125 = vmatpush2.msra.mxu0 0.0
    %5126 = vmatprep.subr.mxu0 0.0
    %5127 = vmatpush2.msra.mxu0 0.0
    %5128 = vmatprep.mubr.f32.mxu0 0.0
    %5129 = vmatmul.mubr.f32.gmra.mxu0 %v4920
    %v5130 = vpop.f32.mrf.mxu0
    %v5131 = vadd.f32 %v4908, %v5130
    %v5132 = vpop.f32.mrf.mxu0
    %v5133 = vadd.f32 %v4912, %v5132
    %5134 = vdwg.mxu0
    %v5141 = vcombine.low %v4989, %v4991
    %v5142 = vcombine.low %v5060, %v5062
    %v5144 = vunpack.c.l.s4 1983009808
    %v5145 = vunpack.c.0.s8 %v5144
    %v5146 = vlaneseq
    %v5147 = vshrl.u32 %v5146, 7
    %v5148 = vsub.s32 %v5145, %v5147
    %v5149 = vrot.slane %v5141, %v5148
    %v5151 = vunpack.c.l.s4 1983009808
    %v5152 = vunpack.c.0.s8 %v5151
    %v5153 = vlaneseq
    %v5154 = vshrl.u32 %v5153, 7
    %v5155 = vsub.s32 %v5152, %v5154
    %v5156 = vrot.slane %v5142, %v5155
    %v5157 = vcombine.low %v5149, %v5156
    %v5158 = vcombine.low %v5131, %v5133
    %v5160 = vunpack.c.l.s4 1983009808
    %v5161 = vunpack.c.0.s8 %v5160
    %v5162 = vlaneseq
    %v5163 = vshrl.u32 %v5162, 7
    %v5164 = vsub.s32 %v5161, %v5163
    %v5165 = vrot.slane %v5158, %v5164
    %5168 = vst [vmem:[#allocation11] sm:$0xff] %v5157
    %5169 = vst [vmem:[#allocation11 + $0x8] sm:$0xf] %v5165
    // Predicated region
    $region82: #{tpu_custom_call.1} parent=1 // pred_check
      _
    $region83: #{tpu_custom_call.1} parent=1 // pred_check_branch
      %5171 = sbr.rel (0) target = $region85
    $region84: #{tpu_custom_call.1} parent=1 // pred_region
      %s5173 = ssub.s32 192, 192
      %5174 = vsyncadd [#allocation4], %s5173
      %s5176 = sshll.u32 [#allocation11], 4
      %s5177 = int_to_ptr.vmem [resolvable:$true] %s5176
      %5179 = dma.vmem_to_hbm [thread:$0]  %s5177, 192, %s15, [#allocation4]
    $region85: #{tpu_custom_call.1} parent=1 // pred_fallthru
      _
    // Predicated region
    $region86: #{tpu_custom_call.1} parent=1 // pred_check
      _
    $region87: #{tpu_custom_call.1} parent=1 // pred_check_branch
      %5181 = sbr.rel (0) target = $region89
    $region88: #{tpu_custom_call.1} parent=1 // pred_region
      %5182 = dma.done [#allocation4], 192
    $region89: #{tpu_custom_call.1} parent=1 // pred_fallthru
      _
    %5183 = vsyncpa [#allocation3], 1
    %5184 = vsyncpa [#allocation6], 1
    %5185 = vsyncpa [#allocation9], 1
    %5186 = vsyncpa [#allocation4], 1

</llo_original>
